<compile_context>
chip_gen: v7x
topology: tpu7x:2x2x1
jax: 0.10.0
libtpu: 0.0.40
codegen_flags: <defaults>
</compile_context>

<pallas_src>
import functools

import jax
import jax.numpy as jnp
from jax.experimental import pallas as pl
from jax.experimental.pallas import tpu as pltpu


_NEG_SLOPE = 0.2     # LeakyReLU negative slope
_BN_EPS = 1e-5


def _round_up(x, m):
    return ((x + m - 1) // m) * m


def _leaky_relu(x):
    # slope in (0, 1)  ->  max(x, slope * x)
    return jnp.maximum(x, _NEG_SLOPE * x)


# ----------------------------------------------------------------------------
# Fused kernel (per grid step):
#   x (Cin, tm) -> W1 @ x + b1 -> lrelu -> W2' @ h + b2' -> lrelu -> w3 . h
# Channels live on sublanes, voxels on the 128-lane axis.
# ----------------------------------------------------------------------------
def _pixel_disc_kernel(x_ref, w1_ref, b1_ref, w2_ref, b2_ref, w3_ref, o_ref,
                       *, use_sigmoid):
    # Input stays f32 in HBM; cast to bf16 in-register (no extra HBM pass).
    x = x_ref[...].astype(w1_ref.dtype)                                  # (Cin, tm)

    # layer 1: Conv3d(input_nc, ndf, k=1) + bias -> LeakyReLU(0.2)
    h = jnp.dot(w1_ref[...], x, preferred_element_type=jnp.float32)     # (C1, tm)
    h = _leaky_relu(h + b1_ref[...])

    # layer 2: Conv3d(ndf, 2*ndf, k=1, no bias); eval-mode BatchNorm scale is
    # folded into w2 in the wrapper, only the folded bias remains here.
    h = jnp.dot(w2_ref[...], h.astype(w2_ref.dtype),
                preferred_element_type=jnp.float32)                     # (C2, tm)
    h = _leaky_relu(h + b2_ref[...])

    # layer 3: Conv3d(2*ndf, 1, k=1, no bias) -> lane-dense (1, tm) row.
    # Single output channel: VPU multiply + sublane reduction is plenty.
    y = jnp.sum(h * w3_ref[...], axis=0, keepdims=True)                 # (1, tm)
    if use_sigmoid:
        y = jax.nn.sigmoid(y)
    o_ref[...] = y.astype(o_ref.dtype)


# ----------------------------------------------------------------------------
# Wrapper: layout plumbing + pallas_call
# ----------------------------------------------------------------------------
def pixel_discriminator_forward(x_ncdhw, params, *, use_sigmoid=False,
                                block_cols=4096,
                                compute_dtype=jnp.bfloat16):
    N, Cin, D, H, W = x_ncdhw.shape
    S = D * H * W
    # NCDHW -> (N, Cin, S): a pure reshape of contiguous memory (no transpose,
    # no pad, no cast pass over the input before the kernel).
    x3 = x_ncdhw.reshape(N, Cin, S)

    w1 = params['w1']            # (C1, Cin)  -- native PyTorch Conv3d layout
    b1 = params['b1']            # (C1,)
    w2 = params['w2']            # (C2, C1)
    w3 = params['w3']            # (1, C2)
    C1 = w1.shape[0]
    C2 = w2.shape[0]

    # Fold eval-mode BatchNorm3d(2*ndf) into layer-2 weight / bias.
    s2 = params['bn2_gamma'] / jnp.sqrt(params['bn2_var'] + _BN_EPS)
    b2 = params['bn2_beta'] - params['bn2_mean'] * s2

    w1c = w1.astype(compute_dtype)
    w2c = (w2 * s2[:, None]).astype(compute_dtype)
    w3c = jnp.reshape(w3, (C2, 1)).astype(jnp.float32)
    b1c = b1.reshape(C1, 1).astype(jnp.float32)
    b2c = b2.reshape(C2, 1).astype(jnp.float32)

    # Spatial tile: voxels ride the 128-lane axis.  Keep >= 2 grid steps when
    # possible so the "parallel" axes give both TensorCores work on v7x.
    if S <= block_cols:
        if N == 1 and S >= 256:
            tm = _round_up(pl.cdiv(S, 2), 128)
        else:
            tm = S                       # full-extent block (always legal)
    else:
        tm = block_cols                  # multiple of 128
    grid_j = pl.cdiv(S, tm)              # ragged edge: Pallas masks the writeback

    kern = functools.partial(_pixel_disc_kernel, use_sigmoid=use_sigmoid)

    out = pl.pallas_call(
        kern,
        out_shape=jax.ShapeDtypeStruct((N, 1, S), jnp.float32),
        grid_spec=pltpu.PrefetchScalarGridSpec(
            num_scalar_prefetch=0,
            grid=(N, grid_j),
            in_specs=[
                pl.BlockSpec((None, Cin, tm), lambda n, j: (n, 0, j)),
                # weights / biases: constant index_map + full-array block
                # -> fetched once, VMEM-resident for the whole kernel.
                pl.BlockSpec((C1, Cin), lambda n, j: (0, 0)),
                pl.BlockSpec((C1, 1), lambda n, j: (0, 0)),
                pl.BlockSpec((C2, C1), lambda n, j: (0, 0)),
                pl.BlockSpec((C2, 1), lambda n, j: (0, 0)),
                pl.BlockSpec((C2, 1), lambda n, j: (0, 0)),
            ],
            out_specs=pl.BlockSpec((None, 1, tm), lambda n, j: (n, 0, j)),
        ),
        compiler_params=pltpu.CompilerParams(
            dimension_semantics=("parallel", "parallel")),
    )(x3, w1c, b1c, w2c, b2c, w3c)

    return out.reshape(N, 1, D, H, W)


# ----------------------------------------------------------------------------
# Parameter construction (deterministic, synthetic; PyTorch (Cout, Cin) layout).
# ----------------------------------------------------------------------------
def build_params(key, input_nc, ndf=64):
    k1, k2, k3, k4, k5, k6, k7, k8 = jax.random.split(key, 8)
    c1, c2 = ndf, 2 * ndf
    w1 = jax.random.normal(k1, (c1, input_nc), jnp.float32) * (2.0 / input_nc) ** 0.5
    b1 = 0.05 * jax.random.normal(k2, (c1,), jnp.float32)
    w2 = jax.random.normal(k3, (c2, c1), jnp.float32) * (2.0 / c1) ** 0.5
    w3 = jax.random.normal(k4, (1, c2), jnp.float32) * (2.0 / c2) ** 0.5
    # BatchNorm3d(2*ndf) running stats / affine (eval mode).
    gamma = 1.0 + 0.1 * jax.random.normal(k5, (c2,), jnp.float32)
    beta = 0.1 * jax.random.normal(k6, (c2,), jnp.float32)
    mean = 0.1 * jax.random.normal(k7, (c2,), jnp.float32)
    var = 1.0 + 0.1 * jax.random.uniform(k8, (c2,), jnp.float32)
    return dict(w1=w1, b1=b1, w2=w2, w3=w3,
                bn2_gamma=gamma, bn2_beta=beta, bn2_mean=mean, bn2_var=var)


# ----------------------------------------------------------------------------
# Pure-JAX reference (f32) for a correctness cross-check.
# Note: the kernel runs matmuls in bf16 (f32 accumulation) by design.
# ----------------------------------------------------------------------------
def reference_forward(x_ncdhw, params, use_sigmoid=False):
    p = params
    N, Cin, D, H, W = x_ncdhw.shape
    x = x_ncdhw.reshape(N, Cin, -1)
    h = jnp.einsum('oc,ncs->nos', p['w1'], x) + p['b1'][None, :, None]
    h = jnp.maximum(h, _NEG_SLOPE * h)
    h = jnp.einsum('oc,ncs->nos', p['w2'], h)
    s2 = p['bn2_gamma'] / jnp.sqrt(p['bn2_var'] + _BN_EPS)
    b2 = p['bn2_beta'] - p['bn2_mean'] * s2
    h = h * s2[None, :, None] + b2[None, :, None]
    h = jnp.maximum(h, _NEG_SLOPE * h)
    y = jnp.einsum('oc,ncs->nos', p['w3'], h)
    if use_sigmoid:
        y = jax.nn.sigmoid(y)
    return y.reshape(N, 1, D, H, W)


if __name__ == "__main__":
    key = jax.random.PRNGKey(0)
    kp, kx = jax.random.split(key)

    input_nc, ndf = 4, 64
    N, D, H, W = 2, 8, 16, 16

    params = build_params(kp, input_nc, ndf)
    x = jax.random.normal(kx, (N, input_nc, D, H, W), jnp.float32)

    fwd = jax.jit(functools.partial(pixel_discriminator_forward, params=params))
    out = fwd(x)
    jax.block_until_ready(out)

    assert out.shape == (N, 1, D, H, W), out.shape
    assert bool(jnp.all(jnp.isfinite(out)))

    # loose tolerance: kernel runs matmuls in bf16 with f32 accumulation
    ref = reference_forward(x, params)
    max_err = float(jnp.max(jnp.abs(out - ref)))
    assert max_err < 2e-1, f"max abs err {max_err}"

    print("KERNEL_OK")
</pallas_src>

<mosaic_0001>
module attributes {stable_mosaic.version = 11 : i64} {
  func.func @_pixel_disc_kernel(%arg0: i32, %arg1: i32, %arg2: memref<1x4x2048xf32, #tpu.memory_space<vmem>>, %arg3: memref<64x4xbf16, #tpu.memory_space<vmem>>, %arg4: memref<64x1xf32, #tpu.memory_space<vmem>>, %arg5: memref<128x64xbf16, #tpu.memory_space<vmem>>, %arg6: memref<128x1xf32, #tpu.memory_space<vmem>>, %arg7: memref<128x1xf32, #tpu.memory_space<vmem>>, %arg8: memref<1x1x2048xf32, #tpu.memory_space<vmem>>) attributes {dimension_semantics = [#tpu.dimension_semantics<parallel>, #tpu.dimension_semantics<parallel>], iteration_bounds = array<i64: 2, 1>, scalar_prefetch = 0 : i64, scratch_operands = 0 : i64, tpu.core_type = #tpu.core_type<tc>, window_params = [{transform_indices = @transform_0, window_bounds = array<i64: 1, 4, 2048>}, {pipeline_mode = #tpu.pipeline_mode<synchronous>, transform_indices = @transform_1, window_bounds = array<i64: 64, 4>}, {pipeline_mode = #tpu.pipeline_mode<synchronous>, transform_indices = @transform_2, window_bounds = array<i64: 64, 1>}, {pipeline_mode = #tpu.pipeline_mode<synchronous>, transform_indices = @transform_3, window_bounds = array<i64: 128, 64>}, {pipeline_mode = #tpu.pipeline_mode<synchronous>, transform_indices = @transform_4, window_bounds = array<i64: 128, 1>}, {pipeline_mode = #tpu.pipeline_mode<synchronous>, transform_indices = @transform_5, window_bounds = array<i64: 128, 1>}, {transform_indices = @transform_6, window_bounds = array<i64: 1, 1, 2048>}]} {
    %c0 = arith.constant 0 : index
    %c0_0 = arith.constant 0 : index
    %c0_1 = arith.constant 0 : index
    %0 = vector.load %arg2[%c0, %c0_0, %c0_1] : memref<1x4x2048xf32, #tpu.memory_space<vmem>>, vector<1x4x2048xf32>
    %1 = vector.shape_cast %0 : vector<1x4x2048xf32> to vector<4x2048xf32>
    %2 = arith.truncf %1 : vector<4x2048xf32> to vector<4x2048xbf16>
    %c0_2 = arith.constant 0 : index
    %c0_3 = arith.constant 0 : index
    %3 = vector.load %arg3[%c0_2, %c0_3] : memref<64x4xbf16, #tpu.memory_space<vmem>>, vector<64x4xbf16>
    %cst = arith.constant dense<0.000000e+00> : vector<64x2048xf32>
    %4 = tpu.matmul %3, %2, %cst {dimension_numbers = #tpu.dot_dimension_numbers<[1], [0], [0], [1], [0, 0, 1, 1], [], []>} : vector<64x4xbf16>, vector<4x2048xbf16>, vector<64x2048xf32> -> vector<64x2048xf32>
    %c0_4 = arith.constant 0 : index
    %c0_5 = arith.constant 0 : index
    %5 = vector.load %arg4[%c0_4, %c0_5] : memref<64x1xf32, #tpu.memory_space<vmem>>, vector<64x1xf32>
    %6 = vector.broadcast %5 : vector<64x1xf32> to vector<64x2048xf32>
    %7 = arith.addf %4, %6 : vector<64x2048xf32>
    %cst_6 = arith.constant 2.000000e-01 : f32
    %8 = vector.broadcast %cst_6 : f32 to vector<64x2048xf32>
    %9 = arith.mulf %8, %7 : vector<64x2048xf32>
    %10 = arith.maximumf %7, %9 : vector<64x2048xf32>
    %c0_7 = arith.constant 0 : index
    %c0_8 = arith.constant 0 : index
    %11 = vector.load %arg5[%c0_7, %c0_8] : memref<128x64xbf16, #tpu.memory_space<vmem>>, vector<128x64xbf16>
    %12 = arith.truncf %10 : vector<64x2048xf32> to vector<64x2048xbf16>
    %cst_9 = arith.constant dense<0.000000e+00> : vector<128x2048xf32>
    %13 = tpu.matmul %11, %12, %cst_9 {dimension_numbers = #tpu.dot_dimension_numbers<[1], [0], [0], [1], [0, 0, 1, 1], [], []>} : vector<128x64xbf16>, vector<64x2048xbf16>, vector<128x2048xf32> -> vector<128x2048xf32>
    %c0_10 = arith.constant 0 : index
    %c0_11 = arith.constant 0 : index
    %14 = vector.load %arg6[%c0_10, %c0_11] : memref<128x1xf32, #tpu.memory_space<vmem>>, vector<128x1xf32>
    %15 = vector.broadcast %14 : vector<128x1xf32> to vector<128x2048xf32>
    %16 = arith.addf %13, %15 : vector<128x2048xf32>
    %cst_12 = arith.constant 2.000000e-01 : f32
    %17 = vector.broadcast %cst_12 : f32 to vector<128x2048xf32>
    %18 = arith.mulf %17, %16 : vector<128x2048xf32>
    %19 = arith.maximumf %16, %18 : vector<128x2048xf32>
    %c0_13 = arith.constant 0 : index
    %c0_14 = arith.constant 0 : index
    %20 = vector.load %arg7[%c0_13, %c0_14] : memref<128x1xf32, #tpu.memory_space<vmem>>, vector<128x1xf32>
    %21 = vector.broadcast %20 : vector<128x1xf32> to vector<128x2048xf32>
    %22 = arith.mulf %19, %21 : vector<128x2048xf32>
    %cst_15 = arith.constant dense<0.000000e+00> : vector<2048xf32>
    %23 = vector.multi_reduction <add>, %22, %cst_15 [0] : vector<128x2048xf32> to vector<2048xf32>
    %24 = vector.shape_cast %23 : vector<2048xf32> to vector<1x2048xf32>
    %c0_16 = arith.constant 0 : index
    %c0_17 = arith.constant 0 : index
    %c0_18 = arith.constant 0 : index
    %25 = vector.load %arg8[%c0_16, %c0_17, %c0_18] : memref<1x1x2048xf32, #tpu.memory_space<vmem>>, vector<1x1x2048xf32>
    %26 = vector.shape_cast %25 : vector<1x1x2048xf32> to vector<1x2048xf32>
    %27 = vector.shape_cast %24 : vector<1x2048xf32> to vector<1x1x2048xf32>
    tpu.vector_store %arg8[%c0_16, %c0_17, %c0_18], %27 {strides = array<i32>} : memref<1x1x2048xf32, #tpu.memory_space<vmem>>, vector<1x1x2048xf32>,
    return
  }
  func.func @transform_0(%arg0: i32, %arg1: i32) -> (i32, i32, i32) {
    %c0_i32 = arith.constant 0 : i32
    %c0_i32_0 = arith.constant 0 : i32
    return %arg0, %c0_i32, %arg1 : i32, i32, i32
  }
  func.func @transform_1(%arg0: i32, %arg1: i32) -> (i32, i32) {
    %c0_i32 = arith.constant 0 : i32
    %c0_i32_0 = arith.constant 0 : i32
    %c0_i32_1 = arith.constant 0 : i32
    return %c0_i32, %c0_i32_0 : i32, i32
  }
  func.func @transform_2(%arg0: i32, %arg1: i32) -> (i32, i32) {
    %c0_i32 = arith.constant 0 : i32
    %c0_i32_0 = arith.constant 0 : i32
    %c0_i32_1 = arith.constant 0 : i32
    return %c0_i32, %c0_i32_0 : i32, i32
  }
  func.func @transform_3(%arg0: i32, %arg1: i32) -> (i32, i32) {
    %c0_i32 = arith.constant 0 : i32
    %c0_i32_0 = arith.constant 0 : i32
    %c0_i32_1 = arith.constant 0 : i32
    return %c0_i32, %c0_i32_0 : i32, i32
  }
  func.func @transform_4(%arg0: i32, %arg1: i32) -> (i32, i32) {
    %c0_i32 = arith.constant 0 : i32
    %c0_i32_0 = arith.constant 0 : i32
    %c0_i32_1 = arith.constant 0 : i32
    return %c0_i32, %c0_i32_0 : i32, i32
  }
  func.func @transform_5(%arg0: i32, %arg1: i32) -> (i32, i32) {
    %c0_i32 = arith.constant 0 : i32
    %c0_i32_0 = arith.constant 0 : i32
    %c0_i32_1 = arith.constant 0 : i32
    return %c0_i32, %c0_i32_0 : i32, i32
  }
  func.func @transform_6(%arg0: i32, %arg1: i32) -> (i32, i32, i32) {
    %c0_i32 = arith.constant 0 : i32
    %c0_i32_0 = arith.constant 0 : i32
    return %arg0, %c0_i32, %arg1 : i32, i32, i32
  }
}

</mosaic_0001>

<llo_original>
// kernel: pixel_discriminator_forward.1
$region0: #{pixel_discriminator_forward.1}
  #allocation0 [shape = 'u32[]', space=smem, size = 0x4, offset = 0x4, fixed_abs, tag = 'smem constant byte address 0x4 - core index']
  #allocation1 [shape = 'u32[144,128]{1,0:T(1,128)}', space=vmem, size = 0x12000, scoped, tag = 'internal scratch']
  %s0 = inlined_call_operand.vmem [shape: f32[2,4,2048], index: 0, kind: input, shape index: {}]
  %s1 = inlined_call_operand.vmem [shape: bf16[64,4], index: 1, kind: input, shape index: {}]
  %s2 = inlined_call_operand.vmem [shape: f32[64,1], index: 2, kind: input, shape index: {}]
  %s3 = inlined_call_operand.vmem [shape: bf16[128,64], index: 3, kind: input, shape index: {}]
  %s4 = inlined_call_operand.vmem [shape: f32[128,1], index: 4, kind: input, shape index: {}]
  %s5 = inlined_call_operand.vmem [shape: f32[128,1], index: 5, kind: input, shape index: {}]
  %s6 = inlined_call_operand.vmem [shape: f32[2,1,2048], index: 6, kind: output, shape index: {}]
  %s7 = sld [smem:[#allocation0]]
  $region57: #{pixel_discriminator_forward.1} parent=0
    _
  %s9 = ssub.s32 1, %s7
  %s10 = scalar_select 0, %s9, %s7
  loop: start=0, step=1, limit=4
  $region2: #{pixel_discriminator_forward.1} parent=0 // loop_pre_header
    _
  $region3: #{pixel_discriminator_forward.1} parent=0 // loop_header
    %s12 = sphi 0, %s16
    %p13 = scmp.ge.s32.totalorder %s12, 4
    %s19 = sphi 0, %s31
    %s20 = sphi 0, %s27
    %s21 = sphi 0, %s19
    %s22 = sphi 0, %s20
    %s23 = sphi 0, %s21
    %s24 = sphi 0, %s22
    %s36 = sphi 0, %s38
    %s39 = sphi 0, %s36
    %s40 = sphi 0, %s39
    %s56 = sphi 0, %s40
    %s60 = sphi 0, %s60
    %s62 = sphi 0, %s60
    %s63 = sphi 0, %s62
    %s77 = sphi 0, %s63
    %s81 = sphi 0, %s81
    %s83 = sphi 0, %s81
    %s84 = sphi 0, %s83
    %s98 = sphi 0, %s84
    %s102 = sphi 0, %s102
    %s104 = sphi 0, %s102
    %s105 = sphi 0, %s104
    %s119 = sphi 0, %s105
    %s123 = sphi 0, %s123
    %s125 = sphi 0, %s123
    %s126 = sphi 0, %s125
    %s140 = sphi 0, %s126
    %s144 = sphi 0, %s144
    %s146 = sphi 0, %s144
    %s147 = sphi 0, %s146
    %s161 = sphi 0, %s147
    %s169 = sphi 0, %s171
    %s172 = sphi 0, %s169
    %s173 = sphi 0, %s172
    %s189 = sphi 0, %s173
  $region4: #{pixel_discriminator_forward.1} parent=0 // loop_header_branch
    %15 = sbr.rel (%p13) target = $region8
  $region5: #{pixel_discriminator_forward.1} parent=0 // loop_body
    %s17 = ssub.s32 %s12, 1
    %s18 = ssub.s32 %s12, 2
    %s25 = sadd.s32 1, %s20
    %p26 = scmp.ge.s32.totalorder %s25, 1
    %s27 = scalar_select %p26, 0, %s25
    %s28 = sadd.s32 1, %s19
    %s29 = scalar_select %p26, %s28, %s19
    %p30 = scmp.ge.s32.totalorder %s29, 2
    %s31 = scalar_select %p30, 0, %s29
    %s32 = ssub.s32 %s19, %s31
    %s33 = ssub.s32 %s20, %s27
    %s34 = sor.u32 %s32, %s33
    %p35 = scmp.eq.s32.totalorder %s34, 0
    %s37 = sadd.s32 %s36, 1
    %s38 = scalar_select %p35, %s36, %s37
    %p41 = pneg %p35
    %p42 = scmp.eq.s32.totalorder %s12, 1
    %p43 = por %p41, %p42
    %p44 = scmp.ne.s32.totalorder %s36, %s39
    %p45 = scmp.eq.s32.totalorder %s12, 0
    %p46 = por %p44, %p45
    %p47 = scmp.ne.s32.totalorder %s36, %s39
    %p48 = scmp.eq.s32.totalorder %s17, 1
    %p49 = por %p47, %p48
    %p50 = scmp.ne.s32.totalorder %s39, %s40
    %p51 = scmp.eq.s32.totalorder %s17, 0
    %p52 = por %p50, %p51
    %p53 = scmp.ne.s32.totalorder %s39, %s40
    %p54 = scmp.eq.s32.totalorder %s18, 1
    %p55 = por %p53, %p54
    %p57 = scmp.ne.s32.totalorder %s40, %s56
    %p58 = scmp.eq.s32.totalorder %s18, 0
    %p59 = por %p57, %p58
    %s61 = sadd.s32 %s60, 1
    %p64 = scmp.eq.s32.totalorder %s12, 1
    %p65 = scmp.ne.s32.totalorder %s60, %s62
    %p66 = scmp.eq.s32.totalorder %s12, 0
    %p67 = por %p65, %p66
    %p68 = scmp.ne.s32.totalorder %s60, %s62
    %p69 = scmp.eq.s32.totalorder %s17, 1
    %p70 = por %p68, %p69
    %p71 = scmp.ne.s32.totalorder %s62, %s63
    %p72 = scmp.eq.s32.totalorder %s17, 0
    %p73 = por %p71, %p72
    %p74 = scmp.ne.s32.totalorder %s62, %s63
    %p75 = scmp.eq.s32.totalorder %s18, 1
    %p76 = por %p74, %p75
    %p78 = scmp.ne.s32.totalorder %s63, %s77
    %p79 = scmp.eq.s32.totalorder %s18, 0
    %p80 = por %p78, %p79
    %s82 = sadd.s32 %s81, 1
    %p85 = scmp.eq.s32.totalorder %s12, 1
    %p86 = scmp.ne.s32.totalorder %s81, %s83
    %p87 = scmp.eq.s32.totalorder %s12, 0
    %p88 = por %p86, %p87
    %p89 = scmp.ne.s32.totalorder %s81, %s83
    %p90 = scmp.eq.s32.totalorder %s17, 1
    %p91 = por %p89, %p90
    %p92 = scmp.ne.s32.totalorder %s83, %s84
    %p93 = scmp.eq.s32.totalorder %s17, 0
    %p94 = por %p92, %p93
    %p95 = scmp.ne.s32.totalorder %s83, %s84
    %p96 = scmp.eq.s32.totalorder %s18, 1
    %p97 = por %p95, %p96
    %p99 = scmp.ne.s32.totalorder %s84, %s98
    %p100 = scmp.eq.s32.totalorder %s18, 0
    %p101 = por %p99, %p100
    %s103 = sadd.s32 %s102, 1
    %p106 = scmp.eq.s32.totalorder %s12, 1
    %p107 = scmp.ne.s32.totalorder %s102, %s104
    %p108 = scmp.eq.s32.totalorder %s12, 0
    %p109 = por %p107, %p108
    %p110 = scmp.ne.s32.totalorder %s102, %s104
    %p111 = scmp.eq.s32.totalorder %s17, 1
    %p112 = por %p110, %p111
    %p113 = scmp.ne.s32.totalorder %s104, %s105
    %p114 = scmp.eq.s32.totalorder %s17, 0
    %p115 = por %p113, %p114
    %p116 = scmp.ne.s32.totalorder %s104, %s105
    %p117 = scmp.eq.s32.totalorder %s18, 1
    %p118 = por %p116, %p117
    %p120 = scmp.ne.s32.totalorder %s105, %s119
    %p121 = scmp.eq.s32.totalorder %s18, 0
    %p122 = por %p120, %p121
    %s124 = sadd.s32 %s123, 1
    %p127 = scmp.eq.s32.totalorder %s12, 1
    %p128 = scmp.ne.s32.totalorder %s123, %s125
    %p129 = scmp.eq.s32.totalorder %s12, 0
    %p130 = por %p128, %p129
    %p131 = scmp.ne.s32.totalorder %s123, %s125
    %p132 = scmp.eq.s32.totalorder %s17, 1
    %p133 = por %p131, %p132
    %p134 = scmp.ne.s32.totalorder %s125, %s126
    %p135 = scmp.eq.s32.totalorder %s17, 0
    %p136 = por %p134, %p135
    %p137 = scmp.ne.s32.totalorder %s125, %s126
    %p138 = scmp.eq.s32.totalorder %s18, 1
    %p139 = por %p137, %p138
    %p141 = scmp.ne.s32.totalorder %s126, %s140
    %p142 = scmp.eq.s32.totalorder %s18, 0
    %p143 = por %p141, %p142
    %s145 = sadd.s32 %s144, 1
    %p148 = scmp.eq.s32.totalorder %s12, 1
    %p149 = scmp.ne.s32.totalorder %s144, %s146
    %p150 = scmp.eq.s32.totalorder %s12, 0
    %p151 = por %p149, %p150
    %p152 = scmp.ne.s32.totalorder %s144, %s146
    %p153 = scmp.eq.s32.totalorder %s17, 1
    %p154 = por %p152, %p153
    %p155 = scmp.ne.s32.totalorder %s146, %s147
    %p156 = scmp.eq.s32.totalorder %s17, 0
    %p157 = por %p155, %p156
    %p158 = scmp.ne.s32.totalorder %s146, %s147
    %p159 = scmp.eq.s32.totalorder %s18, 1
    %p160 = por %p158, %p159
    %p162 = scmp.ne.s32.totalorder %s147, %s161
    %p163 = scmp.eq.s32.totalorder %s18, 0
    %p164 = por %p162, %p163
    %s165 = ssub.s32 %s19, %s31
    %s166 = ssub.s32 %s20, %s27
    %s167 = sor.u32 %s165, %s166
    %p168 = scmp.eq.s32.totalorder %s167, 0
    %s170 = sadd.s32 %s169, 1
    %s171 = scalar_select %p168, %s169, %s170
    %p174 = pneg %p168
    %p175 = scmp.eq.s32.totalorder %s12, 1
    %p176 = por %p174, %p175
    %p177 = scmp.ne.s32.totalorder %s169, %s172
    %p178 = scmp.eq.s32.totalorder %s12, 0
    %p179 = por %p177, %p178
    %p180 = scmp.ne.s32.totalorder %s169, %s172
    %p181 = scmp.eq.s32.totalorder %s17, 1
    %p182 = por %p180, %p181
    %p183 = scmp.ne.s32.totalorder %s172, %s173
    %p184 = scmp.eq.s32.totalorder %s17, 0
    %p185 = por %p183, %p184
    %p186 = scmp.ne.s32.totalorder %s172, %s173
    %p187 = scmp.eq.s32.totalorder %s18, 1
    %p188 = por %p186, %p187
    %p190 = scmp.ne.s32.totalorder %s173, %s189
    %p191 = scmp.eq.s32.totalorder %s18, 0
    %p192 = por %p190, %p191
    %p193 = scmp.le.s32.totalorder 1, %s12
    %p194 = scmp.lt.s32.totalorder %s12, 3
    %p195 = pnand %p193, %p194
    %p196 = pneg %p195
    // Predicated region
    $region9: #{pixel_discriminator_forward.1} parent=5 // pred_check
      _
    $region10: #{pixel_discriminator_forward.1} parent=5 // pred_check_branch
      %198 = sbr.rel (%p195) target = $region12
    $region11: #{pixel_discriminator_forward.1} parent=5 // pred_region
      %s199 = ssub.s32 %s12, 1
      // Predicated region
      $region13: #{pixel_discriminator_forward.1} parent=11 // pred_check
        %p200 = pneg %p73
      $region14: #{pixel_discriminator_forward.1} parent=11 // pred_check_branch
        %202 = sbr.rel (%p200) target = $region16
      $region15: #{pixel_discriminator_forward.1} parent=11 // pred_region
        _
      $region16: #{pixel_discriminator_forward.1} parent=11 // pred_fallthru
        _
      // Predicated region
      $region17: #{pixel_discriminator_forward.1} parent=11 // pred_check
        %p203 = pneg %p94
      $region18: #{pixel_discriminator_forward.1} parent=11 // pred_check_branch
        %205 = sbr.rel (%p203) target = $region20
      $region19: #{pixel_discriminator_forward.1} parent=11 // pred_region
        _
      $region20: #{pixel_discriminator_forward.1} parent=11 // pred_fallthru
        _
      // Predicated region
      $region21: #{pixel_discriminator_forward.1} parent=11 // pred_check
        %p206 = pneg %p115
      $region22: #{pixel_discriminator_forward.1} parent=11 // pred_check_branch
        %208 = sbr.rel (%p206) target = $region24
      $region23: #{pixel_discriminator_forward.1} parent=11 // pred_region
        _
      $region24: #{pixel_discriminator_forward.1} parent=11 // pred_fallthru
        _
      // Predicated region
      $region25: #{pixel_discriminator_forward.1} parent=11 // pred_check
        %p209 = pneg %p136
      $region26: #{pixel_discriminator_forward.1} parent=11 // pred_check_branch
        %211 = sbr.rel (%p209) target = $region28
      $region27: #{pixel_discriminator_forward.1} parent=11 // pred_region
        _
      $region28: #{pixel_discriminator_forward.1} parent=11 // pred_fallthru
        _
      // Predicated region
      $region29: #{pixel_discriminator_forward.1} parent=11 // pred_check
        %p212 = pneg %p157
      $region30: #{pixel_discriminator_forward.1} parent=11 // pred_check_branch
        %214 = sbr.rel (%p212) target = $region32
      $region31: #{pixel_discriminator_forward.1} parent=11 // pred_region
        _
      $region32: #{pixel_discriminator_forward.1} parent=11 // pred_fallthru
        _
    $region12: #{pixel_discriminator_forward.1} parent=5 // pred_fallthru
      _
    %p215 = scmp.lt.s32.totalorder %s12, 2
    // Predicated region
    $region33: #{pixel_discriminator_forward.1} parent=5 // pred_check
      %p216 = pneg %p215
    $region34: #{pixel_discriminator_forward.1} parent=5 // pred_check_branch
      %218 = sbr.rel (%p216) target = $region36
    $region35: #{pixel_discriminator_forward.1} parent=5 // pred_region
      // Predicated region
      $region37: #{pixel_discriminator_forward.1} parent=35 // pred_check
        %p219 = pneg %p46
      $region38: #{pixel_discriminator_forward.1} parent=35 // pred_check_branch
        %221 = sbr.rel (%p219) target = $region40
      $region39: #{pixel_discriminator_forward.1} parent=35 // pred_region
        %s222 = smul.u32 16, %s20
        %p223 = scmp.lt.s32.totalorder %s19, 1
        %s224 = scalar_select %p223, %s19, 1
        %p225 = scmp.lt.s32.totalorder %s222, 15
        %s226 = scalar_select %p225, %s222, 15
        %s227 = smul.addr %s224, 16
        %s228 = sadd.s32 %s226, %s227
        %s229 = smul.addr %s228, 4
        %s230 = scalar_lea.vmem %s0, %s229
        %s231 = smul.u32 16, %s20
      $region40: #{pixel_discriminator_forward.1} parent=35 // pred_fallthru
        _
    $region36: #{pixel_discriminator_forward.1} parent=5 // pred_fallthru
      _
    %p232 = scmp.le.s32.totalorder 1, %s12
    %p233 = scmp.lt.s32.totalorder %s12, 3
    %p234 = pnand %p232, %p233
    %p235 = pneg %p234
    // Predicated region
    $region41: #{pixel_discriminator_forward.1} parent=5 // pred_check
      _
    $region42: #{pixel_discriminator_forward.1} parent=5 // pred_check_branch
      %237 = sbr.rel (%p234) target = $region44
    $region43: #{pixel_discriminator_forward.1} parent=5 // pred_region
      %s238 = ssub.s32 %s12, 1
      %s239 = smul.u32 16, %s22
      %p240 = scmp.lt.s32.totalorder %s21, 1
      %s241 = scalar_select %p240, %s21, 1
      %p242 = scmp.lt.s32.totalorder %s239, 15
      %s243 = scalar_select %p242, %s239, 15
      %s244 = smul.addr %s241, 16
      %s245 = sadd.s32 %s243, %s244
      %s246 = smul.addr %s245, 4
      %s247 = scalar_lea.vmem %s0, %s246
      %p248 = pneg %p52
      %p249 = pneg %p49
      %p250 = pneg %p73
      %p251 = pneg %p70
      %p252 = pneg %p94
      %p253 = pneg %p91
      %p254 = pneg %p115
      %p255 = pneg %p112
      %p256 = pneg %p136
      %p257 = pneg %p133
      %p258 = pneg %p157
      %p259 = pneg %p154
      %p260 = pneg %p185
      %p261 = pneg %p182
      %s262 = smul.u32 16, %s22
      %p263 = scmp.lt.s32.totalorder %s21, 1
      %s264 = scalar_select %p263, %s21, 1
      %p265 = scmp.lt.s32.totalorder %s262, 15
      %s266 = scalar_select %p265, %s262, 15
      %s267 = smul.addr %s264, 16
      %s268 = sadd.s32 %s266, %s267
      %s269 = scalar_lea.vmem %s6, %s268
      %s270 = smul.u32 16, %s22
      %p271 = scmp.lt.s32.totalorder %s21, 1
      %s272 = scalar_select %p271, %s21, 1
      %p273 = scmp.lt.s32.totalorder %s270, 15
      %s274 = scalar_select %p273, %s270, 15
      %s275 = smul.addr %s272, 16
      %s276 = sadd.s32 %s274, %s275
      %s277 = smul.addr %s276, 4
      %s278 = scalar_lea.vmem %s0, %s277
      %s279 = smul.u32 16, %s22
      %s280 = smul.u32 16, %s22
      %p281 = scmp.lt.s32.totalorder %s21, 1
      %s282 = scalar_select %p281, %s21, 1
      %p283 = scmp.lt.s32.totalorder %s280, 15
      %s284 = scalar_select %p283, %s280, 15
      %s285 = smul.addr %s282, 16
      %s286 = sadd.s32 %s284, %s285
      %s287 = scalar_lea.vmem %s6, %s286
      %s288 = smul.u32 16, %s22
      %v290 = vld [vmem:[%s278] sm:$0xff]
      %v291 = vld [vmem:[%s278 + $0x8] sm:$0xff]
      %v292 = vld [vmem:[%s278 + $0x10] sm:$0xff]
      %v293 = vld [vmem:[%s278 + $0x18] sm:$0xff]
      %v294 = vld [vmem:[%s278 + $0x20] sm:$0xff]
      %v295 = vld [vmem:[%s278 + $0x28] sm:$0xff]
      %v296 = vld [vmem:[%s278 + $0x30] sm:$0xff]
      %v297 = vld [vmem:[%s278 + $0x38] sm:$0xff]
      %v306 = vcombine.high %v290, %v290
      %v307 = vcombine.high %v291, %v291
      %v308 = vcombine.high %v292, %v292
      %v309 = vcombine.high %v293, %v293
      %v310 = vcombine.high %v294, %v294
      %v311 = vcombine.high %v295, %v295
      %v312 = vcombine.high %v296, %v296
      %v313 = vcombine.high %v297, %v297
      %v322 = vpack.c.bf16 %v290, %v290
      %v323 = vpack.c.bf16 %v306, %v306
      %v324 = vpack.c.bf16 %v291, %v291
      %v325 = vpack.c.bf16 %v307, %v307
      %v326 = vpack.c.bf16 %v292, %v292
      %v327 = vpack.c.bf16 %v308, %v308
      %v328 = vpack.c.bf16 %v293, %v293
      %v329 = vpack.c.bf16 %v309, %v309
      %v330 = vpack.c.bf16 %v294, %v294
      %v331 = vpack.c.bf16 %v310, %v310
      %v332 = vpack.c.bf16 %v295, %v295
      %v333 = vpack.c.bf16 %v311, %v311
      %v334 = vpack.c.bf16 %v296, %v296
      %v335 = vpack.c.bf16 %v312, %v312
      %v336 = vpack.c.bf16 %v297, %v297
      %v337 = vpack.c.bf16 %v313, %v313
      %v338 = vld [vmem:[%s1] sm:$0xf]
      %v339 = vld [vmem:[%s1 + $0x4] sm:$0xf]
      %v340 = vld [vmem:[%s1 + $0x8] sm:$0xf]
      %v341 = vld [vmem:[%s1 + $0xc] sm:$0xf]
      %v342 = vld [vmem:[%s1 + $0x10] sm:$0xf]
      %v343 = vld [vmem:[%s1 + $0x14] sm:$0xf]
      %v344 = vld [vmem:[%s1 + $0x18] sm:$0xf]
      %v345 = vld [vmem:[%s1 + $0x1c] sm:$0xf]
      %v346 = vld [vmem:[%s2] sm:$0xff]
      %v347 = vld [vmem:[%s2 + $0x8] sm:$0xff]
      %v348 = vld [vmem:[%s2 + $0x10] sm:$0xff]
      %v349 = vld [vmem:[%s2 + $0x18] sm:$0xff]
      %v350 = vld [vmem:[%s2 + $0x20] sm:$0xff]
      %v351 = vld [vmem:[%s2 + $0x28] sm:$0xff]
      %v352 = vld [vmem:[%s2 + $0x30] sm:$0xff]
      %v353 = vld [vmem:[%s2 + $0x38] sm:$0xff]
      %355 = vset.pattern.permute.xlu0 0
      %356 = vperm.xlu0 %355, %v346
      %v357 = vpop.permute.xlu0 %356
      %360 = vset.pattern.permute.xlu0 0
      %361 = vperm.xlu0 %360, %v347
      %v362 = vpop.permute.xlu0 %361
      %365 = vset.pattern.permute.xlu0 0
      %366 = vperm.xlu0 %365, %v348
      %v367 = vpop.permute.xlu0 %366
      %370 = vset.pattern.permute.xlu0 0
      %371 = vperm.xlu0 %370, %v349
      %v372 = vpop.permute.xlu0 %371
      %375 = vset.pattern.permute.xlu0 0
      %376 = vperm.xlu0 %375, %v350
      %v377 = vpop.permute.xlu0 %376
      %380 = vset.pattern.permute.xlu0 0
      %381 = vperm.xlu0 %380, %v351
      %v382 = vpop.permute.xlu0 %381
      %385 = vset.pattern.permute.xlu0 0
      %386 = vperm.xlu0 %385, %v352
      %v387 = vpop.permute.xlu0 %386
      %390 = vset.pattern.permute.xlu0 0
      %391 = vperm.xlu0 %390, %v353
      %v392 = vpop.permute.xlu0 %391
      %v402 = vunpack.c.l.b16 %v338
      %v403 = vunpack.c.l.b16 %v339
      %v404 = vunpack.c.l.b16 %v340
      %v405 = vunpack.c.l.b16 %v341
      %v406 = vunpack.c.l.b16 %v342
      %v407 = vunpack.c.l.b16 %v343
      %v408 = vunpack.c.l.b16 %v344
      %v409 = vunpack.c.l.b16 %v345
      %v410 = vpack.c.b16 %v403, %v402
      %v411 = vpack.c.b16 %v405, %v404
      %v412 = vpack.c.b16 %v407, %v406
      %v413 = vpack.c.b16 %v409, %v408
      %vm414 = vcmask 31744
      %v416 = vsel %vm414, %v410, 0
      %v419 = vsel %vm414, %v411, 0
      %v422 = vsel %vm414, %v412, 0
      %v425 = vsel %vm414, %v413, 0
      %vm427 = vcmask 1041408
      %v429 = vsel %vm427, %v322, 0
      %v432 = vsel %vm427, %v323, 0
      %v435 = vsel %vm427, %v324, 0
      %v438 = vsel %vm427, %v325, 0
      %v441 = vsel %vm427, %v326, 0
      %v444 = vsel %vm427, %v327, 0
      %v447 = vsel %vm427, %v328, 0
      %v450 = vsel %vm427, %v329, 0
      %v453 = vsel %vm427, %v330, 0
      %v456 = vsel %vm427, %v331, 0
      %v459 = vsel %vm427, %v332, 0
      %v462 = vsel %vm427, %v333, 0
      %v465 = vsel %vm427, %v334, 0
      %v468 = vsel %vm427, %v335, 0
      %v471 = vsel %vm427, %v336, 0
      %v474 = vsel %vm427, %v337, 0
      %476 = vmatprep.subr.bf16.mxu0 %v432
      %477 = vmatpush1.bf16.msra.mxu0 %v429
      %478 = vmatprep.subr.bf16.mxu0 0
      %479 = vmatpush1.bf16.msra.mxu0 0
      %480 = vmatprep.subr.bf16.mxu0 0
      %481 = vmatpush1.bf16.msra.mxu0 0
      %482 = vmatprep.subr.bf16.mxu0 0
      %483 = vmatpush1.bf16.msra.mxu0 0
      %484 = vmatprep.subr.bf16.mxu0 0
      %485 = vmatpush1.bf16.msra.mxu0 0
      %486 = vmatprep.subr.bf16.mxu0 0
      %487 = vmatpush1.bf16.msra.mxu0 0
      %488 = vmatprep.subr.bf16.mxu0 0
      %489 = vmatpush1.bf16.msra.mxu0 0
      %490 = vmatprep.subr.bf16.mxu0 0
      %491 = vmatpush1.bf16.msra.mxu0 0
      %492 = vmatprep.subr.bf16.mxu0 0
      %493 = vmatpush1.bf16.msra.mxu0 0
      %494 = vmatprep.subr.bf16.mxu0 0
      %495 = vmatpush1.bf16.msra.mxu0 0
      %496 = vmatprep.subr.bf16.mxu0 0
      %497 = vmatpush1.bf16.msra.mxu0 0
      %498 = vmatprep.subr.bf16.mxu0 0
      %499 = vmatpush1.bf16.msra.mxu0 0
      %500 = vmatprep.subr.bf16.mxu0 0
      %501 = vmatpush1.bf16.msra.mxu0 0
      %502 = vmatprep.subr.bf16.mxu0 0
      %503 = vmatpush1.bf16.msra.mxu0 0
      %504 = vmatprep.subr.bf16.mxu0 0
      %505 = vmatpush1.bf16.msra.mxu0 0
      %506 = vmatprep.subr.bf16.mxu0 0
      %507 = vmatpush1.bf16.msra.mxu0 0
      %508 = vmatprep.mubr.bf16.mxu0 0
      %509 = vmatmul.mubr.bf16.gmra.mrb[0].mxu0 %v416
      %v510 = vpop.f32.mrb[0].mxu0
      %v511 = vadd.f32 %v357, %v510
      %v512 = vpop.f32.mrb[0].mxu0
      %v513 = vadd.f32 %v357, %v512
      %v514 = vpop.f32.mrb[0].mxu0
      %v515 = vadd.f32 %v362, %v514
      %v516 = vpop.f32.mrb[0].mxu0
      %v517 = vadd.f32 %v362, %v516
      %518 = vmatprep.mubr.bf16.mxu0 0
      %519 = vmatmul.mubr.bf16.gmra.mrb[0].mxu0 %v419
      %v520 = vpop.f32.mrb[0].mxu0
      %v521 = vadd.f32 %v367, %v520
      %v522 = vpop.f32.mrb[0].mxu0
      %v523 = vadd.f32 %v367, %v522
      %v524 = vpop.f32.mrb[0].mxu0
      %v525 = vadd.f32 %v372, %v524
      %v526 = vpop.f32.mrb[0].mxu0
      %v527 = vadd.f32 %v372, %v526
      %528 = vmatprep.mubr.bf16.mxu0 0
      %529 = vmatmul.mubr.bf16.gmra.mrb[0].mxu0 %v422
      %v530 = vpop.f32.mrb[0].mxu0
      %v531 = vadd.f32 %v377, %v530
      %v532 = vpop.f32.mrb[0].mxu0
      %v533 = vadd.f32 %v377, %v532
      %v534 = vpop.f32.mrb[0].mxu0
      %v535 = vadd.f32 %v382, %v534
      %v536 = vpop.f32.mrb[0].mxu0
      %v537 = vadd.f32 %v382, %v536
      %538 = vmatprep.mubr.bf16.mxu0 0
      %539 = vmatmul.mubr.bf16.gmra.mrb[0].mxu0 %v425
      %v540 = vpop.f32.mrb[0].mxu0
      %v541 = vadd.f32 %v387, %v540
      %v542 = vpop.f32.mrb[0].mxu0
      %v543 = vadd.f32 %v387, %v542
      %v544 = vpop.f32.mrb[0].mxu0
      %v545 = vadd.f32 %v392, %v544
      %v546 = vpop.f32.mrb[0].mxu0
      %v547 = vadd.f32 %v392, %v546
      %548 = vdwg.mxu0
      %549 = vmatprep.subr.bf16.mxu0 %v438
      %550 = vmatpush1.bf16.msra.mxu0 %v435
      %551 = vmatprep.subr.bf16.mxu0 0
      %552 = vmatpush1.bf16.msra.mxu0 0
      %553 = vmatprep.subr.bf16.mxu0 0
      %554 = vmatpush1.bf16.msra.mxu0 0
      %555 = vmatprep.subr.bf16.mxu0 0
      %556 = vmatpush1.bf16.msra.mxu0 0
      %557 = vmatprep.subr.bf16.mxu0 0
      %558 = vmatpush1.bf16.msra.mxu0 0
      %559 = vmatprep.subr.bf16.mxu0 0
      %560 = vmatpush1.bf16.msra.mxu0 0
      %561 = vmatprep.subr.bf16.mxu0 0
      %562 = vmatpush1.bf16.msra.mxu0 0
      %563 = vmatprep.subr.bf16.mxu0 0
      %564 = vmatpush1.bf16.msra.mxu0 0
      %565 = vmatprep.subr.bf16.mxu0 0
      %566 = vmatpush1.bf16.msra.mxu0 0
      %567 = vmatprep.subr.bf16.mxu0 0
      %568 = vmatpush1.bf16.msra.mxu0 0
      %569 = vmatprep.subr.bf16.mxu0 0
      %570 = vmatpush1.bf16.msra.mxu0 0
      %571 = vmatprep.subr.bf16.mxu0 0
      %572 = vmatpush1.bf16.msra.mxu0 0
      %573 = vmatprep.subr.bf16.mxu0 0
      %574 = vmatpush1.bf16.msra.mxu0 0
      %575 = vmatprep.subr.bf16.mxu0 0
      %576 = vmatpush1.bf16.msra.mxu0 0
      %577 = vmatprep.subr.bf16.mxu0 0
      %578 = vmatpush1.bf16.msra.mxu0 0
      %579 = vmatprep.subr.bf16.mxu0 0
      %580 = vmatpush1.bf16.msra.mxu0 0
      %581 = vmatprep.mubr.bf16.mxu0 0
      %582 = vmatmul.mubr.bf16.gmra.mrb[0].mxu0 %v416
      %v583 = vpop.f32.mrb[0].mxu0
      %v584 = vadd.f32 %v357, %v583
      %v585 = vpop.f32.mrb[0].mxu0
      %v586 = vadd.f32 %v357, %v585
      %v587 = vpop.f32.mrb[0].mxu0
      %v588 = vadd.f32 %v362, %v587
      %v589 = vpop.f32.mrb[0].mxu0
      %v590 = vadd.f32 %v362, %v589
      %591 = vmatprep.mubr.bf16.mxu0 0
      %592 = vmatmul.mubr.bf16.gmra.mrb[0].mxu0 %v419
      %v593 = vpop.f32.mrb[0].mxu0
      %v594 = vadd.f32 %v367, %v593
      %v595 = vpop.f32.mrb[0].mxu0
      %v596 = vadd.f32 %v367, %v595
      %v597 = vpop.f32.mrb[0].mxu0
      %v598 = vadd.f32 %v372, %v597
      %v599 = vpop.f32.mrb[0].mxu0
      %v600 = vadd.f32 %v372, %v599
      %601 = vmatprep.mubr.bf16.mxu0 0
      %602 = vmatmul.mubr.bf16.gmra.mrb[0].mxu0 %v422
      %v603 = vpop.f32.mrb[0].mxu0
      %v604 = vadd.f32 %v377, %v603
      %v605 = vpop.f32.mrb[0].mxu0
      %v606 = vadd.f32 %v377, %v605
      %v607 = vpop.f32.mrb[0].mxu0
      %v608 = vadd.f32 %v382, %v607
      %v609 = vpop.f32.mrb[0].mxu0
      %v610 = vadd.f32 %v382, %v609
      %611 = vmatprep.mubr.bf16.mxu0 0
      %612 = vmatmul.mubr.bf16.gmra.mrb[0].mxu0 %v425
      %v613 = vpop.f32.mrb[0].mxu0
      %v614 = vadd.f32 %v387, %v613
      %v615 = vpop.f32.mrb[0].mxu0
      %v616 = vadd.f32 %v387, %v615
      %v617 = vpop.f32.mrb[0].mxu0
      %v618 = vadd.f32 %v392, %v617
      %v619 = vpop.f32.mrb[0].mxu0
      %v620 = vadd.f32 %v392, %v619
      %621 = vdwg.mxu0
      %622 = vmatprep.subr.bf16.mxu0 %v444
      %623 = vmatpush1.bf16.msra.mxu0 %v441
      %624 = vmatprep.subr.bf16.mxu0 0
      %625 = vmatpush1.bf16.msra.mxu0 0
      %626 = vmatprep.subr.bf16.mxu0 0
      %627 = vmatpush1.bf16.msra.mxu0 0
      %628 = vmatprep.subr.bf16.mxu0 0
      %629 = vmatpush1.bf16.msra.mxu0 0
      %630 = vmatprep.subr.bf16.mxu0 0
      %631 = vmatpush1.bf16.msra.mxu0 0
      %632 = vmatprep.subr.bf16.mxu0 0
      %633 = vmatpush1.bf16.msra.mxu0 0
      %634 = vmatprep.subr.bf16.mxu0 0
      %635 = vmatpush1.bf16.msra.mxu0 0
      %636 = vmatprep.subr.bf16.mxu0 0
      %637 = vmatpush1.bf16.msra.mxu0 0
      %638 = vmatprep.subr.bf16.mxu0 0
      %639 = vmatpush1.bf16.msra.mxu0 0
      %640 = vmatprep.subr.bf16.mxu0 0
      %641 = vmatpush1.bf16.msra.mxu0 0
      %642 = vmatprep.subr.bf16.mxu0 0
      %643 = vmatpush1.bf16.msra.mxu0 0
      %644 = vmatprep.subr.bf16.mxu0 0
      %645 = vmatpush1.bf16.msra.mxu0 0
      %646 = vmatprep.subr.bf16.mxu0 0
      %647 = vmatpush1.bf16.msra.mxu0 0
      %648 = vmatprep.subr.bf16.mxu0 0
      %649 = vmatpush1.bf16.msra.mxu0 0
      %650 = vmatprep.subr.bf16.mxu0 0
      %651 = vmatpush1.bf16.msra.mxu0 0
      %652 = vmatprep.subr.bf16.mxu0 0
      %653 = vmatpush1.bf16.msra.mxu0 0
      %654 = vmatprep.mubr.bf16.mxu0 0
      %655 = vmatmul.mubr.bf16.gmra.mrb[0].mxu0 %v416
      %v656 = vpop.f32.mrb[0].mxu0
      %v657 = vadd.f32 %v357, %v656
      %v658 = vpop.f32.mrb[0].mxu0
      %v659 = vadd.f32 %v357, %v658
      %v660 = vpop.f32.mrb[0].mxu0
      %v661 = vadd.f32 %v362, %v660
      %v662 = vpop.f32.mrb[0].mxu0
      %v663 = vadd.f32 %v362, %v662
      %664 = vmatprep.mubr.bf16.mxu0 0
      %665 = vmatmul.mubr.bf16.gmra.mrb[0].mxu0 %v419
      %v666 = vpop.f32.mrb[0].mxu0
      %v667 = vadd.f32 %v367, %v666
      %v668 = vpop.f32.mrb[0].mxu0
      %v669 = vadd.f32 %v367, %v668
      %v670 = vpop.f32.mrb[0].mxu0
      %v671 = vadd.f32 %v372, %v670
      %v672 = vpop.f32.mrb[0].mxu0
      %v673 = vadd.f32 %v372, %v672
      %674 = vmatprep.mubr.bf16.mxu0 0
      %675 = vmatmul.mubr.bf16.gmra.mrb[0].mxu0 %v422
      %v676 = vpop.f32.mrb[0].mxu0
      %v677 = vadd.f32 %v377, %v676
      %v678 = vpop.f32.mrb[0].mxu0
      %v679 = vadd.f32 %v377, %v678
      %v680 = vpop.f32.mrb[0].mxu0
      %v681 = vadd.f32 %v382, %v680
      %v682 = vpop.f32.mrb[0].mxu0
      %v683 = vadd.f32 %v382, %v682
      %684 = vmatprep.mubr.bf16.mxu0 0
      %685 = vmatmul.mubr.bf16.gmra.mrb[0].mxu0 %v425
      %v686 = vpop.f32.mrb[0].mxu0
      %v687 = vadd.f32 %v387, %v686
      %v688 = vpop.f32.mrb[0].mxu0
      %v689 = vadd.f32 %v387, %v688
      %v690 = vpop.f32.mrb[0].mxu0
      %v691 = vadd.f32 %v392, %v690
      %v692 = vpop.f32.mrb[0].mxu0
      %v693 = vadd.f32 %v392, %v692
      %694 = vdwg.mxu0
      %695 = vmatprep.subr.bf16.mxu0 %v450
      %696 = vmatpush1.bf16.msra.mxu0 %v447
      %697 = vmatprep.subr.bf16.mxu0 0
      %698 = vmatpush1.bf16.msra.mxu0 0
      %699 = vmatprep.subr.bf16.mxu0 0
      %700 = vmatpush1.bf16.msra.mxu0 0
      %701 = vmatprep.subr.bf16.mxu0 0
      %702 = vmatpush1.bf16.msra.mxu0 0
      %703 = vmatprep.subr.bf16.mxu0 0
      %704 = vmatpush1.bf16.msra.mxu0 0
      %705 = vmatprep.subr.bf16.mxu0 0
      %706 = vmatpush1.bf16.msra.mxu0 0
      %707 = vmatprep.subr.bf16.mxu0 0
      %708 = vmatpush1.bf16.msra.mxu0 0
      %709 = vmatprep.subr.bf16.mxu0 0
      %710 = vmatpush1.bf16.msra.mxu0 0
      %711 = vmatprep.subr.bf16.mxu0 0
      %712 = vmatpush1.bf16.msra.mxu0 0
      %713 = vmatprep.subr.bf16.mxu0 0
      %714 = vmatpush1.bf16.msra.mxu0 0
      %715 = vmatprep.subr.bf16.mxu0 0
      %716 = vmatpush1.bf16.msra.mxu0 0
      %717 = vmatprep.subr.bf16.mxu0 0
      %718 = vmatpush1.bf16.msra.mxu0 0
      %719 = vmatprep.subr.bf16.mxu0 0
      %720 = vmatpush1.bf16.msra.mxu0 0
      %721 = vmatprep.subr.bf16.mxu0 0
      %722 = vmatpush1.bf16.msra.mxu0 0
      %723 = vmatprep.subr.bf16.mxu0 0
      %724 = vmatpush1.bf16.msra.mxu0 0
      %725 = vmatprep.subr.bf16.mxu0 0
      %726 = vmatpush1.bf16.msra.mxu0 0
      %727 = vmatprep.mubr.bf16.mxu0 0
      %728 = vmatmul.mubr.bf16.gmra.mrb[0].mxu0 %v416
      %v729 = vpop.f32.mrb[0].mxu0
      %v730 = vadd.f32 %v357, %v729
      %v731 = vpop.f32.mrb[0].mxu0
      %v732 = vadd.f32 %v357, %v731
      %v733 = vpop.f32.mrb[0].mxu0
      %v734 = vadd.f32 %v362, %v733
      %v735 = vpop.f32.mrb[0].mxu0
      %v736 = vadd.f32 %v362, %v735
      %737 = vmatprep.mubr.bf16.mxu0 0
      %738 = vmatmul.mubr.bf16.gmra.mrb[0].mxu0 %v419
      %v739 = vpop.f32.mrb[0].mxu0
      %v740 = vadd.f32 %v367, %v739
      %v741 = vpop.f32.mrb[0].mxu0
      %v742 = vadd.f32 %v367, %v741
      %v743 = vpop.f32.mrb[0].mxu0
      %v744 = vadd.f32 %v372, %v743
      %v745 = vpop.f32.mrb[0].mxu0
      %v746 = vadd.f32 %v372, %v745
      %747 = vmatprep.mubr.bf16.mxu0 0
      %748 = vmatmul.mubr.bf16.gmra.mrb[0].mxu0 %v422
      %v749 = vpop.f32.mrb[0].mxu0
      %v750 = vadd.f32 %v377, %v749
      %v751 = vpop.f32.mrb[0].mxu0
      %v752 = vadd.f32 %v377, %v751
      %v753 = vpop.f32.mrb[0].mxu0
      %v754 = vadd.f32 %v382, %v753
      %v755 = vpop.f32.mrb[0].mxu0
      %v756 = vadd.f32 %v382, %v755
      %757 = vmatprep.mubr.bf16.mxu0 0
      %758 = vmatmul.mubr.bf16.gmra.mrb[0].mxu0 %v425
      %v759 = vpop.f32.mrb[0].mxu0
      %v760 = vadd.f32 %v387, %v759
      %v761 = vpop.f32.mrb[0].mxu0
      %v762 = vadd.f32 %v387, %v761
      %v763 = vpop.f32.mrb[0].mxu0
      %v764 = vadd.f32 %v392, %v763
      %v765 = vpop.f32.mrb[0].mxu0
      %v766 = vadd.f32 %v392, %v765
      %767 = vdwg.mxu0
      %768 = vmatprep.subr.bf16.mxu0 %v456
      %769 = vmatpush1.bf16.msra.mxu0 %v453
      %770 = vmatprep.subr.bf16.mxu0 0
      %771 = vmatpush1.bf16.msra.mxu0 0
      %772 = vmatprep.subr.bf16.mxu0 0
      %773 = vmatpush1.bf16.msra.mxu0 0
      %774 = vmatprep.subr.bf16.mxu0 0
      %775 = vmatpush1.bf16.msra.mxu0 0
      %776 = vmatprep.subr.bf16.mxu0 0
      %777 = vmatpush1.bf16.msra.mxu0 0
      %778 = vmatprep.subr.bf16.mxu0 0
      %779 = vmatpush1.bf16.msra.mxu0 0
      %780 = vmatprep.subr.bf16.mxu0 0
      %781 = vmatpush1.bf16.msra.mxu0 0
      %782 = vmatprep.subr.bf16.mxu0 0
      %783 = vmatpush1.bf16.msra.mxu0 0
      %784 = vmatprep.subr.bf16.mxu0 0
      %785 = vmatpush1.bf16.msra.mxu0 0
      %786 = vmatprep.subr.bf16.mxu0 0
      %787 = vmatpush1.bf16.msra.mxu0 0
      %788 = vmatprep.subr.bf16.mxu0 0
      %789 = vmatpush1.bf16.msra.mxu0 0
      %790 = vmatprep.subr.bf16.mxu0 0
      %791 = vmatpush1.bf16.msra.mxu0 0
      %792 = vmatprep.subr.bf16.mxu0 0
      %793 = vmatpush1.bf16.msra.mxu0 0
      %794 = vmatprep.subr.bf16.mxu0 0
      %795 = vmatpush1.bf16.msra.mxu0 0
      %796 = vmatprep.subr.bf16.mxu0 0
      %797 = vmatpush1.bf16.msra.mxu0 0
      %798 = vmatprep.subr.bf16.mxu0 0
      %799 = vmatpush1.bf16.msra.mxu0 0
      %800 = vmatprep.mubr.bf16.mxu0 0
      %801 = vmatmul.mubr.bf16.gmra.mrb[0].mxu0 %v416
      %v802 = vpop.f32.mrb[0].mxu0
      %v803 = vadd.f32 %v357, %v802
      %v804 = vpop.f32.mrb[0].mxu0
      %v805 = vadd.f32 %v357, %v804
      %v806 = vpop.f32.mrb[0].mxu0
      %v807 = vadd.f32 %v362, %v806
      %v808 = vpop.f32.mrb[0].mxu0
      %v809 = vadd.f32 %v362, %v808
      %810 = vmatprep.mubr.bf16.mxu0 0
      %811 = vmatmul.mubr.bf16.gmra.mrb[0].mxu0 %v419
      %v812 = vpop.f32.mrb[0].mxu0
      %v813 = vadd.f32 %v367, %v812
      %v814 = vpop.f32.mrb[0].mxu0
      %v815 = vadd.f32 %v367, %v814
      %v816 = vpop.f32.mrb[0].mxu0
      %v817 = vadd.f32 %v372, %v816
      %v818 = vpop.f32.mrb[0].mxu0
      %v819 = vadd.f32 %v372, %v818
      %820 = vmatprep.mubr.bf16.mxu0 0
      %821 = vmatmul.mubr.bf16.gmra.mrb[0].mxu0 %v422
      %v822 = vpop.f32.mrb[0].mxu0
      %v823 = vadd.f32 %v377, %v822
      %v824 = vpop.f32.mrb[0].mxu0
      %v825 = vadd.f32 %v377, %v824
      %v826 = vpop.f32.mrb[0].mxu0
      %v827 = vadd.f32 %v382, %v826
      %v828 = vpop.f32.mrb[0].mxu0
      %v829 = vadd.f32 %v382, %v828
      %830 = vmatprep.mubr.bf16.mxu0 0
      %831 = vmatmul.mubr.bf16.gmra.mrb[0].mxu0 %v425
      %v832 = vpop.f32.mrb[0].mxu0
      %v833 = vadd.f32 %v387, %v832
      %v834 = vpop.f32.mrb[0].mxu0
      %v835 = vadd.f32 %v387, %v834
      %v836 = vpop.f32.mrb[0].mxu0
      %v837 = vadd.f32 %v392, %v836
      %v838 = vpop.f32.mrb[0].mxu0
      %v839 = vadd.f32 %v392, %v838
      %840 = vdwg.mxu0
      %841 = vmatprep.subr.bf16.mxu0 %v462
      %842 = vmatpush1.bf16.msra.mxu0 %v459
      %843 = vmatprep.subr.bf16.mxu0 0
      %844 = vmatpush1.bf16.msra.mxu0 0
      %845 = vmatprep.subr.bf16.mxu0 0
      %846 = vmatpush1.bf16.msra.mxu0 0
      %847 = vmatprep.subr.bf16.mxu0 0
      %848 = vmatpush1.bf16.msra.mxu0 0
      %849 = vmatprep.subr.bf16.mxu0 0
      %850 = vmatpush1.bf16.msra.mxu0 0
      %851 = vmatprep.subr.bf16.mxu0 0
      %852 = vmatpush1.bf16.msra.mxu0 0
      %853 = vmatprep.subr.bf16.mxu0 0
      %854 = vmatpush1.bf16.msra.mxu0 0
      %855 = vmatprep.subr.bf16.mxu0 0
      %856 = vmatpush1.bf16.msra.mxu0 0
      %857 = vmatprep.subr.bf16.mxu0 0
      %858 = vmatpush1.bf16.msra.mxu0 0
      %859 = vmatprep.subr.bf16.mxu0 0
      %860 = vmatpush1.bf16.msra.mxu0 0
      %861 = vmatprep.subr.bf16.mxu0 0
      %862 = vmatpush1.bf16.msra.mxu0 0
      %863 = vmatprep.subr.bf16.mxu0 0
      %864 = vmatpush1.bf16.msra.mxu0 0
      %865 = vmatprep.subr.bf16.mxu0 0
      %866 = vmatpush1.bf16.msra.mxu0 0
      %867 = vmatprep.subr.bf16.mxu0 0
      %868 = vmatpush1.bf16.msra.mxu0 0
      %869 = vmatprep.subr.bf16.mxu0 0
      %870 = vmatpush1.bf16.msra.mxu0 0
      %871 = vmatprep.subr.bf16.mxu0 0
      %872 = vmatpush1.bf16.msra.mxu0 0
      %873 = vmatprep.mubr.bf16.mxu0 0
      %874 = vmatmul.mubr.bf16.gmra.mrb[0].mxu0 %v416
      %v875 = vpop.f32.mrb[0].mxu0
      %v876 = vadd.f32 %v357, %v875
      %v877 = vpop.f32.mrb[0].mxu0
      %v878 = vadd.f32 %v357, %v877
      %v879 = vpop.f32.mrb[0].mxu0
      %v880 = vadd.f32 %v362, %v879
      %v881 = vpop.f32.mrb[0].mxu0
      %v882 = vadd.f32 %v362, %v881
      %883 = vmatprep.mubr.bf16.mxu0 0
      %884 = vmatmul.mubr.bf16.gmra.mrb[0].mxu0 %v419
      %v885 = vpop.f32.mrb[0].mxu0
      %v886 = vadd.f32 %v367, %v885
      %v887 = vpop.f32.mrb[0].mxu0
      %v888 = vadd.f32 %v367, %v887
      %v889 = vpop.f32.mrb[0].mxu0
      %v890 = vadd.f32 %v372, %v889
      %v891 = vpop.f32.mrb[0].mxu0
      %v892 = vadd.f32 %v372, %v891
      %893 = vmatprep.mubr.bf16.mxu0 0
      %894 = vmatmul.mubr.bf16.gmra.mrb[0].mxu0 %v422
      %v895 = vpop.f32.mrb[0].mxu0
      %v896 = vadd.f32 %v377, %v895
      %v897 = vpop.f32.mrb[0].mxu0
      %v898 = vadd.f32 %v377, %v897
      %v899 = vpop.f32.mrb[0].mxu0
      %v900 = vadd.f32 %v382, %v899
      %v901 = vpop.f32.mrb[0].mxu0
      %v902 = vadd.f32 %v382, %v901
      %903 = vmatprep.mubr.bf16.mxu0 0
      %904 = vmatmul.mubr.bf16.gmra.mrb[0].mxu0 %v425
      %v905 = vpop.f32.mrb[0].mxu0
      %v906 = vadd.f32 %v387, %v905
      %v907 = vpop.f32.mrb[0].mxu0
      %v908 = vadd.f32 %v387, %v907
      %v909 = vpop.f32.mrb[0].mxu0
      %v910 = vadd.f32 %v392, %v909
      %v911 = vpop.f32.mrb[0].mxu0
      %v912 = vadd.f32 %v392, %v911
      %913 = vdwg.mxu0
      %914 = vmatprep.subr.bf16.mxu0 %v468
      %915 = vmatpush1.bf16.msra.mxu0 %v465
      %916 = vmatprep.subr.bf16.mxu0 0
      %917 = vmatpush1.bf16.msra.mxu0 0
      %918 = vmatprep.subr.bf16.mxu0 0
      %919 = vmatpush1.bf16.msra.mxu0 0
      %920 = vmatprep.subr.bf16.mxu0 0
      %921 = vmatpush1.bf16.msra.mxu0 0
      %922 = vmatprep.subr.bf16.mxu0 0
      %923 = vmatpush1.bf16.msra.mxu0 0
      %924 = vmatprep.subr.bf16.mxu0 0
      %925 = vmatpush1.bf16.msra.mxu0 0
      %926 = vmatprep.subr.bf16.mxu0 0
      %927 = vmatpush1.bf16.msra.mxu0 0
      %928 = vmatprep.subr.bf16.mxu0 0
      %929 = vmatpush1.bf16.msra.mxu0 0
      %930 = vmatprep.subr.bf16.mxu0 0
      %931 = vmatpush1.bf16.msra.mxu0 0
      %932 = vmatprep.subr.bf16.mxu0 0
      %933 = vmatpush1.bf16.msra.mxu0 0
      %934 = vmatprep.subr.bf16.mxu0 0
      %935 = vmatpush1.bf16.msra.mxu0 0
      %936 = vmatprep.subr.bf16.mxu0 0
      %937 = vmatpush1.bf16.msra.mxu0 0
      %938 = vmatprep.subr.bf16.mxu0 0
      %939 = vmatpush1.bf16.msra.mxu0 0
      %940 = vmatprep.subr.bf16.mxu0 0
      %941 = vmatpush1.bf16.msra.mxu0 0
      %942 = vmatprep.subr.bf16.mxu0 0
      %943 = vmatpush1.bf16.msra.mxu0 0
      %944 = vmatprep.subr.bf16.mxu0 0
      %945 = vmatpush1.bf16.msra.mxu0 0
      %946 = vmatprep.mubr.bf16.mxu0 0
      %947 = vmatmul.mubr.bf16.gmra.mrb[0].mxu0 %v416
      %v948 = vpop.f32.mrb[0].mxu0
      %v949 = vadd.f32 %v357, %v948
      %v950 = vpop.f32.mrb[0].mxu0
      %v951 = vadd.f32 %v357, %v950
      %v952 = vpop.f32.mrb[0].mxu0
      %v953 = vadd.f32 %v362, %v952
      %v954 = vpop.f32.mrb[0].mxu0
      %v955 = vadd.f32 %v362, %v954
      %956 = vmatprep.mubr.bf16.mxu0 0
      %957 = vmatmul.mubr.bf16.gmra.mrb[0].mxu0 %v419
      %v958 = vpop.f32.mrb[0].mxu0
      %v959 = vadd.f32 %v367, %v958
      %v960 = vpop.f32.mrb[0].mxu0
      %v961 = vadd.f32 %v367, %v960
      %v962 = vpop.f32.mrb[0].mxu0
      %v963 = vadd.f32 %v372, %v962
      %v964 = vpop.f32.mrb[0].mxu0
      %v965 = vadd.f32 %v372, %v964
      %966 = vmatprep.mubr.bf16.mxu0 0
      %967 = vmatmul.mubr.bf16.gmra.mrb[0].mxu0 %v422
      %v968 = vpop.f32.mrb[0].mxu0
      %v969 = vadd.f32 %v377, %v968
      %v970 = vpop.f32.mrb[0].mxu0
      %v971 = vadd.f32 %v377, %v970
      %v972 = vpop.f32.mrb[0].mxu0
      %v973 = vadd.f32 %v382, %v972
      %v974 = vpop.f32.mrb[0].mxu0
      %v975 = vadd.f32 %v382, %v974
      %976 = vmatprep.mubr.bf16.mxu0 0
      %977 = vmatmul.mubr.bf16.gmra.mrb[0].mxu0 %v425
      %v978 = vpop.f32.mrb[0].mxu0
      %v979 = vadd.f32 %v387, %v978
      %v980 = vpop.f32.mrb[0].mxu0
      %v981 = vadd.f32 %v387, %v980
      %v982 = vpop.f32.mrb[0].mxu0
      %v983 = vadd.f32 %v392, %v982
      %v984 = vpop.f32.mrb[0].mxu0
      %v985 = vadd.f32 %v392, %v984
      %986 = vdwg.mxu0
      %987 = vmatprep.subr.bf16.mxu0 %v474
      %988 = vmatpush1.bf16.msra.mxu0 %v471
      %989 = vmatprep.subr.bf16.mxu0 0
      %990 = vmatpush1.bf16.msra.mxu0 0
      %991 = vmatprep.subr.bf16.mxu0 0
      %992 = vmatpush1.bf16.msra.mxu0 0
      %993 = vmatprep.subr.bf16.mxu0 0
      %994 = vmatpush1.bf16.msra.mxu0 0
      %995 = vmatprep.subr.bf16.mxu0 0
      %996 = vmatpush1.bf16.msra.mxu0 0
      %997 = vmatprep.subr.bf16.mxu0 0
      %998 = vmatpush1.bf16.msra.mxu0 0
      %999 = vmatprep.subr.bf16.mxu0 0
      %1000 = vmatpush1.bf16.msra.mxu0 0
      %1001 = vmatprep.subr.bf16.mxu0 0
      %1002 = vmatpush1.bf16.msra.mxu0 0
      %1003 = vmatprep.subr.bf16.mxu0 0
      %1004 = vmatpush1.bf16.msra.mxu0 0
      %1005 = vmatprep.subr.bf16.mxu0 0
      %1006 = vmatpush1.bf16.msra.mxu0 0
      %1007 = vmatprep.subr.bf16.mxu0 0
      %1008 = vmatpush1.bf16.msra.mxu0 0
      %1009 = vmatprep.subr.bf16.mxu0 0
      %1010 = vmatpush1.bf16.msra.mxu0 0
      %1011 = vmatprep.subr.bf16.mxu0 0
      %1012 = vmatpush1.bf16.msra.mxu0 0
      %1013 = vmatprep.subr.bf16.mxu0 0
      %1014 = vmatpush1.bf16.msra.mxu0 0
      %1015 = vmatprep.subr.bf16.mxu0 0
      %1016 = vmatpush1.bf16.msra.mxu0 0
      %1017 = vmatprep.subr.bf16.mxu0 0
      %1018 = vmatpush1.bf16.msra.mxu0 0
      %1019 = vmatprep.mubr.bf16.mxu0 0
      %1020 = vmatmul.mubr.bf16.gmra.mrb[0].mxu0 %v416
      %v1021 = vpop.f32.mrb[0].mxu0
      %v1022 = vadd.f32 %v357, %v1021
      %v1023 = vpop.f32.mrb[0].mxu0
      %v1024 = vadd.f32 %v357, %v1023
      %v1025 = vpop.f32.mrb[0].mxu0
      %v1026 = vadd.f32 %v362, %v1025
      %v1027 = vpop.f32.mrb[0].mxu0
      %v1028 = vadd.f32 %v362, %v1027
      %1029 = vmatprep.mubr.bf16.mxu0 0
      %1030 = vmatmul.mubr.bf16.gmra.mrb[0].mxu0 %v419
      %v1031 = vpop.f32.mrb[0].mxu0
      %v1032 = vadd.f32 %v367, %v1031
      %v1033 = vpop.f32.mrb[0].mxu0
      %v1034 = vadd.f32 %v367, %v1033
      %v1035 = vpop.f32.mrb[0].mxu0
      %v1036 = vadd.f32 %v372, %v1035
      %v1037 = vpop.f32.mrb[0].mxu0
      %v1038 = vadd.f32 %v372, %v1037
      %1039 = vmatprep.mubr.bf16.mxu0 0
      %1040 = vmatmul.mubr.bf16.gmra.mrb[0].mxu0 %v422
      %v1041 = vpop.f32.mrb[0].mxu0
      %v1042 = vadd.f32 %v377, %v1041
      %v1043 = vpop.f32.mrb[0].mxu0
      %v1044 = vadd.f32 %v377, %v1043
      %v1045 = vpop.f32.mrb[0].mxu0
      %v1046 = vadd.f32 %v382, %v1045
      %v1047 = vpop.f32.mrb[0].mxu0
      %v1048 = vadd.f32 %v382, %v1047
      %1049 = vmatprep.mubr.bf16.mxu0 0
      %1050 = vmatmul.mubr.bf16.gmra.mrb[0].mxu0 %v425
      %v1051 = vpop.f32.mrb[0].mxu0
      %v1052 = vadd.f32 %v387, %v1051
      %v1053 = vpop.f32.mrb[0].mxu0
      %v1054 = vadd.f32 %v387, %v1053
      %v1055 = vpop.f32.mrb[0].mxu0
      %v1056 = vadd.f32 %v392, %v1055
      %v1057 = vpop.f32.mrb[0].mxu0
      %v1058 = vadd.f32 %v392, %v1057
      %1059 = vdwg.mxu0
      %v1060 = vmul.f32 %v511, 0.2
      %v1061 = vmul.f32 %v513, 0.2
      %v1062 = vmul.f32 %v584, 0.2
      %v1063 = vmul.f32 %v586, 0.2
      %v1064 = vmul.f32 %v657, 0.2
      %v1065 = vmul.f32 %v659, 0.2
      %v1066 = vmul.f32 %v730, 0.2
      %v1067 = vmul.f32 %v732, 0.2
      %v1068 = vmul.f32 %v803, 0.2
      %v1069 = vmul.f32 %v805, 0.2
      %v1070 = vmul.f32 %v876, 0.2
      %v1071 = vmul.f32 %v878, 0.2
      %v1072 = vmul.f32 %v949, 0.2
      %v1073 = vmul.f32 %v951, 0.2
      %v1074 = vmul.f32 %v1022, 0.2
      %v1075 = vmul.f32 %v1024, 0.2
      %v1076 = vmul.f32 %v515, 0.2
      %v1077 = vmul.f32 %v517, 0.2
      %v1078 = vmul.f32 %v588, 0.2
      %v1079 = vmul.f32 %v590, 0.2
      %v1080 = vmul.f32 %v661, 0.2
      %v1081 = vmul.f32 %v663, 0.2
      %v1082 = vmul.f32 %v734, 0.2
      %v1083 = vmul.f32 %v736, 0.2
      %v1084 = vmul.f32 %v807, 0.2
      %v1085 = vmul.f32 %v809, 0.2
      %v1086 = vmul.f32 %v880, 0.2
      %v1087 = vmul.f32 %v882, 0.2
      %v1088 = vmul.f32 %v953, 0.2
      %v1089 = vmul.f32 %v955, 0.2
      %v1090 = vmul.f32 %v1026, 0.2
      %v1091 = vmul.f32 %v1028, 0.2
      %v1092 = vmul.f32 %v521, 0.2
      %v1093 = vmul.f32 %v523, 0.2
      %v1094 = vmul.f32 %v594, 0.2
      %v1095 = vmul.f32 %v596, 0.2
      %v1096 = vmul.f32 %v667, 0.2
      %v1097 = vmul.f32 %v669, 0.2
      %v1098 = vmul.f32 %v740, 0.2
      %v1099 = vmul.f32 %v742, 0.2
      %v1100 = vmul.f32 %v813, 0.2
      %v1101 = vmul.f32 %v815, 0.2
      %v1102 = vmul.f32 %v886, 0.2
      %v1103 = vmul.f32 %v888, 0.2
      %v1104 = vmul.f32 %v959, 0.2
      %v1105 = vmul.f32 %v961, 0.2
      %v1106 = vmul.f32 %v1032, 0.2
      %v1107 = vmul.f32 %v1034, 0.2
      %v1108 = vmul.f32 %v525, 0.2
      %v1109 = vmul.f32 %v527, 0.2
      %v1110 = vmul.f32 %v598, 0.2
      %v1111 = vmul.f32 %v600, 0.2
      %v1112 = vmul.f32 %v671, 0.2
      %v1113 = vmul.f32 %v673, 0.2
      %v1114 = vmul.f32 %v744, 0.2
      %v1115 = vmul.f32 %v746, 0.2
      %v1116 = vmul.f32 %v817, 0.2
      %v1117 = vmul.f32 %v819, 0.2
      %v1118 = vmul.f32 %v890, 0.2
      %v1119 = vmul.f32 %v892, 0.2
      %v1120 = vmul.f32 %v963, 0.2
      %v1121 = vmul.f32 %v965, 0.2
      %v1122 = vmul.f32 %v1036, 0.2
      %v1123 = vmul.f32 %v1038, 0.2
      %v1124 = vmul.f32 %v531, 0.2
      %v1125 = vmul.f32 %v533, 0.2
      %v1126 = vmul.f32 %v604, 0.2
      %v1127 = vmul.f32 %v606, 0.2
      %v1128 = vmul.f32 %v677, 0.2
      %v1129 = vmul.f32 %v679, 0.2
      %v1130 = vmul.f32 %v750, 0.2
      %v1131 = vmul.f32 %v752, 0.2
      %v1132 = vmul.f32 %v823, 0.2
      %v1133 = vmul.f32 %v825, 0.2
      %v1134 = vmul.f32 %v896, 0.2
      %v1135 = vmul.f32 %v898, 0.2
      %v1136 = vmul.f32 %v969, 0.2
      %v1137 = vmul.f32 %v971, 0.2
      %v1138 = vmul.f32 %v1042, 0.2
      %v1139 = vmul.f32 %v1044, 0.2
      %v1140 = vmul.f32 %v535, 0.2
      %v1141 = vmul.f32 %v537, 0.2
      %v1142 = vmul.f32 %v608, 0.2
      %v1143 = vmul.f32 %v610, 0.2
      %v1144 = vmul.f32 %v681, 0.2
      %v1145 = vmul.f32 %v683, 0.2
      %v1146 = vmul.f32 %v754, 0.2
      %v1147 = vmul.f32 %v756, 0.2
      %v1148 = vmul.f32 %v827, 0.2
      %v1149 = vmul.f32 %v829, 0.2
      %v1150 = vmul.f32 %v900, 0.2
      %v1151 = vmul.f32 %v902, 0.2
      %v1152 = vmul.f32 %v973, 0.2
      %v1153 = vmul.f32 %v975, 0.2
      %v1154 = vmul.f32 %v1046, 0.2
      %v1155 = vmul.f32 %v1048, 0.2
      %v1156 = vmul.f32 %v541, 0.2
      %v1157 = vmul.f32 %v543, 0.2
      %v1158 = vmul.f32 %v614, 0.2
      %v1159 = vmul.f32 %v616, 0.2
      %v1160 = vmul.f32 %v687, 0.2
      %v1161 = vmul.f32 %v689, 0.2
      %v1162 = vmul.f32 %v760, 0.2
      %v1163 = vmul.f32 %v762, 0.2
      %v1164 = vmul.f32 %v833, 0.2
      %v1165 = vmul.f32 %v835, 0.2
      %v1166 = vmul.f32 %v906, 0.2
      %v1167 = vmul.f32 %v908, 0.2
      %v1168 = vmul.f32 %v979, 0.2
      %v1169 = vmul.f32 %v981, 0.2
      %v1170 = vmul.f32 %v1052, 0.2
      %v1171 = vmul.f32 %v1054, 0.2
      %v1172 = vmul.f32 %v545, 0.2
      %v1173 = vmul.f32 %v547, 0.2
      %v1174 = vmul.f32 %v618, 0.2
      %v1175 = vmul.f32 %v620, 0.2
      %v1176 = vmul.f32 %v691, 0.2
      %v1177 = vmul.f32 %v693, 0.2
      %v1178 = vmul.f32 %v764, 0.2
      %v1179 = vmul.f32 %v766, 0.2
      %v1180 = vmul.f32 %v837, 0.2
      %v1181 = vmul.f32 %v839, 0.2
      %v1182 = vmul.f32 %v910, 0.2
      %v1183 = vmul.f32 %v912, 0.2
      %v1184 = vmul.f32 %v983, 0.2
      %v1185 = vmul.f32 %v985, 0.2
      %v1186 = vmul.f32 %v1056, 0.2
      %v1187 = vmul.f32 %v1058, 0.2
      %v1188 = vmax.f32 %v511, %v1060
      %v1189 = vmax.f32 %v513, %v1061
      %v1190 = vmax.f32 %v584, %v1062
      %v1191 = vmax.f32 %v586, %v1063
      %v1192 = vmax.f32 %v657, %v1064
      %v1193 = vmax.f32 %v659, %v1065
      %v1194 = vmax.f32 %v730, %v1066
      %v1195 = vmax.f32 %v732, %v1067
      %v1196 = vmax.f32 %v803, %v1068
      %v1197 = vmax.f32 %v805, %v1069
      %v1198 = vmax.f32 %v876, %v1070
      %v1199 = vmax.f32 %v878, %v1071
      %v1200 = vmax.f32 %v949, %v1072
      %v1201 = vmax.f32 %v951, %v1073
      %v1202 = vmax.f32 %v1022, %v1074
      %v1203 = vmax.f32 %v1024, %v1075
      %v1204 = vmax.f32 %v515, %v1076
      %v1205 = vmax.f32 %v517, %v1077
      %v1206 = vmax.f32 %v588, %v1078
      %v1207 = vmax.f32 %v590, %v1079
      %v1208 = vmax.f32 %v661, %v1080
      %v1209 = vmax.f32 %v663, %v1081
      %v1210 = vmax.f32 %v734, %v1082
      %v1211 = vmax.f32 %v736, %v1083
      %v1212 = vmax.f32 %v807, %v1084
      %v1213 = vmax.f32 %v809, %v1085
      %v1214 = vmax.f32 %v880, %v1086
      %v1215 = vmax.f32 %v882, %v1087
      %v1216 = vmax.f32 %v953, %v1088
      %v1217 = vmax.f32 %v955, %v1089
      %v1218 = vmax.f32 %v1026, %v1090
      %v1219 = vmax.f32 %v1028, %v1091
      %v1220 = vmax.f32 %v521, %v1092
      %v1221 = vmax.f32 %v523, %v1093
      %v1222 = vmax.f32 %v594, %v1094
      %v1223 = vmax.f32 %v596, %v1095
      %v1224 = vmax.f32 %v667, %v1096
      %v1225 = vmax.f32 %v669, %v1097
      %v1226 = vmax.f32 %v740, %v1098
      %v1227 = vmax.f32 %v742, %v1099
      %v1228 = vmax.f32 %v813, %v1100
      %v1229 = vmax.f32 %v815, %v1101
      %v1230 = vmax.f32 %v886, %v1102
      %v1231 = vmax.f32 %v888, %v1103
      %v1232 = vmax.f32 %v959, %v1104
      %v1233 = vmax.f32 %v961, %v1105
      %v1234 = vmax.f32 %v1032, %v1106
      %v1235 = vmax.f32 %v1034, %v1107
      %v1236 = vmax.f32 %v525, %v1108
      %v1237 = vmax.f32 %v527, %v1109
      %v1238 = vmax.f32 %v598, %v1110
      %v1239 = vmax.f32 %v600, %v1111
      %v1240 = vmax.f32 %v671, %v1112
      %v1241 = vmax.f32 %v673, %v1113
      %v1242 = vmax.f32 %v744, %v1114
      %v1243 = vmax.f32 %v746, %v1115
      %v1244 = vmax.f32 %v817, %v1116
      %v1245 = vmax.f32 %v819, %v1117
      %v1246 = vmax.f32 %v890, %v1118
      %v1247 = vmax.f32 %v892, %v1119
      %v1248 = vmax.f32 %v963, %v1120
      %v1249 = vmax.f32 %v965, %v1121
      %v1250 = vmax.f32 %v1036, %v1122
      %v1251 = vmax.f32 %v1038, %v1123
      %v1252 = vmax.f32 %v531, %v1124
      %v1253 = vmax.f32 %v533, %v1125
      %v1254 = vmax.f32 %v604, %v1126
      %v1255 = vmax.f32 %v606, %v1127
      %v1256 = vmax.f32 %v677, %v1128
      %v1257 = vmax.f32 %v679, %v1129
      %v1258 = vmax.f32 %v750, %v1130
      %v1259 = vmax.f32 %v752, %v1131
      %v1260 = vmax.f32 %v823, %v1132
      %v1261 = vmax.f32 %v825, %v1133
      %v1262 = vmax.f32 %v896, %v1134
      %v1263 = vmax.f32 %v898, %v1135
      %v1264 = vmax.f32 %v969, %v1136
      %v1265 = vmax.f32 %v971, %v1137
      %v1266 = vmax.f32 %v1042, %v1138
      %v1267 = vmax.f32 %v1044, %v1139
      %v1268 = vmax.f32 %v535, %v1140
      %v1269 = vmax.f32 %v537, %v1141
      %v1270 = vmax.f32 %v608, %v1142
      %v1271 = vmax.f32 %v610, %v1143
      %v1272 = vmax.f32 %v681, %v1144
      %v1273 = vmax.f32 %v683, %v1145
      %v1274 = vmax.f32 %v754, %v1146
      %v1275 = vmax.f32 %v756, %v1147
      %v1276 = vmax.f32 %v827, %v1148
      %v1277 = vmax.f32 %v829, %v1149
      %v1278 = vmax.f32 %v900, %v1150
      %v1279 = vmax.f32 %v902, %v1151
      %v1280 = vmax.f32 %v973, %v1152
      %v1281 = vmax.f32 %v975, %v1153
      %v1282 = vmax.f32 %v1046, %v1154
      %v1283 = vmax.f32 %v1048, %v1155
      %v1284 = vmax.f32 %v541, %v1156
      %v1285 = vmax.f32 %v543, %v1157
      %v1286 = vmax.f32 %v614, %v1158
      %v1287 = vmax.f32 %v616, %v1159
      %v1288 = vmax.f32 %v687, %v1160
      %v1289 = vmax.f32 %v689, %v1161
      %v1290 = vmax.f32 %v760, %v1162
      %v1291 = vmax.f32 %v762, %v1163
      %v1292 = vmax.f32 %v833, %v1164
      %v1293 = vmax.f32 %v835, %v1165
      %v1294 = vmax.f32 %v906, %v1166
      %v1295 = vmax.f32 %v908, %v1167
      %v1296 = vmax.f32 %v979, %v1168
      %v1297 = vmax.f32 %v981, %v1169
      %v1298 = vmax.f32 %v1052, %v1170
      %v1299 = vmax.f32 %v1054, %v1171
      %v1300 = vmax.f32 %v545, %v1172
      %v1301 = vmax.f32 %v547, %v1173
      %v1302 = vmax.f32 %v618, %v1174
      %v1303 = vmax.f32 %v620, %v1175
      %v1304 = vmax.f32 %v691, %v1176
      %v1305 = vmax.f32 %v693, %v1177
      %v1306 = vmax.f32 %v764, %v1178
      %v1307 = vmax.f32 %v766, %v1179
      %v1308 = vmax.f32 %v837, %v1180
      %v1309 = vmax.f32 %v839, %v1181
      %v1310 = vmax.f32 %v910, %v1182
      %v1311 = vmax.f32 %v912, %v1183
      %v1312 = vmax.f32 %v983, %v1184
      %v1313 = vmax.f32 %v985, %v1185
      %v1314 = vmax.f32 %v1056, %v1186
      %v1315 = vmax.f32 %v1058, %v1187
      %v1316 = vld [vmem:[%s3] sm:$0xf]
      %v1317 = vld [vmem:[%s3 + $0x4] sm:$0xf]
      %v1318 = vld [vmem:[%s3 + $0x8] sm:$0xf]
      %v1319 = vld [vmem:[%s3 + $0xc] sm:$0xf]
      %v1320 = vld [vmem:[%s3 + $0x10] sm:$0xf]
      %v1321 = vld [vmem:[%s3 + $0x14] sm:$0xf]
      %v1322 = vld [vmem:[%s3 + $0x18] sm:$0xf]
      %v1323 = vld [vmem:[%s3 + $0x1c] sm:$0xf]
      %v1324 = vld [vmem:[%s3 + $0x20] sm:$0xf]
      %v1325 = vld [vmem:[%s3 + $0x24] sm:$0xf]
      %v1326 = vld [vmem:[%s3 + $0x28] sm:$0xf]
      %v1327 = vld [vmem:[%s3 + $0x2c] sm:$0xf]
      %v1328 = vld [vmem:[%s3 + $0x30] sm:$0xf]
      %v1329 = vld [vmem:[%s3 + $0x34] sm:$0xf]
      %v1330 = vld [vmem:[%s3 + $0x38] sm:$0xf]
      %v1331 = vld [vmem:[%s3 + $0x3c] sm:$0xf]
      %v1332 = vpack.c.bf16 %v1204, %v1188
      %v1333 = vpack.c.bf16 %v1205, %v1189
      %v1334 = vpack.c.bf16 %v1206, %v1190
      %v1335 = vpack.c.bf16 %v1207, %v1191
      %v1336 = vpack.c.bf16 %v1208, %v1192
      %v1337 = vpack.c.bf16 %v1209, %v1193
      %v1338 = vpack.c.bf16 %v1210, %v1194
      %v1339 = vpack.c.bf16 %v1211, %v1195
      %v1340 = vpack.c.bf16 %v1212, %v1196
      %v1341 = vpack.c.bf16 %v1213, %v1197
      %v1342 = vpack.c.bf16 %v1214, %v1198
      %v1343 = vpack.c.bf16 %v1215, %v1199
      %v1344 = vpack.c.bf16 %v1216, %v1200
      %v1345 = vpack.c.bf16 %v1217, %v1201
      %v1346 = vpack.c.bf16 %v1218, %v1202
      %v1347 = vpack.c.bf16 %v1219, %v1203
      %v1348 = vpack.c.bf16 %v1236, %v1220
      %v1349 = vpack.c.bf16 %v1237, %v1221
      %v1350 = vpack.c.bf16 %v1238, %v1222
      %v1351 = vpack.c.bf16 %v1239, %v1223
      %v1352 = vpack.c.bf16 %v1240, %v1224
      %v1353 = vpack.c.bf16 %v1241, %v1225
      %v1354 = vpack.c.bf16 %v1242, %v1226
      %v1355 = vpack.c.bf16 %v1243, %v1227
      %v1356 = vpack.c.bf16 %v1244, %v1228
      %v1357 = vpack.c.bf16 %v1245, %v1229
      %v1358 = vpack.c.bf16 %v1246, %v1230
      %v1359 = vpack.c.bf16 %v1247, %v1231
      %v1360 = vpack.c.bf16 %v1248, %v1232
      %v1361 = vpack.c.bf16 %v1249, %v1233
      %v1362 = vpack.c.bf16 %v1250, %v1234
      %v1363 = vpack.c.bf16 %v1251, %v1235
      %v1364 = vpack.c.bf16 %v1268, %v1252
      %v1365 = vpack.c.bf16 %v1269, %v1253
      %v1366 = vpack.c.bf16 %v1270, %v1254
      %v1367 = vpack.c.bf16 %v1271, %v1255
      %v1368 = vpack.c.bf16 %v1272, %v1256
      %v1369 = vpack.c.bf16 %v1273, %v1257
      %v1370 = vpack.c.bf16 %v1274, %v1258
      %v1371 = vpack.c.bf16 %v1275, %v1259
      %v1372 = vpack.c.bf16 %v1276, %v1260
      %v1373 = vpack.c.bf16 %v1277, %v1261
      %v1374 = vpack.c.bf16 %v1278, %v1262
      %v1375 = vpack.c.bf16 %v1279, %v1263
      %v1376 = vpack.c.bf16 %v1280, %v1264
      %v1377 = vpack.c.bf16 %v1281, %v1265
      %v1378 = vpack.c.bf16 %v1282, %v1266
      %v1379 = vpack.c.bf16 %v1283, %v1267
      %v1380 = vpack.c.bf16 %v1300, %v1284
      %v1381 = vpack.c.bf16 %v1301, %v1285
      %v1382 = vpack.c.bf16 %v1302, %v1286
      %v1383 = vpack.c.bf16 %v1303, %v1287
      %v1384 = vpack.c.bf16 %v1304, %v1288
      %v1385 = vpack.c.bf16 %v1305, %v1289
      %v1386 = vpack.c.bf16 %v1306, %v1290
      %v1387 = vpack.c.bf16 %v1307, %v1291
      %v1388 = vpack.c.bf16 %v1308, %v1292
      %v1389 = vpack.c.bf16 %v1309, %v1293
      %v1390 = vpack.c.bf16 %v1310, %v1294
      %v1391 = vpack.c.bf16 %v1311, %v1295
      %v1392 = vpack.c.bf16 %v1312, %v1296
      %v1393 = vpack.c.bf16 %v1313, %v1297
      %v1394 = vpack.c.bf16 %v1314, %v1298
      %v1395 = vpack.c.bf16 %v1315, %v1299
      %v1396 = vld [vmem:[%s4] sm:$0xff]
      %v1397 = vld [vmem:[%s4 + $0x8] sm:$0xff]
      %v1398 = vld [vmem:[%s4 + $0x10] sm:$0xff]
      %v1399 = vld [vmem:[%s4 + $0x18] sm:$0xff]
      %v1400 = vld [vmem:[%s4 + $0x20] sm:$0xff]
      %v1401 = vld [vmem:[%s4 + $0x28] sm:$0xff]
      %v1402 = vld [vmem:[%s4 + $0x30] sm:$0xff]
      %v1403 = vld [vmem:[%s4 + $0x38] sm:$0xff]
      %v1404 = vld [vmem:[%s4 + $0x40] sm:$0xff]
      %v1405 = vld [vmem:[%s4 + $0x48] sm:$0xff]
      %v1406 = vld [vmem:[%s4 + $0x50] sm:$0xff]
      %v1407 = vld [vmem:[%s4 + $0x58] sm:$0xff]
      %v1408 = vld [vmem:[%s4 + $0x60] sm:$0xff]
      %v1409 = vld [vmem:[%s4 + $0x68] sm:$0xff]
      %v1410 = vld [vmem:[%s4 + $0x70] sm:$0xff]
      %v1411 = vld [vmem:[%s4 + $0x78] sm:$0xff]
      %1413 = vset.pattern.permute.xlu0 0
      %1414 = vperm.xlu0 %1413, %v1396
      %v1415 = vpop.permute.xlu0 %1414
      %1418 = vset.pattern.permute.xlu0 0
      %1419 = vperm.xlu0 %1418, %v1397
      %v1420 = vpop.permute.xlu0 %1419
      %1423 = vset.pattern.permute.xlu0 0
      %1424 = vperm.xlu0 %1423, %v1398
      %v1425 = vpop.permute.xlu0 %1424
      %1428 = vset.pattern.permute.xlu0 0
      %1429 = vperm.xlu0 %1428, %v1399
      %v1430 = vpop.permute.xlu0 %1429
      %1433 = vset.pattern.permute.xlu0 0
      %1434 = vperm.xlu0 %1433, %v1400
      %v1435 = vpop.permute.xlu0 %1434
      %1438 = vset.pattern.permute.xlu0 0
      %1439 = vperm.xlu0 %1438, %v1401
      %v1440 = vpop.permute.xlu0 %1439
      %1443 = vset.pattern.permute.xlu0 0
      %1444 = vperm.xlu0 %1443, %v1402
      %v1445 = vpop.permute.xlu0 %1444
      %1448 = vset.pattern.permute.xlu0 0
      %1449 = vperm.xlu0 %1448, %v1403
      %v1450 = vpop.permute.xlu0 %1449
      %1453 = vset.pattern.permute.xlu0 0
      %1454 = vperm.xlu0 %1453, %v1404
      %v1455 = vpop.permute.xlu0 %1454
      %1458 = vset.pattern.permute.xlu0 0
      %1459 = vperm.xlu0 %1458, %v1405
      %v1460 = vpop.permute.xlu0 %1459
      %1463 = vset.pattern.permute.xlu0 0
      %1464 = vperm.xlu0 %1463, %v1406
      %v1465 = vpop.permute.xlu0 %1464
      %1468 = vset.pattern.permute.xlu0 0
      %1469 = vperm.xlu0 %1468, %v1407
      %v1470 = vpop.permute.xlu0 %1469
      %1473 = vset.pattern.permute.xlu0 0
      %1474 = vperm.xlu0 %1473, %v1408
      %v1475 = vpop.permute.xlu0 %1474
      %1478 = vset.pattern.permute.xlu0 0
      %1479 = vperm.xlu0 %1478, %v1409
      %v1480 = vpop.permute.xlu0 %1479
      %1483 = vset.pattern.permute.xlu0 0
      %1484 = vperm.xlu0 %1483, %v1410
      %v1485 = vpop.permute.xlu0 %1484
      %1488 = vset.pattern.permute.xlu0 0
      %1489 = vperm.xlu0 %1488, %v1411
      %v1490 = vpop.permute.xlu0 %1489
      %v1508 = vunpack.c.l.b16 %v1316
      %v1509 = vunpack.c.l.b16 %v1317
      %v1510 = vunpack.c.l.b16 %v1318
      %v1511 = vunpack.c.l.b16 %v1319
      %v1512 = vunpack.c.l.b16 %v1320
      %v1513 = vunpack.c.l.b16 %v1321
      %v1514 = vunpack.c.l.b16 %v1322
      %v1515 = vunpack.c.l.b16 %v1323
      %v1516 = vunpack.c.l.b16 %v1324
      %v1517 = vunpack.c.l.b16 %v1325
      %v1518 = vunpack.c.l.b16 %v1326
      %v1519 = vunpack.c.l.b16 %v1327
      %v1520 = vunpack.c.l.b16 %v1328
      %v1521 = vunpack.c.l.b16 %v1329
      %v1522 = vunpack.c.l.b16 %v1330
      %v1523 = vunpack.c.l.b16 %v1331
      %v1524 = vpack.c.b16 %v1509, %v1508
      %v1525 = vpack.c.b16 %v1511, %v1510
      %v1526 = vpack.c.b16 %v1513, %v1512
      %v1527 = vpack.c.b16 %v1515, %v1514
      %v1528 = vpack.c.b16 %v1517, %v1516
      %v1529 = vpack.c.b16 %v1519, %v1518
      %v1530 = vpack.c.b16 %v1521, %v1520
      %v1531 = vpack.c.b16 %v1523, %v1522
      %vm1532 = vcmask 523264
      %v1534 = vsel %vm1532, %v1524, 0
      %v1537 = vsel %vm1532, %v1525, 0
      %v1540 = vsel %vm1532, %v1526, 0
      %v1543 = vsel %vm1532, %v1527, 0
      %v1546 = vsel %vm1532, %v1528, 0
      %v1549 = vsel %vm1532, %v1529, 0
      %v1552 = vsel %vm1532, %v1530, 0
      %v1555 = vsel %vm1532, %v1531, 0
      %1557 = vmatprep.subr.bf16.mxu0 %v1333
      %1558 = vmatpush1.bf16.msra.mxu0 %v1332
      %1559 = vmatprep.subr.bf16.mxu0 %v1349
      %1560 = vmatpush1.bf16.msra.mxu0 %v1348
      %1561 = vmatprep.subr.bf16.mxu0 %v1365
      %1562 = vmatpush1.bf16.msra.mxu0 %v1364
      %1563 = vmatprep.subr.bf16.mxu0 %v1381
      %1564 = vmatpush1.bf16.msra.mxu0 %v1380
      %1565 = vmatprep.subr.bf16.mxu0 0
      %1566 = vmatpush1.bf16.msra.mxu0 0
      %1567 = vmatprep.subr.bf16.mxu0 0
      %1568 = vmatpush1.bf16.msra.mxu0 0
      %1569 = vmatprep.subr.bf16.mxu0 0
      %1570 = vmatpush1.bf16.msra.mxu0 0
      %1571 = vmatprep.subr.bf16.mxu0 0
      %1572 = vmatpush1.bf16.msra.mxu0 0
      %1573 = vmatprep.subr.bf16.mxu0 0
      %1574 = vmatpush1.bf16.msra.mxu0 0
      %1575 = vmatprep.subr.bf16.mxu0 0
      %1576 = vmatpush1.bf16.msra.mxu0 0
      %1577 = vmatprep.subr.bf16.mxu0 0
      %1578 = vmatpush1.bf16.msra.mxu0 0
      %1579 = vmatprep.subr.bf16.mxu0 0
      %1580 = vmatpush1.bf16.msra.mxu0 0
      %1581 = vmatprep.subr.bf16.mxu0 0
      %1582 = vmatpush1.bf16.msra.mxu0 0
      %1583 = vmatprep.subr.bf16.mxu0 0
      %1584 = vmatpush1.bf16.msra.mxu0 0
      %1585 = vmatprep.subr.bf16.mxu0 0
      %1586 = vmatpush1.bf16.msra.mxu0 0
      %1587 = vmatprep.subr.bf16.mxu0 0
      %1588 = vmatpush1.bf16.msra.mxu0 0
      %1589 = vmatprep.mubr.bf16.mxu0 0
      %1590 = vmatmul.mubr.bf16.gmra.mrb[0].mxu0 %v1534
      %v1591 = vpop.f32.mrb[0].mxu0
      %v1592 = vadd.f32 %v1415, %v1591
      %v1593 = vpop.f32.mrb[0].mxu0
      %v1594 = vadd.f32 %v1415, %v1593
      %v1595 = vpop.f32.mrb[0].mxu0
      %v1596 = vadd.f32 %v1420, %v1595
      %v1597 = vpop.f32.mrb[0].mxu0
      %v1598 = vadd.f32 %v1420, %v1597
      %1599 = vmatprep.mubr.bf16.mxu0 0
      %1600 = vmatmul.mubr.bf16.gmra.mrb[0].mxu0 %v1537
      %v1601 = vpop.f32.mrb[0].mxu0
      %v1602 = vadd.f32 %v1425, %v1601
      %v1603 = vpop.f32.mrb[0].mxu0
      %v1604 = vadd.f32 %v1425, %v1603
      %v1605 = vpop.f32.mrb[0].mxu0
      %v1606 = vadd.f32 %v1430, %v1605
      %v1607 = vpop.f32.mrb[0].mxu0
      %v1608 = vadd.f32 %v1430, %v1607
      %1609 = vmatprep.mubr.bf16.mxu0 0
      %1610 = vmatmul.mubr.bf16.gmra.mrb[0].mxu0 %v1540
      %v1611 = vpop.f32.mrb[0].mxu0
      %v1612 = vadd.f32 %v1435, %v1611
      %v1613 = vpop.f32.mrb[0].mxu0
      %v1614 = vadd.f32 %v1435, %v1613
      %v1615 = vpop.f32.mrb[0].mxu0
      %v1616 = vadd.f32 %v1440, %v1615
      %v1617 = vpop.f32.mrb[0].mxu0
      %v1618 = vadd.f32 %v1440, %v1617
      %1619 = vmatprep.mubr.bf16.mxu0 0
      %1620 = vmatmul.mubr.bf16.gmra.mrb[0].mxu0 %v1543
      %v1621 = vpop.f32.mrb[0].mxu0
      %v1622 = vadd.f32 %v1445, %v1621
      %v1623 = vpop.f32.mrb[0].mxu0
      %v1624 = vadd.f32 %v1445, %v1623
      %v1625 = vpop.f32.mrb[0].mxu0
      %v1626 = vadd.f32 %v1450, %v1625
      %v1627 = vpop.f32.mrb[0].mxu0
      %v1628 = vadd.f32 %v1450, %v1627
      %1629 = vmatprep.mubr.bf16.mxu0 0
      %1630 = vmatmul.mubr.bf16.gmra.mrb[0].mxu0 %v1546
      %v1631 = vpop.f32.mrb[0].mxu0
      %v1632 = vadd.f32 %v1455, %v1631
      %v1633 = vpop.f32.mrb[0].mxu0
      %v1634 = vadd.f32 %v1455, %v1633
      %v1635 = vpop.f32.mrb[0].mxu0
      %v1636 = vadd.f32 %v1460, %v1635
      %v1637 = vpop.f32.mrb[0].mxu0
      %v1638 = vadd.f32 %v1460, %v1637
      %1639 = vmatprep.mubr.bf16.mxu0 0
      %1640 = vmatmul.mubr.bf16.gmra.mrb[0].mxu0 %v1549
      %v1641 = vpop.f32.mrb[0].mxu0
      %v1642 = vadd.f32 %v1465, %v1641
      %v1643 = vpop.f32.mrb[0].mxu0
      %v1644 = vadd.f32 %v1465, %v1643
      %v1645 = vpop.f32.mrb[0].mxu0
      %v1646 = vadd.f32 %v1470, %v1645
      %v1647 = vpop.f32.mrb[0].mxu0
      %v1648 = vadd.f32 %v1470, %v1647
      %1649 = vmatprep.mubr.bf16.mxu0 0
      %1650 = vmatmul.mubr.bf16.gmra.mrb[0].mxu0 %v1552
      %v1651 = vpop.f32.mrb[0].mxu0
      %v1652 = vadd.f32 %v1475, %v1651
      %v1653 = vpop.f32.mrb[0].mxu0
      %v1654 = vadd.f32 %v1475, %v1653
      %v1655 = vpop.f32.mrb[0].mxu0
      %v1656 = vadd.f32 %v1480, %v1655
      %v1657 = vpop.f32.mrb[0].mxu0
      %v1658 = vadd.f32 %v1480, %v1657
      %1659 = vmatprep.mubr.bf16.mxu0 0
      %1660 = vmatmul.mubr.bf16.gmra.mrb[0].mxu0 %v1555
      %v1661 = vpop.f32.mrb[0].mxu0
      %v1662 = vadd.f32 %v1485, %v1661
      %v1663 = vpop.f32.mrb[0].mxu0
      %v1664 = vadd.f32 %v1485, %v1663
      %v1665 = vpop.f32.mrb[0].mxu0
      %v1666 = vadd.f32 %v1490, %v1665
      %v1667 = vpop.f32.mrb[0].mxu0
      %v1668 = vadd.f32 %v1490, %v1667
      %1669 = vdwg.mxu0
      %1670 = vmatprep.subr.bf16.mxu0 %v1335
      %1671 = vmatpush1.bf16.msra.mxu0 %v1334
      %1672 = vmatprep.subr.bf16.mxu0 %v1351
      %1673 = vmatpush1.bf16.msra.mxu0 %v1350
      %1674 = vmatprep.subr.bf16.mxu0 %v1367
      %1675 = vmatpush1.bf16.msra.mxu0 %v1366
      %1676 = vmatprep.subr.bf16.mxu0 %v1383
      %1677 = vmatpush1.bf16.msra.mxu0 %v1382
      %1678 = vmatprep.subr.bf16.mxu0 0
      %1679 = vmatpush1.bf16.msra.mxu0 0
      %1680 = vmatprep.subr.bf16.mxu0 0
      %1681 = vmatpush1.bf16.msra.mxu0 0
      %1682 = vmatprep.subr.bf16.mxu0 0
      %1683 = vmatpush1.bf16.msra.mxu0 0
      %1684 = vmatprep.subr.bf16.mxu0 0
      %1685 = vmatpush1.bf16.msra.mxu0 0
      %1686 = vmatprep.subr.bf16.mxu0 0
      %1687 = vmatpush1.bf16.msra.mxu0 0
      %1688 = vmatprep.subr.bf16.mxu0 0
      %1689 = vmatpush1.bf16.msra.mxu0 0
      %1690 = vmatprep.subr.bf16.mxu0 0
      %1691 = vmatpush1.bf16.msra.mxu0 0
      %1692 = vmatprep.subr.bf16.mxu0 0
      %1693 = vmatpush1.bf16.msra.mxu0 0
      %1694 = vmatprep.subr.bf16.mxu0 0
      %1695 = vmatpush1.bf16.msra.mxu0 0
      %1696 = vmatprep.subr.bf16.mxu0 0
      %1697 = vmatpush1.bf16.msra.mxu0 0
      %1698 = vmatprep.subr.bf16.mxu0 0
      %1699 = vmatpush1.bf16.msra.mxu0 0
      %1700 = vmatprep.subr.bf16.mxu0 0
      %1701 = vmatpush1.bf16.msra.mxu0 0
      %1702 = vmatprep.mubr.bf16.mxu0 0
      %1703 = vmatmul.mubr.bf16.gmra.mrb[0].mxu0 %v1534
      %v1704 = vpop.f32.mrb[0].mxu0
      %v1705 = vadd.f32 %v1415, %v1704
      %v1706 = vpop.f32.mrb[0].mxu0
      %v1707 = vadd.f32 %v1415, %v1706
      %v1708 = vpop.f32.mrb[0].mxu0
      %v1709 = vadd.f32 %v1420, %v1708
      %v1710 = vpop.f32.mrb[0].mxu0
      %v1711 = vadd.f32 %v1420, %v1710
      %1712 = vmatprep.mubr.bf16.mxu0 0
      %1713 = vmatmul.mubr.bf16.gmra.mrb[0].mxu0 %v1537
      %v1714 = vpop.f32.mrb[0].mxu0
      %v1715 = vadd.f32 %v1425, %v1714
      %v1716 = vpop.f32.mrb[0].mxu0
      %v1717 = vadd.f32 %v1425, %v1716
      %v1718 = vpop.f32.mrb[0].mxu0
      %v1719 = vadd.f32 %v1430, %v1718
      %v1720 = vpop.f32.mrb[0].mxu0
      %v1721 = vadd.f32 %v1430, %v1720
      %1722 = vmatprep.mubr.bf16.mxu0 0
      %1723 = vmatmul.mubr.bf16.gmra.mrb[0].mxu0 %v1540
      %v1724 = vpop.f32.mrb[0].mxu0
      %v1725 = vadd.f32 %v1435, %v1724
      %v1726 = vpop.f32.mrb[0].mxu0
      %v1727 = vadd.f32 %v1435, %v1726
      %v1728 = vpop.f32.mrb[0].mxu0
      %v1729 = vadd.f32 %v1440, %v1728
      %v1730 = vpop.f32.mrb[0].mxu0
      %v1731 = vadd.f32 %v1440, %v1730
      %1732 = vmatprep.mubr.bf16.mxu0 0
      %1733 = vmatmul.mubr.bf16.gmra.mrb[0].mxu0 %v1543
      %v1734 = vpop.f32.mrb[0].mxu0
      %v1735 = vadd.f32 %v1445, %v1734
      %v1736 = vpop.f32.mrb[0].mxu0
      %v1737 = vadd.f32 %v1445, %v1736
      %v1738 = vpop.f32.mrb[0].mxu0
      %v1739 = vadd.f32 %v1450, %v1738
      %v1740 = vpop.f32.mrb[0].mxu0
      %v1741 = vadd.f32 %v1450, %v1740
      %1742 = vmatprep.mubr.bf16.mxu0 0
      %1743 = vmatmul.mubr.bf16.gmra.mrb[0].mxu0 %v1546
      %v1744 = vpop.f32.mrb[0].mxu0
      %v1745 = vadd.f32 %v1455, %v1744
      %v1746 = vpop.f32.mrb[0].mxu0
      %v1747 = vadd.f32 %v1455, %v1746
      %v1748 = vpop.f32.mrb[0].mxu0
      %v1749 = vadd.f32 %v1460, %v1748
      %v1750 = vpop.f32.mrb[0].mxu0
      %v1751 = vadd.f32 %v1460, %v1750
      %1752 = vmatprep.mubr.bf16.mxu0 0
      %1753 = vmatmul.mubr.bf16.gmra.mrb[0].mxu0 %v1549
      %v1754 = vpop.f32.mrb[0].mxu0
      %v1755 = vadd.f32 %v1465, %v1754
      %v1756 = vpop.f32.mrb[0].mxu0
      %v1757 = vadd.f32 %v1465, %v1756
      %v1758 = vpop.f32.mrb[0].mxu0
      %v1759 = vadd.f32 %v1470, %v1758
      %v1760 = vpop.f32.mrb[0].mxu0
      %v1761 = vadd.f32 %v1470, %v1760
      %1762 = vmatprep.mubr.bf16.mxu0 0
      %1763 = vmatmul.mubr.bf16.gmra.mrb[0].mxu0 %v1552
      %v1764 = vpop.f32.mrb[0].mxu0
      %v1765 = vadd.f32 %v1475, %v1764
      %v1766 = vpop.f32.mrb[0].mxu0
      %v1767 = vadd.f32 %v1475, %v1766
      %v1768 = vpop.f32.mrb[0].mxu0
      %v1769 = vadd.f32 %v1480, %v1768
      %v1770 = vpop.f32.mrb[0].mxu0
      %v1771 = vadd.f32 %v1480, %v1770
      %1772 = vmatprep.mubr.bf16.mxu0 0
      %1773 = vmatmul.mubr.bf16.gmra.mrb[0].mxu0 %v1555
      %v1774 = vpop.f32.mrb[0].mxu0
      %v1775 = vadd.f32 %v1485, %v1774
      %v1776 = vpop.f32.mrb[0].mxu0
      %v1777 = vadd.f32 %v1485, %v1776
      %v1778 = vpop.f32.mrb[0].mxu0
      %v1779 = vadd.f32 %v1490, %v1778
      %v1780 = vpop.f32.mrb[0].mxu0
      %v1781 = vadd.f32 %v1490, %v1780
      %1782 = vdwg.mxu0
      %1783 = vmatprep.subr.bf16.mxu0 %v1337
      %1784 = vmatpush1.bf16.msra.mxu0 %v1336
      %1785 = vmatprep.subr.bf16.mxu0 %v1353
      %1786 = vmatpush1.bf16.msra.mxu0 %v1352
      %1787 = vmatprep.subr.bf16.mxu0 %v1369
      %1788 = vmatpush1.bf16.msra.mxu0 %v1368
      %1789 = vmatprep.subr.bf16.mxu0 %v1385
      %1790 = vmatpush1.bf16.msra.mxu0 %v1384
      %1791 = vmatprep.subr.bf16.mxu0 0
      %1792 = vmatpush1.bf16.msra.mxu0 0
      %1793 = vmatprep.subr.bf16.mxu0 0
      %1794 = vmatpush1.bf16.msra.mxu0 0
      %1795 = vmatprep.subr.bf16.mxu0 0
      %1796 = vmatpush1.bf16.msra.mxu0 0
      %1797 = vmatprep.subr.bf16.mxu0 0
      %1798 = vmatpush1.bf16.msra.mxu0 0
      %1799 = vmatprep.subr.bf16.mxu0 0
      %1800 = vmatpush1.bf16.msra.mxu0 0
      %1801 = vmatprep.subr.bf16.mxu0 0
      %1802 = vmatpush1.bf16.msra.mxu0 0
      %1803 = vmatprep.subr.bf16.mxu0 0
      %1804 = vmatpush1.bf16.msra.mxu0 0
      %1805 = vmatprep.subr.bf16.mxu0 0
      %1806 = vmatpush1.bf16.msra.mxu0 0
      %1807 = vmatprep.subr.bf16.mxu0 0
      %1808 = vmatpush1.bf16.msra.mxu0 0
      %1809 = vmatprep.subr.bf16.mxu0 0
      %1810 = vmatpush1.bf16.msra.mxu0 0
      %1811 = vmatprep.subr.bf16.mxu0 0
      %1812 = vmatpush1.bf16.msra.mxu0 0
      %1813 = vmatprep.subr.bf16.mxu0 0
      %1814 = vmatpush1.bf16.msra.mxu0 0
      %1815 = vmatprep.mubr.bf16.mxu0 0
      %1816 = vmatmul.mubr.bf16.gmra.mrb[0].mxu0 %v1534
      %v1817 = vpop.f32.mrb[0].mxu0
      %v1818 = vadd.f32 %v1415, %v1817
      %v1819 = vpop.f32.mrb[0].mxu0
      %v1820 = vadd.f32 %v1415, %v1819
      %v1821 = vpop.f32.mrb[0].mxu0
      %v1822 = vadd.f32 %v1420, %v1821
      %v1823 = vpop.f32.mrb[0].mxu0
      %v1824 = vadd.f32 %v1420, %v1823
      %1825 = vmatprep.mubr.bf16.mxu0 0
      %1826 = vmatmul.mubr.bf16.gmra.mrb[0].mxu0 %v1537
      %v1827 = vpop.f32.mrb[0].mxu0
      %v1828 = vadd.f32 %v1425, %v1827
      %v1829 = vpop.f32.mrb[0].mxu0
      %v1830 = vadd.f32 %v1425, %v1829
      %v1831 = vpop.f32.mrb[0].mxu0
      %v1832 = vadd.f32 %v1430, %v1831
      %v1833 = vpop.f32.mrb[0].mxu0
      %v1834 = vadd.f32 %v1430, %v1833
      %1835 = vmatprep.mubr.bf16.mxu0 0
      %1836 = vmatmul.mubr.bf16.gmra.mrb[0].mxu0 %v1540
      %v1837 = vpop.f32.mrb[0].mxu0
      %v1838 = vadd.f32 %v1435, %v1837
      %v1839 = vpop.f32.mrb[0].mxu0
      %v1840 = vadd.f32 %v1435, %v1839
      %v1841 = vpop.f32.mrb[0].mxu0
      %v1842 = vadd.f32 %v1440, %v1841
      %v1843 = vpop.f32.mrb[0].mxu0
      %v1844 = vadd.f32 %v1440, %v1843
      %1845 = vmatprep.mubr.bf16.mxu0 0
      %1846 = vmatmul.mubr.bf16.gmra.mrb[0].mxu0 %v1543
      %v1847 = vpop.f32.mrb[0].mxu0
      %v1848 = vadd.f32 %v1445, %v1847
      %v1849 = vpop.f32.mrb[0].mxu0
      %v1850 = vadd.f32 %v1445, %v1849
      %v1851 = vpop.f32.mrb[0].mxu0
      %v1852 = vadd.f32 %v1450, %v1851
      %v1853 = vpop.f32.mrb[0].mxu0
      %v1854 = vadd.f32 %v1450, %v1853
      %1855 = vmatprep.mubr.bf16.mxu0 0
      %1856 = vmatmul.mubr.bf16.gmra.mrb[0].mxu0 %v1546
      %v1857 = vpop.f32.mrb[0].mxu0
      %v1858 = vadd.f32 %v1455, %v1857
      %v1859 = vpop.f32.mrb[0].mxu0
      %v1860 = vadd.f32 %v1455, %v1859
      %v1861 = vpop.f32.mrb[0].mxu0
      %v1862 = vadd.f32 %v1460, %v1861
      %v1863 = vpop.f32.mrb[0].mxu0
      %v1864 = vadd.f32 %v1460, %v1863
      %1865 = vmatprep.mubr.bf16.mxu0 0
      %1866 = vmatmul.mubr.bf16.gmra.mrb[0].mxu0 %v1549
      %v1867 = vpop.f32.mrb[0].mxu0
      %v1868 = vadd.f32 %v1465, %v1867
      %v1869 = vpop.f32.mrb[0].mxu0
      %v1870 = vadd.f32 %v1465, %v1869
      %v1871 = vpop.f32.mrb[0].mxu0
      %v1872 = vadd.f32 %v1470, %v1871
      %v1873 = vpop.f32.mrb[0].mxu0
      %v1874 = vadd.f32 %v1470, %v1873
      %1875 = vmatprep.mubr.bf16.mxu0 0
      %1876 = vmatmul.mubr.bf16.gmra.mrb[0].mxu0 %v1552
      %v1877 = vpop.f32.mrb[0].mxu0
      %v1878 = vadd.f32 %v1475, %v1877
      %v1879 = vpop.f32.mrb[0].mxu0
      %v1880 = vadd.f32 %v1475, %v1879
      %v1881 = vpop.f32.mrb[0].mxu0
      %v1882 = vadd.f32 %v1480, %v1881
      %v1883 = vpop.f32.mrb[0].mxu0
      %v1884 = vadd.f32 %v1480, %v1883
      %1885 = vmatprep.mubr.bf16.mxu0 0
      %1886 = vmatmul.mubr.bf16.gmra.mrb[0].mxu0 %v1555
      %v1887 = vpop.f32.mrb[0].mxu0
      %v1888 = vadd.f32 %v1485, %v1887
      %v1889 = vpop.f32.mrb[0].mxu0
      %v1890 = vadd.f32 %v1485, %v1889
      %v1891 = vpop.f32.mrb[0].mxu0
      %v1892 = vadd.f32 %v1490, %v1891
      %v1893 = vpop.f32.mrb[0].mxu0
      %v1894 = vadd.f32 %v1490, %v1893
      %1895 = vdwg.mxu0
      %1896 = vmatprep.subr.bf16.mxu0 %v1339
      %1897 = vmatpush1.bf16.msra.mxu0 %v1338
      %1898 = vmatprep.subr.bf16.mxu0 %v1355
      %1899 = vmatpush1.bf16.msra.mxu0 %v1354
      %1900 = vmatprep.subr.bf16.mxu0 %v1371
      %1901 = vmatpush1.bf16.msra.mxu0 %v1370
      %1902 = vmatprep.subr.bf16.mxu0 %v1387
      %1903 = vmatpush1.bf16.msra.mxu0 %v1386
      %1904 = vmatprep.subr.bf16.mxu0 0
      %1905 = vmatpush1.bf16.msra.mxu0 0
      %1906 = vmatprep.subr.bf16.mxu0 0
      %1907 = vmatpush1.bf16.msra.mxu0 0
      %1908 = vmatprep.subr.bf16.mxu0 0
      %1909 = vmatpush1.bf16.msra.mxu0 0
      %1910 = vmatprep.subr.bf16.mxu0 0
      %1911 = vmatpush1.bf16.msra.mxu0 0
      %1912 = vmatprep.subr.bf16.mxu0 0
      %1913 = vmatpush1.bf16.msra.mxu0 0
      %1914 = vmatprep.subr.bf16.mxu0 0
      %1915 = vmatpush1.bf16.msra.mxu0 0
      %1916 = vmatprep.subr.bf16.mxu0 0
      %1917 = vmatpush1.bf16.msra.mxu0 0
      %1918 = vmatprep.subr.bf16.mxu0 0
      %1919 = vmatpush1.bf16.msra.mxu0 0
      %1920 = vmatprep.subr.bf16.mxu0 0
      %1921 = vmatpush1.bf16.msra.mxu0 0
      %1922 = vmatprep.subr.bf16.mxu0 0
      %1923 = vmatpush1.bf16.msra.mxu0 0
      %1924 = vmatprep.subr.bf16.mxu0 0
      %1925 = vmatpush1.bf16.msra.mxu0 0
      %1926 = vmatprep.subr.bf16.mxu0 0
      %1927 = vmatpush1.bf16.msra.mxu0 0
      %1928 = vmatprep.mubr.bf16.mxu0 0
      %1929 = vmatmul.mubr.bf16.gmra.mrb[0].mxu0 %v1534
      %v1930 = vpop.f32.mrb[0].mxu0
      %v1931 = vadd.f32 %v1415, %v1930
      %v1932 = vpop.f32.mrb[0].mxu0
      %v1933 = vadd.f32 %v1415, %v1932
      %v1934 = vpop.f32.mrb[0].mxu0
      %v1935 = vadd.f32 %v1420, %v1934
      %v1936 = vpop.f32.mrb[0].mxu0
      %v1937 = vadd.f32 %v1420, %v1936
      %1938 = vmatprep.mubr.bf16.mxu0 0
      %1939 = vmatmul.mubr.bf16.gmra.mrb[0].mxu0 %v1537
      %v1940 = vpop.f32.mrb[0].mxu0
      %v1941 = vadd.f32 %v1425, %v1940
      %v1942 = vpop.f32.mrb[0].mxu0
      %v1943 = vadd.f32 %v1425, %v1942
      %v1944 = vpop.f32.mrb[0].mxu0
      %v1945 = vadd.f32 %v1430, %v1944
      %v1946 = vpop.f32.mrb[0].mxu0
      %v1947 = vadd.f32 %v1430, %v1946
      %1948 = vmatprep.mubr.bf16.mxu0 0
      %1949 = vmatmul.mubr.bf16.gmra.mrb[0].mxu0 %v1540
      %v1950 = vpop.f32.mrb[0].mxu0
      %v1951 = vadd.f32 %v1435, %v1950
      %v1952 = vpop.f32.mrb[0].mxu0
      %v1953 = vadd.f32 %v1435, %v1952
      %v1954 = vpop.f32.mrb[0].mxu0
      %v1955 = vadd.f32 %v1440, %v1954
      %v1956 = vpop.f32.mrb[0].mxu0
      %v1957 = vadd.f32 %v1440, %v1956
      %1958 = vmatprep.mubr.bf16.mxu0 0
      %1959 = vmatmul.mubr.bf16.gmra.mrb[0].mxu0 %v1543
      %v1960 = vpop.f32.mrb[0].mxu0
      %v1961 = vadd.f32 %v1445, %v1960
      %v1962 = vpop.f32.mrb[0].mxu0
      %v1963 = vadd.f32 %v1445, %v1962
      %v1964 = vpop.f32.mrb[0].mxu0
      %v1965 = vadd.f32 %v1450, %v1964
      %v1966 = vpop.f32.mrb[0].mxu0
      %v1967 = vadd.f32 %v1450, %v1966
      %1968 = vmatprep.mubr.bf16.mxu0 0
      %1969 = vmatmul.mubr.bf16.gmra.mrb[0].mxu0 %v1546
      %v1970 = vpop.f32.mrb[0].mxu0
      %v1971 = vadd.f32 %v1455, %v1970
      %v1972 = vpop.f32.mrb[0].mxu0
      %v1973 = vadd.f32 %v1455, %v1972
      %v1974 = vpop.f32.mrb[0].mxu0
      %v1975 = vadd.f32 %v1460, %v1974
      %v1976 = vpop.f32.mrb[0].mxu0
      %v1977 = vadd.f32 %v1460, %v1976
      %1978 = vmatprep.mubr.bf16.mxu0 0
      %1979 = vmatmul.mubr.bf16.gmra.mrb[0].mxu0 %v1549
      %v1980 = vpop.f32.mrb[0].mxu0
      %v1981 = vadd.f32 %v1465, %v1980
      %v1982 = vpop.f32.mrb[0].mxu0
      %v1983 = vadd.f32 %v1465, %v1982
      %v1984 = vpop.f32.mrb[0].mxu0
      %v1985 = vadd.f32 %v1470, %v1984
      %v1986 = vpop.f32.mrb[0].mxu0
      %v1987 = vadd.f32 %v1470, %v1986
      %1988 = vmatprep.mubr.bf16.mxu0 0
      %1989 = vmatmul.mubr.bf16.gmra.mrb[0].mxu0 %v1552
      %v1990 = vpop.f32.mrb[0].mxu0
      %v1991 = vadd.f32 %v1475, %v1990
      %v1992 = vpop.f32.mrb[0].mxu0
      %v1993 = vadd.f32 %v1475, %v1992
      %v1994 = vpop.f32.mrb[0].mxu0
      %v1995 = vadd.f32 %v1480, %v1994
      %v1996 = vpop.f32.mrb[0].mxu0
      %v1997 = vadd.f32 %v1480, %v1996
      %1998 = vmatprep.mubr.bf16.mxu0 0
      %1999 = vmatmul.mubr.bf16.gmra.mrb[0].mxu0 %v1555
      %v2000 = vpop.f32.mrb[0].mxu0
      %v2001 = vadd.f32 %v1485, %v2000
      %v2002 = vpop.f32.mrb[0].mxu0
      %v2003 = vadd.f32 %v1485, %v2002
      %v2004 = vpop.f32.mrb[0].mxu0
      %v2005 = vadd.f32 %v1490, %v2004
      %v2006 = vpop.f32.mrb[0].mxu0
      %v2007 = vadd.f32 %v1490, %v2006
      %2008 = vdwg.mxu0
      %2009 = vmatprep.subr.bf16.mxu0 %v1341
      %2010 = vmatpush1.bf16.msra.mxu0 %v1340
      %2011 = vmatprep.subr.bf16.mxu0 %v1357
      %2012 = vmatpush1.bf16.msra.mxu0 %v1356
      %2013 = vmatprep.subr.bf16.mxu0 %v1373
      %2014 = vmatpush1.bf16.msra.mxu0 %v1372
      %2015 = vmatprep.subr.bf16.mxu0 %v1389
      %2016 = vmatpush1.bf16.msra.mxu0 %v1388
      %2017 = vmatprep.subr.bf16.mxu0 0
      %2018 = vmatpush1.bf16.msra.mxu0 0
      %2019 = vmatprep.subr.bf16.mxu0 0
      %2020 = vmatpush1.bf16.msra.mxu0 0
      %2021 = vmatprep.subr.bf16.mxu0 0
      %2022 = vmatpush1.bf16.msra.mxu0 0
      %2023 = vmatprep.subr.bf16.mxu0 0
      %2024 = vmatpush1.bf16.msra.mxu0 0
      %2025 = vmatprep.subr.bf16.mxu0 0
      %2026 = vmatpush1.bf16.msra.mxu0 0
      %2027 = vmatprep.subr.bf16.mxu0 0
      %2028 = vmatpush1.bf16.msra.mxu0 0
      %2029 = vmatprep.subr.bf16.mxu0 0
      %2030 = vmatpush1.bf16.msra.mxu0 0
      %2031 = vmatprep.subr.bf16.mxu0 0
      %2032 = vmatpush1.bf16.msra.mxu0 0
      %2033 = vmatprep.subr.bf16.mxu0 0
      %2034 = vmatpush1.bf16.msra.mxu0 0
      %2035 = vmatprep.subr.bf16.mxu0 0
      %2036 = vmatpush1.bf16.msra.mxu0 0
      %2037 = vmatprep.subr.bf16.mxu0 0
      %2038 = vmatpush1.bf16.msra.mxu0 0
      %2039 = vmatprep.subr.bf16.mxu0 0
      %2040 = vmatpush1.bf16.msra.mxu0 0
      %2041 = vmatprep.mubr.bf16.mxu0 0
      %2042 = vmatmul.mubr.bf16.gmra.mrb[0].mxu0 %v1534
      %v2043 = vpop.f32.mrb[0].mxu0
      %v2044 = vadd.f32 %v1415, %v2043
      %v2045 = vpop.f32.mrb[0].mxu0
      %v2046 = vadd.f32 %v1415, %v2045
      %v2047 = vpop.f32.mrb[0].mxu0
      %v2048 = vadd.f32 %v1420, %v2047
      %v2049 = vpop.f32.mrb[0].mxu0
      %v2050 = vadd.f32 %v1420, %v2049
      %2051 = vmatprep.mubr.bf16.mxu0 0
      %2052 = vmatmul.mubr.bf16.gmra.mrb[0].mxu0 %v1537
      %v2053 = vpop.f32.mrb[0].mxu0
      %v2054 = vadd.f32 %v1425, %v2053
      %v2055 = vpop.f32.mrb[0].mxu0
      %v2056 = vadd.f32 %v1425, %v2055
      %v2057 = vpop.f32.mrb[0].mxu0
      %v2058 = vadd.f32 %v1430, %v2057
      %v2059 = vpop.f32.mrb[0].mxu0
      %v2060 = vadd.f32 %v1430, %v2059
      %2061 = vmatprep.mubr.bf16.mxu0 0
      %2062 = vmatmul.mubr.bf16.gmra.mrb[0].mxu0 %v1540
      %v2063 = vpop.f32.mrb[0].mxu0
      %v2064 = vadd.f32 %v1435, %v2063
      %v2065 = vpop.f32.mrb[0].mxu0
      %v2066 = vadd.f32 %v1435, %v2065
      %v2067 = vpop.f32.mrb[0].mxu0
      %v2068 = vadd.f32 %v1440, %v2067
      %v2069 = vpop.f32.mrb[0].mxu0
      %v2070 = vadd.f32 %v1440, %v2069
      %2071 = vmatprep.mubr.bf16.mxu0 0
      %2072 = vmatmul.mubr.bf16.gmra.mrb[0].mxu0 %v1543
      %v2073 = vpop.f32.mrb[0].mxu0
      %v2074 = vadd.f32 %v1445, %v2073
      %v2075 = vpop.f32.mrb[0].mxu0
      %v2076 = vadd.f32 %v1445, %v2075
      %v2077 = vpop.f32.mrb[0].mxu0
      %v2078 = vadd.f32 %v1450, %v2077
      %v2079 = vpop.f32.mrb[0].mxu0
      %v2080 = vadd.f32 %v1450, %v2079
      %2081 = vmatprep.mubr.bf16.mxu0 0
      %2082 = vmatmul.mubr.bf16.gmra.mrb[0].mxu0 %v1546
      %v2083 = vpop.f32.mrb[0].mxu0
      %v2084 = vadd.f32 %v1455, %v2083
      %v2085 = vpop.f32.mrb[0].mxu0
      %v2086 = vadd.f32 %v1455, %v2085
      %v2087 = vpop.f32.mrb[0].mxu0
      %v2088 = vadd.f32 %v1460, %v2087
      %v2089 = vpop.f32.mrb[0].mxu0
      %v2090 = vadd.f32 %v1460, %v2089
      %2091 = vmatprep.mubr.bf16.mxu0 0
      %2092 = vmatmul.mubr.bf16.gmra.mrb[0].mxu0 %v1549
      %v2093 = vpop.f32.mrb[0].mxu0
      %v2094 = vadd.f32 %v1465, %v2093
      %v2095 = vpop.f32.mrb[0].mxu0
      %v2096 = vadd.f32 %v1465, %v2095
      %v2097 = vpop.f32.mrb[0].mxu0
      %v2098 = vadd.f32 %v1470, %v2097
      %v2099 = vpop.f32.mrb[0].mxu0
      %v2100 = vadd.f32 %v1470, %v2099
      %2101 = vmatprep.mubr.bf16.mxu0 0
      %2102 = vmatmul.mubr.bf16.gmra.mrb[0].mxu0 %v1552
      %v2103 = vpop.f32.mrb[0].mxu0
      %v2104 = vadd.f32 %v1475, %v2103
      %v2105 = vpop.f32.mrb[0].mxu0
      %v2106 = vadd.f32 %v1475, %v2105
      %v2107 = vpop.f32.mrb[0].mxu0
      %v2108 = vadd.f32 %v1480, %v2107
      %v2109 = vpop.f32.mrb[0].mxu0
      %v2110 = vadd.f32 %v1480, %v2109
      %2111 = vmatprep.mubr.bf16.mxu0 0
      %2112 = vmatmul.mubr.bf16.gmra.mrb[0].mxu0 %v1555
      %v2113 = vpop.f32.mrb[0].mxu0
      %v2114 = vadd.f32 %v1485, %v2113
      %v2115 = vpop.f32.mrb[0].mxu0
      %v2116 = vadd.f32 %v1485, %v2115
      %v2117 = vpop.f32.mrb[0].mxu0
      %v2118 = vadd.f32 %v1490, %v2117
      %v2119 = vpop.f32.mrb[0].mxu0
      %v2120 = vadd.f32 %v1490, %v2119
      %2121 = vdwg.mxu0
      %2122 = vmatprep.subr.bf16.mxu0 %v1343
      %2123 = vmatpush1.bf16.msra.mxu0 %v1342
      %2124 = vmatprep.subr.bf16.mxu0 %v1359
      %2125 = vmatpush1.bf16.msra.mxu0 %v1358
      %2126 = vmatprep.subr.bf16.mxu0 %v1375
      %2127 = vmatpush1.bf16.msra.mxu0 %v1374
      %2128 = vmatprep.subr.bf16.mxu0 %v1391
      %2129 = vmatpush1.bf16.msra.mxu0 %v1390
      %2130 = vmatprep.subr.bf16.mxu0 0
      %2131 = vmatpush1.bf16.msra.mxu0 0
      %2132 = vmatprep.subr.bf16.mxu0 0
      %2133 = vmatpush1.bf16.msra.mxu0 0
      %2134 = vmatprep.subr.bf16.mxu0 0
      %2135 = vmatpush1.bf16.msra.mxu0 0
      %2136 = vmatprep.subr.bf16.mxu0 0
      %2137 = vmatpush1.bf16.msra.mxu0 0
      %2138 = vmatprep.subr.bf16.mxu0 0
      %2139 = vmatpush1.bf16.msra.mxu0 0
      %2140 = vmatprep.subr.bf16.mxu0 0
      %2141 = vmatpush1.bf16.msra.mxu0 0
      %2142 = vmatprep.subr.bf16.mxu0 0
      %2143 = vmatpush1.bf16.msra.mxu0 0
      %2144 = vmatprep.subr.bf16.mxu0 0
      %2145 = vmatpush1.bf16.msra.mxu0 0
      %2146 = vmatprep.subr.bf16.mxu0 0
      %2147 = vmatpush1.bf16.msra.mxu0 0
      %2148 = vmatprep.subr.bf16.mxu0 0
      %2149 = vmatpush1.bf16.msra.mxu0 0
      %2150 = vmatprep.subr.bf16.mxu0 0
      %2151 = vmatpush1.bf16.msra.mxu0 0
      %2152 = vmatprep.subr.bf16.mxu0 0
      %2153 = vmatpush1.bf16.msra.mxu0 0
      %2154 = vmatprep.mubr.bf16.mxu0 0
      %2155 = vmatmul.mubr.bf16.gmra.mrb[0].mxu0 %v1534
      %v2156 = vpop.f32.mrb[0].mxu0
      %v2157 = vadd.f32 %v1415, %v2156
      %v2158 = vpop.f32.mrb[0].mxu0
      %v2159 = vadd.f32 %v1415, %v2158
      %v2160 = vpop.f32.mrb[0].mxu0
      %v2161 = vadd.f32 %v1420, %v2160
      %v2162 = vpop.f32.mrb[0].mxu0
      %v2163 = vadd.f32 %v1420, %v2162
      %2164 = vmatprep.mubr.bf16.mxu0 0
      %2165 = vmatmul.mubr.bf16.gmra.mrb[0].mxu0 %v1537
      %v2166 = vpop.f32.mrb[0].mxu0
      %v2167 = vadd.f32 %v1425, %v2166
      %v2168 = vpop.f32.mrb[0].mxu0
      %v2169 = vadd.f32 %v1425, %v2168
      %v2170 = vpop.f32.mrb[0].mxu0
      %v2171 = vadd.f32 %v1430, %v2170
      %v2172 = vpop.f32.mrb[0].mxu0
      %v2173 = vadd.f32 %v1430, %v2172
      %2174 = vmatprep.mubr.bf16.mxu0 0
      %2175 = vmatmul.mubr.bf16.gmra.mrb[0].mxu0 %v1540
      %v2176 = vpop.f32.mrb[0].mxu0
      %v2177 = vadd.f32 %v1435, %v2176
      %v2178 = vpop.f32.mrb[0].mxu0
      %v2179 = vadd.f32 %v1435, %v2178
      %v2180 = vpop.f32.mrb[0].mxu0
      %v2181 = vadd.f32 %v1440, %v2180
      %v2182 = vpop.f32.mrb[0].mxu0
      %v2183 = vadd.f32 %v1440, %v2182
      %2184 = vmatprep.mubr.bf16.mxu0 0
      %2185 = vmatmul.mubr.bf16.gmra.mrb[0].mxu0 %v1543
      %v2186 = vpop.f32.mrb[0].mxu0
      %v2187 = vadd.f32 %v1445, %v2186
      %v2188 = vpop.f32.mrb[0].mxu0
      %v2189 = vadd.f32 %v1445, %v2188
      %v2190 = vpop.f32.mrb[0].mxu0
      %v2191 = vadd.f32 %v1450, %v2190
      %v2192 = vpop.f32.mrb[0].mxu0
      %v2193 = vadd.f32 %v1450, %v2192
      %2194 = vmatprep.mubr.bf16.mxu0 0
      %2195 = vmatmul.mubr.bf16.gmra.mrb[0].mxu0 %v1546
      %v2196 = vpop.f32.mrb[0].mxu0
      %v2197 = vadd.f32 %v1455, %v2196
      %v2198 = vpop.f32.mrb[0].mxu0
      %v2199 = vadd.f32 %v1455, %v2198
      %v2200 = vpop.f32.mrb[0].mxu0
      %v2201 = vadd.f32 %v1460, %v2200
      %v2202 = vpop.f32.mrb[0].mxu0
      %v2203 = vadd.f32 %v1460, %v2202
      %2204 = vmatprep.mubr.bf16.mxu0 0
      %2205 = vmatmul.mubr.bf16.gmra.mrb[0].mxu0 %v1549
      %v2206 = vpop.f32.mrb[0].mxu0
      %v2207 = vadd.f32 %v1465, %v2206
      %v2208 = vpop.f32.mrb[0].mxu0
      %v2209 = vadd.f32 %v1465, %v2208
      %v2210 = vpop.f32.mrb[0].mxu0
      %v2211 = vadd.f32 %v1470, %v2210
      %v2212 = vpop.f32.mrb[0].mxu0
      %v2213 = vadd.f32 %v1470, %v2212
      %2214 = vmatprep.mubr.bf16.mxu0 0
      %2215 = vmatmul.mubr.bf16.gmra.mrb[0].mxu0 %v1552
      %v2216 = vpop.f32.mrb[0].mxu0
      %v2217 = vadd.f32 %v1475, %v2216
      %v2218 = vpop.f32.mrb[0].mxu0
      %v2219 = vadd.f32 %v1475, %v2218
      %v2220 = vpop.f32.mrb[0].mxu0
      %v2221 = vadd.f32 %v1480, %v2220
      %v2222 = vpop.f32.mrb[0].mxu0
      %v2223 = vadd.f32 %v1480, %v2222
      %2224 = vmatprep.mubr.bf16.mxu0 0
      %2225 = vmatmul.mubr.bf16.gmra.mrb[0].mxu0 %v1555
      %v2226 = vpop.f32.mrb[0].mxu0
      %v2227 = vadd.f32 %v1485, %v2226
      %v2228 = vpop.f32.mrb[0].mxu0
      %v2229 = vadd.f32 %v1485, %v2228
      %v2230 = vpop.f32.mrb[0].mxu0
      %v2231 = vadd.f32 %v1490, %v2230
      %v2232 = vpop.f32.mrb[0].mxu0
      %v2233 = vadd.f32 %v1490, %v2232
      %2234 = vdwg.mxu0
      %2235 = vmatprep.subr.bf16.mxu0 %v1345
      %2236 = vmatpush1.bf16.msra.mxu0 %v1344
      %2237 = vmatprep.subr.bf16.mxu0 %v1361
      %2238 = vmatpush1.bf16.msra.mxu0 %v1360
      %2239 = vmatprep.subr.bf16.mxu0 %v1377
      %2240 = vmatpush1.bf16.msra.mxu0 %v1376
      %2241 = vmatprep.subr.bf16.mxu0 %v1393
      %2242 = vmatpush1.bf16.msra.mxu0 %v1392
      %2243 = vmatprep.subr.bf16.mxu0 0
      %2244 = vmatpush1.bf16.msra.mxu0 0
      %2245 = vmatprep.subr.bf16.mxu0 0
      %2246 = vmatpush1.bf16.msra.mxu0 0
      %2247 = vmatprep.subr.bf16.mxu0 0
      %2248 = vmatpush1.bf16.msra.mxu0 0
      %2249 = vmatprep.subr.bf16.mxu0 0
      %2250 = vmatpush1.bf16.msra.mxu0 0
      %2251 = vmatprep.subr.bf16.mxu0 0
      %2252 = vmatpush1.bf16.msra.mxu0 0
      %2253 = vmatprep.subr.bf16.mxu0 0
      %2254 = vmatpush1.bf16.msra.mxu0 0
      %2255 = vmatprep.subr.bf16.mxu0 0
      %2256 = vmatpush1.bf16.msra.mxu0 0
      %2257 = vmatprep.subr.bf16.mxu0 0
      %2258 = vmatpush1.bf16.msra.mxu0 0
      %2259 = vmatprep.subr.bf16.mxu0 0
      %2260 = vmatpush1.bf16.msra.mxu0 0
      %2261 = vmatprep.subr.bf16.mxu0 0
      %2262 = vmatpush1.bf16.msra.mxu0 0
      %2263 = vmatprep.subr.bf16.mxu0 0
      %2264 = vmatpush1.bf16.msra.mxu0 0
      %2265 = vmatprep.subr.bf16.mxu0 0
      %2266 = vmatpush1.bf16.msra.mxu0 0
      %2267 = vmatprep.mubr.bf16.mxu0 0
      %2268 = vmatmul.mubr.bf16.gmra.mrb[0].mxu0 %v1534
      %v2269 = vpop.f32.mrb[0].mxu0
      %v2270 = vadd.f32 %v1415, %v2269
      %v2271 = vpop.f32.mrb[0].mxu0
      %v2272 = vadd.f32 %v1415, %v2271
      %v2273 = vpop.f32.mrb[0].mxu0
      %v2274 = vadd.f32 %v1420, %v2273
      %v2275 = vpop.f32.mrb[0].mxu0
      %v2276 = vadd.f32 %v1420, %v2275
      %2277 = vmatprep.mubr.bf16.mxu0 0
      %2278 = vmatmul.mubr.bf16.gmra.mrb[0].mxu0 %v1537
      %v2279 = vpop.f32.mrb[0].mxu0
      %v2280 = vadd.f32 %v1425, %v2279
      %v2281 = vpop.f32.mrb[0].mxu0
      %v2282 = vadd.f32 %v1425, %v2281
      %v2283 = vpop.f32.mrb[0].mxu0
      %v2284 = vadd.f32 %v1430, %v2283
      %v2285 = vpop.f32.mrb[0].mxu0
      %v2286 = vadd.f32 %v1430, %v2285
      %2287 = vmatprep.mubr.bf16.mxu0 0
      %2288 = vmatmul.mubr.bf16.gmra.mrb[0].mxu0 %v1540
      %v2289 = vpop.f32.mrb[0].mxu0
      %v2290 = vadd.f32 %v1435, %v2289
      %v2291 = vpop.f32.mrb[0].mxu0
      %v2292 = vadd.f32 %v1435, %v2291
      %v2293 = vpop.f32.mrb[0].mxu0
      %v2294 = vadd.f32 %v1440, %v2293
      %v2295 = vpop.f32.mrb[0].mxu0
      %v2296 = vadd.f32 %v1440, %v2295
      %2297 = vmatprep.mubr.bf16.mxu0 0
      %2298 = vmatmul.mubr.bf16.gmra.mrb[0].mxu0 %v1543
      %v2299 = vpop.f32.mrb[0].mxu0
      %v2300 = vadd.f32 %v1445, %v2299
      %v2301 = vpop.f32.mrb[0].mxu0
      %v2302 = vadd.f32 %v1445, %v2301
      %v2303 = vpop.f32.mrb[0].mxu0
      %v2304 = vadd.f32 %v1450, %v2303
      %v2305 = vpop.f32.mrb[0].mxu0
      %v2306 = vadd.f32 %v1450, %v2305
      %2307 = vmatprep.mubr.bf16.mxu0 0
      %2308 = vmatmul.mubr.bf16.gmra.mrb[0].mxu0 %v1546
      %v2309 = vpop.f32.mrb[0].mxu0
      %v2310 = vadd.f32 %v1455, %v2309
      %v2311 = vpop.f32.mrb[0].mxu0
      %v2312 = vadd.f32 %v1455, %v2311
      %v2313 = vpop.f32.mrb[0].mxu0
      %v2314 = vadd.f32 %v1460, %v2313
      %v2315 = vpop.f32.mrb[0].mxu0
      %v2316 = vadd.f32 %v1460, %v2315
      %2317 = vmatprep.mubr.bf16.mxu0 0
      %2318 = vmatmul.mubr.bf16.gmra.mrb[0].mxu0 %v1549
      %v2319 = vpop.f32.mrb[0].mxu0
      %v2320 = vadd.f32 %v1465, %v2319
      %v2321 = vpop.f32.mrb[0].mxu0
      %v2322 = vadd.f32 %v1465, %v2321
      %v2323 = vpop.f32.mrb[0].mxu0
      %v2324 = vadd.f32 %v1470, %v2323
      %v2325 = vpop.f32.mrb[0].mxu0
      %v2326 = vadd.f32 %v1470, %v2325
      %2327 = vmatprep.mubr.bf16.mxu0 0
      %2328 = vmatmul.mubr.bf16.gmra.mrb[0].mxu0 %v1552
      %v2329 = vpop.f32.mrb[0].mxu0
      %v2330 = vadd.f32 %v1475, %v2329
      %v2331 = vpop.f32.mrb[0].mxu0
      %v2332 = vadd.f32 %v1475, %v2331
      %v2333 = vpop.f32.mrb[0].mxu0
      %v2334 = vadd.f32 %v1480, %v2333
      %v2335 = vpop.f32.mrb[0].mxu0
      %v2336 = vadd.f32 %v1480, %v2335
      %2337 = vmatprep.mubr.bf16.mxu0 0
      %2338 = vmatmul.mubr.bf16.gmra.mrb[0].mxu0 %v1555
      %v2339 = vpop.f32.mrb[0].mxu0
      %v2340 = vadd.f32 %v1485, %v2339
      %v2341 = vpop.f32.mrb[0].mxu0
      %v2342 = vadd.f32 %v1485, %v2341
      %v2343 = vpop.f32.mrb[0].mxu0
      %v2344 = vadd.f32 %v1490, %v2343
      %v2345 = vpop.f32.mrb[0].mxu0
      %v2346 = vadd.f32 %v1490, %v2345
      %2347 = vdwg.mxu0
      %2348 = vmatprep.subr.bf16.mxu0 %v1347
      %2349 = vmatpush1.bf16.msra.mxu0 %v1346
      %2350 = vmatprep.subr.bf16.mxu0 %v1363
      %2351 = vmatpush1.bf16.msra.mxu0 %v1362
      %2352 = vmatprep.subr.bf16.mxu0 %v1379
      %2353 = vmatpush1.bf16.msra.mxu0 %v1378
      %2354 = vmatprep.subr.bf16.mxu0 %v1395
      %2355 = vmatpush1.bf16.msra.mxu0 %v1394
      %2356 = vmatprep.subr.bf16.mxu0 0
      %2357 = vmatpush1.bf16.msra.mxu0 0
      %2358 = vmatprep.subr.bf16.mxu0 0
      %2359 = vmatpush1.bf16.msra.mxu0 0
      %2360 = vmatprep.subr.bf16.mxu0 0
      %2361 = vmatpush1.bf16.msra.mxu0 0
      %2362 = vmatprep.subr.bf16.mxu0 0
      %2363 = vmatpush1.bf16.msra.mxu0 0
      %2364 = vmatprep.subr.bf16.mxu0 0
      %2365 = vmatpush1.bf16.msra.mxu0 0
      %2366 = vmatprep.subr.bf16.mxu0 0
      %2367 = vmatpush1.bf16.msra.mxu0 0
      %2368 = vmatprep.subr.bf16.mxu0 0
      %2369 = vmatpush1.bf16.msra.mxu0 0
      %2370 = vmatprep.subr.bf16.mxu0 0
      %2371 = vmatpush1.bf16.msra.mxu0 0
      %2372 = vmatprep.subr.bf16.mxu0 0
      %2373 = vmatpush1.bf16.msra.mxu0 0
      %2374 = vmatprep.subr.bf16.mxu0 0
      %2375 = vmatpush1.bf16.msra.mxu0 0
      %2376 = vmatprep.subr.bf16.mxu0 0
      %2377 = vmatpush1.bf16.msra.mxu0 0
      %2378 = vmatprep.subr.bf16.mxu0 0
      %2379 = vmatpush1.bf16.msra.mxu0 0
      %2380 = vmatprep.mubr.bf16.mxu0 0
      %2381 = vmatmul.mubr.bf16.gmra.mrb[0].mxu0 %v1534
      %v2382 = vpop.f32.mrb[0].mxu0
      %v2383 = vadd.f32 %v1415, %v2382
      %v2384 = vpop.f32.mrb[0].mxu0
      %v2385 = vadd.f32 %v1415, %v2384
      %v2386 = vpop.f32.mrb[0].mxu0
      %v2387 = vadd.f32 %v1420, %v2386
      %v2388 = vpop.f32.mrb[0].mxu0
      %v2389 = vadd.f32 %v1420, %v2388
      %2390 = vmatprep.mubr.bf16.mxu0 0
      %2391 = vmatmul.mubr.bf16.gmra.mrb[0].mxu0 %v1537
      %v2392 = vpop.f32.mrb[0].mxu0
      %v2393 = vadd.f32 %v1425, %v2392
      %v2394 = vpop.f32.mrb[0].mxu0
      %v2395 = vadd.f32 %v1425, %v2394
      %v2396 = vpop.f32.mrb[0].mxu0
      %v2397 = vadd.f32 %v1430, %v2396
      %v2398 = vpop.f32.mrb[0].mxu0
      %v2399 = vadd.f32 %v1430, %v2398
      %2400 = vmatprep.mubr.bf16.mxu0 0
      %2401 = vmatmul.mubr.bf16.gmra.mrb[0].mxu0 %v1540
      %v2402 = vpop.f32.mrb[0].mxu0
      %v2403 = vadd.f32 %v1435, %v2402
      %v2404 = vpop.f32.mrb[0].mxu0
      %v2405 = vadd.f32 %v1435, %v2404
      %v2406 = vpop.f32.mrb[0].mxu0
      %v2407 = vadd.f32 %v1440, %v2406
      %v2408 = vpop.f32.mrb[0].mxu0
      %v2409 = vadd.f32 %v1440, %v2408
      %2410 = vmatprep.mubr.bf16.mxu0 0
      %2411 = vmatmul.mubr.bf16.gmra.mrb[0].mxu0 %v1543
      %v2412 = vpop.f32.mrb[0].mxu0
      %v2413 = vadd.f32 %v1445, %v2412
      %v2414 = vpop.f32.mrb[0].mxu0
      %v2415 = vadd.f32 %v1445, %v2414
      %v2416 = vpop.f32.mrb[0].mxu0
      %v2417 = vadd.f32 %v1450, %v2416
      %v2418 = vpop.f32.mrb[0].mxu0
      %v2419 = vadd.f32 %v1450, %v2418
      %2420 = vmatprep.mubr.bf16.mxu0 0
      %2421 = vmatmul.mubr.bf16.gmra.mrb[0].mxu0 %v1546
      %v2422 = vpop.f32.mrb[0].mxu0
      %v2423 = vadd.f32 %v1455, %v2422
      %v2424 = vpop.f32.mrb[0].mxu0
      %v2425 = vadd.f32 %v1455, %v2424
      %v2426 = vpop.f32.mrb[0].mxu0
      %v2427 = vadd.f32 %v1460, %v2426
      %v2428 = vpop.f32.mrb[0].mxu0
      %v2429 = vadd.f32 %v1460, %v2428
      %2430 = vmatprep.mubr.bf16.mxu0 0
      %2431 = vmatmul.mubr.bf16.gmra.mrb[0].mxu0 %v1549
      %v2432 = vpop.f32.mrb[0].mxu0
      %v2433 = vadd.f32 %v1465, %v2432
      %v2434 = vpop.f32.mrb[0].mxu0
      %v2435 = vadd.f32 %v1465, %v2434
      %v2436 = vpop.f32.mrb[0].mxu0
      %v2437 = vadd.f32 %v1470, %v2436
      %v2438 = vpop.f32.mrb[0].mxu0
      %v2439 = vadd.f32 %v1470, %v2438
      %2440 = vmatprep.mubr.bf16.mxu0 0
      %2441 = vmatmul.mubr.bf16.gmra.mrb[0].mxu0 %v1552
      %v2442 = vpop.f32.mrb[0].mxu0
      %v2443 = vadd.f32 %v1475, %v2442
      %v2444 = vpop.f32.mrb[0].mxu0
      %v2445 = vadd.f32 %v1475, %v2444
      %v2446 = vpop.f32.mrb[0].mxu0
      %v2447 = vadd.f32 %v1480, %v2446
      %v2448 = vpop.f32.mrb[0].mxu0
      %v2449 = vadd.f32 %v1480, %v2448
      %2450 = vmatprep.mubr.bf16.mxu0 0
      %2451 = vmatmul.mubr.bf16.gmra.mrb[0].mxu0 %v1555
      %v2452 = vpop.f32.mrb[0].mxu0
      %v2453 = vadd.f32 %v1485, %v2452
      %v2454 = vpop.f32.mrb[0].mxu0
      %v2455 = vadd.f32 %v1485, %v2454
      %v2456 = vpop.f32.mrb[0].mxu0
      %v2457 = vadd.f32 %v1490, %v2456
      %v2458 = vpop.f32.mrb[0].mxu0
      %v2459 = vadd.f32 %v1490, %v2458
      %2460 = vdwg.mxu0
      %v2461 = vmul.f32 %v1592, 0.2
      %v2462 = vmul.f32 %v1594, 0.2
      %v2463 = vmul.f32 %v1705, 0.2
      %v2464 = vmul.f32 %v1707, 0.2
      %v2465 = vmul.f32 %v1818, 0.2
      %v2466 = vmul.f32 %v1820, 0.2
      %v2467 = vmul.f32 %v1931, 0.2
      %v2468 = vmul.f32 %v1933, 0.2
      %v2469 = vmul.f32 %v2044, 0.2
      %v2470 = vmul.f32 %v2046, 0.2
      %v2471 = vmul.f32 %v2157, 0.2
      %v2472 = vmul.f32 %v2159, 0.2
      %v2473 = vmul.f32 %v2270, 0.2
      %v2474 = vmul.f32 %v2272, 0.2
      %v2475 = vmul.f32 %v2383, 0.2
      %v2476 = vmul.f32 %v2385, 0.2
      %v2477 = vmul.f32 %v1596, 0.2
      %v2478 = vmul.f32 %v1598, 0.2
      %v2479 = vmul.f32 %v1709, 0.2
      %v2480 = vmul.f32 %v1711, 0.2
      %v2481 = vmul.f32 %v1822, 0.2
      %v2482 = vmul.f32 %v1824, 0.2
      %v2483 = vmul.f32 %v1935, 0.2
      %v2484 = vmul.f32 %v1937, 0.2
      %v2485 = vmul.f32 %v2048, 0.2
      %v2486 = vmul.f32 %v2050, 0.2
      %v2487 = vmul.f32 %v2161, 0.2
      %v2488 = vmul.f32 %v2163, 0.2
      %v2489 = vmul.f32 %v2274, 0.2
      %v2490 = vmul.f32 %v2276, 0.2
      %v2491 = vmul.f32 %v2387, 0.2
      %v2492 = vmul.f32 %v2389, 0.2
      %v2493 = vmul.f32 %v1602, 0.2
      %v2494 = vmul.f32 %v1604, 0.2
      %v2495 = vmul.f32 %v1715, 0.2
      %v2496 = vmul.f32 %v1717, 0.2
      %v2497 = vmul.f32 %v1828, 0.2
      %v2498 = vmul.f32 %v1830, 0.2
      %v2499 = vmul.f32 %v1941, 0.2
      %v2500 = vmul.f32 %v1943, 0.2
      %v2501 = vmul.f32 %v2054, 0.2
      %v2502 = vmul.f32 %v2056, 0.2
      %v2503 = vmul.f32 %v2167, 0.2
      %v2504 = vmul.f32 %v2169, 0.2
      %v2505 = vmul.f32 %v2280, 0.2
      %v2506 = vmul.f32 %v2282, 0.2
      %v2507 = vmul.f32 %v2393, 0.2
      %v2508 = vmul.f32 %v2395, 0.2
      %v2509 = vmul.f32 %v1606, 0.2
      %v2510 = vmul.f32 %v1608, 0.2
      %v2511 = vmul.f32 %v1719, 0.2
      %v2512 = vmul.f32 %v1721, 0.2
      %v2513 = vmul.f32 %v1832, 0.2
      %v2514 = vmul.f32 %v1834, 0.2
      %v2515 = vmul.f32 %v1945, 0.2
      %v2516 = vmul.f32 %v1947, 0.2
      %v2517 = vmul.f32 %v2058, 0.2
      %v2518 = vmul.f32 %v2060, 0.2
      %v2519 = vmul.f32 %v2171, 0.2
      %v2520 = vmul.f32 %v2173, 0.2
      %v2521 = vmul.f32 %v2284, 0.2
      %v2522 = vmul.f32 %v2286, 0.2
      %v2523 = vmul.f32 %v2397, 0.2
      %v2524 = vmul.f32 %v2399, 0.2
      %v2525 = vmul.f32 %v1612, 0.2
      %v2526 = vmul.f32 %v1614, 0.2
      %v2527 = vmul.f32 %v1725, 0.2
      %v2528 = vmul.f32 %v1727, 0.2
      %v2529 = vmul.f32 %v1838, 0.2
      %v2530 = vmul.f32 %v1840, 0.2
      %v2531 = vmul.f32 %v1951, 0.2
      %v2532 = vmul.f32 %v1953, 0.2
      %v2533 = vmul.f32 %v2064, 0.2
      %v2534 = vmul.f32 %v2066, 0.2
      %v2535 = vmul.f32 %v2177, 0.2
      %v2536 = vmul.f32 %v2179, 0.2
      %v2537 = vmul.f32 %v2290, 0.2
      %v2538 = vmul.f32 %v2292, 0.2
      %v2539 = vmul.f32 %v2403, 0.2
      %v2540 = vmul.f32 %v2405, 0.2
      %v2541 = vmul.f32 %v1616, 0.2
      %v2542 = vmul.f32 %v1618, 0.2
      %v2543 = vmul.f32 %v1729, 0.2
      %v2544 = vmul.f32 %v1731, 0.2
      %v2545 = vmul.f32 %v1842, 0.2
      %v2546 = vmul.f32 %v1844, 0.2
      %v2547 = vmul.f32 %v1955, 0.2
      %v2548 = vmul.f32 %v1957, 0.2
      %v2549 = vmul.f32 %v2068, 0.2
      %v2550 = vmul.f32 %v2070, 0.2
      %v2551 = vmul.f32 %v2181, 0.2
      %v2552 = vmul.f32 %v2183, 0.2
      %v2553 = vmul.f32 %v2294, 0.2
      %v2554 = vmul.f32 %v2296, 0.2
      %v2555 = vmul.f32 %v2407, 0.2
      %v2556 = vmul.f32 %v2409, 0.2
      %v2557 = vmul.f32 %v1622, 0.2
      %v2558 = vmul.f32 %v1624, 0.2
      %v2559 = vmul.f32 %v1735, 0.2
      %v2560 = vmul.f32 %v1737, 0.2
      %v2561 = vmul.f32 %v1848, 0.2
      %v2562 = vmul.f32 %v1850, 0.2
      %v2563 = vmul.f32 %v1961, 0.2
      %v2564 = vmul.f32 %v1963, 0.2
      %v2565 = vmul.f32 %v2074, 0.2
      %v2566 = vmul.f32 %v2076, 0.2
      %v2567 = vmul.f32 %v2187, 0.2
      %v2568 = vmul.f32 %v2189, 0.2
      %v2569 = vmul.f32 %v2300, 0.2
      %v2570 = vmul.f32 %v2302, 0.2
      %v2571 = vmul.f32 %v2413, 0.2
      %v2572 = vmul.f32 %v2415, 0.2
      %v2573 = vmul.f32 %v1626, 0.2
      %v2574 = vmul.f32 %v1628, 0.2
      %v2575 = vmul.f32 %v1739, 0.2
      %v2576 = vmul.f32 %v1741, 0.2
      %v2577 = vmul.f32 %v1852, 0.2
      %v2578 = vmul.f32 %v1854, 0.2
      %v2579 = vmul.f32 %v1965, 0.2
      %v2580 = vmul.f32 %v1967, 0.2
      %v2581 = vmul.f32 %v2078, 0.2
      %v2582 = vmul.f32 %v2080, 0.2
      %v2583 = vmul.f32 %v2191, 0.2
      %v2584 = vmul.f32 %v2193, 0.2
      %v2585 = vmul.f32 %v2304, 0.2
      %v2586 = vmul.f32 %v2306, 0.2
      %v2587 = vmul.f32 %v2417, 0.2
      %v2588 = vmul.f32 %v2419, 0.2
      %v2589 = vmul.f32 %v1632, 0.2
      %v2590 = vmul.f32 %v1634, 0.2
      %v2591 = vmul.f32 %v1745, 0.2
      %v2592 = vmul.f32 %v1747, 0.2
      %v2593 = vmul.f32 %v1858, 0.2
      %v2594 = vmul.f32 %v1860, 0.2
      %v2595 = vmul.f32 %v1971, 0.2
      %v2596 = vmul.f32 %v1973, 0.2
      %v2597 = vmul.f32 %v2084, 0.2
      %v2598 = vmul.f32 %v2086, 0.2
      %v2599 = vmul.f32 %v2197, 0.2
      %v2600 = vmul.f32 %v2199, 0.2
      %v2601 = vmul.f32 %v2310, 0.2
      %v2602 = vmul.f32 %v2312, 0.2
      %v2603 = vmul.f32 %v2423, 0.2
      %v2604 = vmul.f32 %v2425, 0.2
      %v2605 = vmul.f32 %v1636, 0.2
      %v2606 = vmul.f32 %v1638, 0.2
      %v2607 = vmul.f32 %v1749, 0.2
      %v2608 = vmul.f32 %v1751, 0.2
      %v2609 = vmul.f32 %v1862, 0.2
      %v2610 = vmul.f32 %v1864, 0.2
      %v2611 = vmul.f32 %v1975, 0.2
      %v2612 = vmul.f32 %v1977, 0.2
      %v2613 = vmul.f32 %v2088, 0.2
      %v2614 = vmul.f32 %v2090, 0.2
      %v2615 = vmul.f32 %v2201, 0.2
      %v2616 = vmul.f32 %v2203, 0.2
      %v2617 = vmul.f32 %v2314, 0.2
      %v2618 = vmul.f32 %v2316, 0.2
      %v2619 = vmul.f32 %v2427, 0.2
      %v2620 = vmul.f32 %v2429, 0.2
      %v2621 = vmul.f32 %v1642, 0.2
      %v2622 = vmul.f32 %v1644, 0.2
      %v2623 = vmul.f32 %v1755, 0.2
      %v2624 = vmul.f32 %v1757, 0.2
      %v2625 = vmul.f32 %v1868, 0.2
      %v2626 = vmul.f32 %v1870, 0.2
      %v2627 = vmul.f32 %v1981, 0.2
      %v2628 = vmul.f32 %v1983, 0.2
      %v2629 = vmul.f32 %v2094, 0.2
      %v2630 = vmul.f32 %v2096, 0.2
      %v2631 = vmul.f32 %v2207, 0.2
      %v2632 = vmul.f32 %v2209, 0.2
      %v2633 = vmul.f32 %v2320, 0.2
      %v2634 = vmul.f32 %v2322, 0.2
      %v2635 = vmul.f32 %v2433, 0.2
      %v2636 = vmul.f32 %v2435, 0.2
      %v2637 = vmul.f32 %v1646, 0.2
      %v2638 = vmul.f32 %v1648, 0.2
      %v2639 = vmul.f32 %v1759, 0.2
      %v2640 = vmul.f32 %v1761, 0.2
      %v2641 = vmul.f32 %v1872, 0.2
      %v2642 = vmul.f32 %v1874, 0.2
      %v2643 = vmul.f32 %v1985, 0.2
      %v2644 = vmul.f32 %v1987, 0.2
      %v2645 = vmul.f32 %v2098, 0.2
      %v2646 = vmul.f32 %v2100, 0.2
      %v2647 = vmul.f32 %v2211, 0.2
      %v2648 = vmul.f32 %v2213, 0.2
      %v2649 = vmul.f32 %v2324, 0.2
      %v2650 = vmul.f32 %v2326, 0.2
      %v2651 = vmul.f32 %v2437, 0.2
      %v2652 = vmul.f32 %v2439, 0.2
      %v2653 = vmul.f32 %v1652, 0.2
      %v2654 = vmul.f32 %v1654, 0.2
      %v2655 = vmul.f32 %v1765, 0.2
      %v2656 = vmul.f32 %v1767, 0.2
      %v2657 = vmul.f32 %v1878, 0.2
      %v2658 = vmul.f32 %v1880, 0.2
      %v2659 = vmul.f32 %v1991, 0.2
      %v2660 = vmul.f32 %v1993, 0.2
      %v2661 = vmul.f32 %v2104, 0.2
      %v2662 = vmul.f32 %v2106, 0.2
      %v2663 = vmul.f32 %v2217, 0.2
      %v2664 = vmul.f32 %v2219, 0.2
      %v2665 = vmul.f32 %v2330, 0.2
      %v2666 = vmul.f32 %v2332, 0.2
      %v2667 = vmul.f32 %v2443, 0.2
      %v2668 = vmul.f32 %v2445, 0.2
      %v2669 = vmul.f32 %v1656, 0.2
      %v2670 = vmul.f32 %v1658, 0.2
      %v2671 = vmul.f32 %v1769, 0.2
      %v2672 = vmul.f32 %v1771, 0.2
      %v2673 = vmul.f32 %v1882, 0.2
      %v2674 = vmul.f32 %v1884, 0.2
      %v2675 = vmul.f32 %v1995, 0.2
      %v2676 = vmul.f32 %v1997, 0.2
      %v2677 = vmul.f32 %v2108, 0.2
      %v2678 = vmul.f32 %v2110, 0.2
      %v2679 = vmul.f32 %v2221, 0.2
      %v2680 = vmul.f32 %v2223, 0.2
      %v2681 = vmul.f32 %v2334, 0.2
      %v2682 = vmul.f32 %v2336, 0.2
      %v2683 = vmul.f32 %v2447, 0.2
      %v2684 = vmul.f32 %v2449, 0.2
      %v2685 = vmul.f32 %v1662, 0.2
      %v2686 = vmul.f32 %v1664, 0.2
      %v2687 = vmul.f32 %v1775, 0.2
      %v2688 = vmul.f32 %v1777, 0.2
      %v2689 = vmul.f32 %v1888, 0.2
      %v2690 = vmul.f32 %v1890, 0.2
      %v2691 = vmul.f32 %v2001, 0.2
      %v2692 = vmul.f32 %v2003, 0.2
      %v2693 = vmul.f32 %v2114, 0.2
      %v2694 = vmul.f32 %v2116, 0.2
      %v2695 = vmul.f32 %v2227, 0.2
      %v2696 = vmul.f32 %v2229, 0.2
      %v2697 = vmul.f32 %v2340, 0.2
      %v2698 = vmul.f32 %v2342, 0.2
      %v2699 = vmul.f32 %v2453, 0.2
      %v2700 = vmul.f32 %v2455, 0.2
      %v2701 = vmul.f32 %v1666, 0.2
      %v2702 = vmul.f32 %v1668, 0.2
      %v2703 = vmul.f32 %v1779, 0.2
      %v2704 = vmul.f32 %v1781, 0.2
      %v2705 = vmul.f32 %v1892, 0.2
      %v2706 = vmul.f32 %v1894, 0.2
      %v2707 = vmul.f32 %v2005, 0.2
      %v2708 = vmul.f32 %v2007, 0.2
      %v2709 = vmul.f32 %v2118, 0.2
      %v2710 = vmul.f32 %v2120, 0.2
      %v2711 = vmul.f32 %v2231, 0.2
      %v2712 = vmul.f32 %v2233, 0.2
      %v2713 = vmul.f32 %v2344, 0.2
      %v2714 = vmul.f32 %v2346, 0.2
      %v2715 = vmul.f32 %v2457, 0.2
      %v2716 = vmul.f32 %v2459, 0.2
      %v2717 = vmax.f32 %v1592, %v2461
      %v2718 = vmax.f32 %v1594, %v2462
      %v2719 = vmax.f32 %v1705, %v2463
      %v2720 = vmax.f32 %v1707, %v2464
      %v2721 = vmax.f32 %v1818, %v2465
      %v2722 = vmax.f32 %v1820, %v2466
      %v2723 = vmax.f32 %v1931, %v2467
      %v2724 = vmax.f32 %v1933, %v2468
      %v2725 = vmax.f32 %v2044, %v2469
      %v2726 = vmax.f32 %v2046, %v2470
      %v2727 = vmax.f32 %v2157, %v2471
      %v2728 = vmax.f32 %v2159, %v2472
      %v2729 = vmax.f32 %v2270, %v2473
      %v2730 = vmax.f32 %v2272, %v2474
      %v2731 = vmax.f32 %v2383, %v2475
      %v2732 = vmax.f32 %v2385, %v2476
      %v2733 = vmax.f32 %v1596, %v2477
      %v2734 = vmax.f32 %v1598, %v2478
      %v2735 = vmax.f32 %v1709, %v2479
      %v2736 = vmax.f32 %v1711, %v2480
      %v2737 = vmax.f32 %v1822, %v2481
      %v2738 = vmax.f32 %v1824, %v2482
      %v2739 = vmax.f32 %v1935, %v2483
      %v2740 = vmax.f32 %v1937, %v2484
      %v2741 = vmax.f32 %v2048, %v2485
      %v2742 = vmax.f32 %v2050, %v2486
      %v2743 = vmax.f32 %v2161, %v2487
      %v2744 = vmax.f32 %v2163, %v2488
      %v2745 = vmax.f32 %v2274, %v2489
      %v2746 = vmax.f32 %v2276, %v2490
      %v2747 = vmax.f32 %v2387, %v2491
      %v2748 = vmax.f32 %v2389, %v2492
      %v2749 = vmax.f32 %v1602, %v2493
      %v2750 = vmax.f32 %v1604, %v2494
      %v2751 = vmax.f32 %v1715, %v2495
      %v2752 = vmax.f32 %v1717, %v2496
      %v2753 = vmax.f32 %v1828, %v2497
      %v2754 = vmax.f32 %v1830, %v2498
      %v2755 = vmax.f32 %v1941, %v2499
      %v2756 = vmax.f32 %v1943, %v2500
      %v2757 = vmax.f32 %v2054, %v2501
      %v2758 = vmax.f32 %v2056, %v2502
      %v2759 = vmax.f32 %v2167, %v2503
      %v2760 = vmax.f32 %v2169, %v2504
      %v2761 = vmax.f32 %v2280, %v2505
      %v2762 = vmax.f32 %v2282, %v2506
      %v2763 = vmax.f32 %v2393, %v2507
      %v2764 = vmax.f32 %v2395, %v2508
      %v2765 = vmax.f32 %v1606, %v2509
      %v2766 = vmax.f32 %v1608, %v2510
      %v2767 = vmax.f32 %v1719, %v2511
      %v2768 = vmax.f32 %v1721, %v2512
      %v2769 = vmax.f32 %v1832, %v2513
      %v2770 = vmax.f32 %v1834, %v2514
      %v2771 = vmax.f32 %v1945, %v2515
      %v2772 = vmax.f32 %v1947, %v2516
      %v2773 = vmax.f32 %v2058, %v2517
      %v2774 = vmax.f32 %v2060, %v2518
      %v2775 = vmax.f32 %v2171, %v2519
      %v2776 = vmax.f32 %v2173, %v2520
      %v2777 = vmax.f32 %v2284, %v2521
      %v2778 = vmax.f32 %v2286, %v2522
      %v2779 = vmax.f32 %v2397, %v2523
      %v2780 = vmax.f32 %v2399, %v2524
      %v2781 = vmax.f32 %v1612, %v2525
      %v2782 = vmax.f32 %v1614, %v2526
      %v2783 = vmax.f32 %v1725, %v2527
      %v2784 = vmax.f32 %v1727, %v2528
      %v2785 = vmax.f32 %v1838, %v2529
      %v2786 = vmax.f32 %v1840, %v2530
      %v2787 = vmax.f32 %v1951, %v2531
      %v2788 = vmax.f32 %v1953, %v2532
      %v2789 = vmax.f32 %v2064, %v2533
      %v2790 = vmax.f32 %v2066, %v2534
      %v2791 = vmax.f32 %v2177, %v2535
      %v2792 = vmax.f32 %v2179, %v2536
      %v2793 = vmax.f32 %v2290, %v2537
      %v2794 = vmax.f32 %v2292, %v2538
      %v2795 = vmax.f32 %v2403, %v2539
      %v2796 = vmax.f32 %v2405, %v2540
      %v2797 = vmax.f32 %v1616, %v2541
      %v2798 = vmax.f32 %v1618, %v2542
      %v2799 = vmax.f32 %v1729, %v2543
      %v2800 = vmax.f32 %v1731, %v2544
      %v2801 = vmax.f32 %v1842, %v2545
      %v2802 = vmax.f32 %v1844, %v2546
      %v2803 = vmax.f32 %v1955, %v2547
      %v2804 = vmax.f32 %v1957, %v2548
      %v2805 = vmax.f32 %v2068, %v2549
      %v2806 = vmax.f32 %v2070, %v2550
      %v2807 = vmax.f32 %v2181, %v2551
      %v2808 = vmax.f32 %v2183, %v2552
      %v2809 = vmax.f32 %v2294, %v2553
      %v2810 = vmax.f32 %v2296, %v2554
      %v2811 = vmax.f32 %v2407, %v2555
      %v2812 = vmax.f32 %v2409, %v2556
      %v2813 = vmax.f32 %v1622, %v2557
      %v2814 = vmax.f32 %v1624, %v2558
      %v2815 = vmax.f32 %v1735, %v2559
      %v2816 = vmax.f32 %v1737, %v2560
      %v2817 = vmax.f32 %v1848, %v2561
      %v2818 = vmax.f32 %v1850, %v2562
      %v2819 = vmax.f32 %v1961, %v2563
      %v2820 = vmax.f32 %v1963, %v2564
      %v2821 = vmax.f32 %v2074, %v2565
      %v2822 = vmax.f32 %v2076, %v2566
      %v2823 = vmax.f32 %v2187, %v2567
      %v2824 = vmax.f32 %v2189, %v2568
      %v2825 = vmax.f32 %v2300, %v2569
      %v2826 = vmax.f32 %v2302, %v2570
      %v2827 = vmax.f32 %v2413, %v2571
      %v2828 = vmax.f32 %v2415, %v2572
      %v2829 = vmax.f32 %v1626, %v2573
      %v2830 = vmax.f32 %v1628, %v2574
      %v2831 = vmax.f32 %v1739, %v2575
      %v2832 = vmax.f32 %v1741, %v2576
      %v2833 = vmax.f32 %v1852, %v2577
      %v2834 = vmax.f32 %v1854, %v2578
      %v2835 = vmax.f32 %v1965, %v2579
      %v2836 = vmax.f32 %v1967, %v2580
      %v2837 = vmax.f32 %v2078, %v2581
      %v2838 = vmax.f32 %v2080, %v2582
      %v2839 = vmax.f32 %v2191, %v2583
      %v2840 = vmax.f32 %v2193, %v2584
      %v2841 = vmax.f32 %v2304, %v2585
      %v2842 = vmax.f32 %v2306, %v2586
      %v2843 = vmax.f32 %v2417, %v2587
      %v2844 = vmax.f32 %v2419, %v2588
      %v2845 = vmax.f32 %v1632, %v2589
      %v2846 = vmax.f32 %v1634, %v2590
      %v2847 = vmax.f32 %v1745, %v2591
      %v2848 = vmax.f32 %v1747, %v2592
      %v2849 = vmax.f32 %v1858, %v2593
      %v2850 = vmax.f32 %v1860, %v2594
      %v2851 = vmax.f32 %v1971, %v2595
      %v2852 = vmax.f32 %v1973, %v2596
      %v2853 = vmax.f32 %v2084, %v2597
      %v2854 = vmax.f32 %v2086, %v2598
      %v2855 = vmax.f32 %v2197, %v2599
      %v2856 = vmax.f32 %v2199, %v2600
      %v2857 = vmax.f32 %v2310, %v2601
      %v2858 = vmax.f32 %v2312, %v2602
      %v2859 = vmax.f32 %v2423, %v2603
      %v2860 = vmax.f32 %v2425, %v2604
      %v2861 = vmax.f32 %v1636, %v2605
      %v2862 = vmax.f32 %v1638, %v2606
      %v2863 = vmax.f32 %v1749, %v2607
      %v2864 = vmax.f32 %v1751, %v2608
      %v2865 = vmax.f32 %v1862, %v2609
      %v2866 = vmax.f32 %v1864, %v2610
      %v2867 = vmax.f32 %v1975, %v2611
      %v2868 = vmax.f32 %v1977, %v2612
      %v2869 = vmax.f32 %v2088, %v2613
      %v2870 = vmax.f32 %v2090, %v2614
      %v2871 = vmax.f32 %v2201, %v2615
      %v2872 = vmax.f32 %v2203, %v2616
      %v2873 = vmax.f32 %v2314, %v2617
      %v2874 = vmax.f32 %v2316, %v2618
      %v2875 = vmax.f32 %v2427, %v2619
      %v2876 = vmax.f32 %v2429, %v2620
      %v2877 = vmax.f32 %v1642, %v2621
      %v2878 = vmax.f32 %v1644, %v2622
      %v2879 = vmax.f32 %v1755, %v2623
      %v2880 = vmax.f32 %v1757, %v2624
      %v2881 = vmax.f32 %v1868, %v2625
      %v2882 = vmax.f32 %v1870, %v2626
      %v2883 = vmax.f32 %v1981, %v2627
      %v2884 = vmax.f32 %v1983, %v2628
      %v2885 = vmax.f32 %v2094, %v2629
      %v2886 = vmax.f32 %v2096, %v2630
      %v2887 = vmax.f32 %v2207, %v2631
      %v2888 = vmax.f32 %v2209, %v2632
      %v2889 = vmax.f32 %v2320, %v2633
      %v2890 = vmax.f32 %v2322, %v2634
      %v2891 = vmax.f32 %v2433, %v2635
      %v2892 = vmax.f32 %v2435, %v2636
      %v2893 = vmax.f32 %v1646, %v2637
      %v2894 = vmax.f32 %v1648, %v2638
      %v2895 = vmax.f32 %v1759, %v2639
      %v2896 = vmax.f32 %v1761, %v2640
      %v2897 = vmax.f32 %v1872, %v2641
      %v2898 = vmax.f32 %v1874, %v2642
      %v2899 = vmax.f32 %v1985, %v2643
      %v2900 = vmax.f32 %v1987, %v2644
      %v2901 = vmax.f32 %v2098, %v2645
      %v2902 = vmax.f32 %v2100, %v2646
      %v2903 = vmax.f32 %v2211, %v2647
      %v2904 = vmax.f32 %v2213, %v2648
      %v2905 = vmax.f32 %v2324, %v2649
      %v2906 = vmax.f32 %v2326, %v2650
      %v2907 = vmax.f32 %v2437, %v2651
      %v2908 = vmax.f32 %v2439, %v2652
      %v2909 = vmax.f32 %v1652, %v2653
      %v2910 = vmax.f32 %v1654, %v2654
      %v2911 = vmax.f32 %v1765, %v2655
      %v2912 = vmax.f32 %v1767, %v2656
      %v2913 = vmax.f32 %v1878, %v2657
      %v2914 = vmax.f32 %v1880, %v2658
      %v2915 = vmax.f32 %v1991, %v2659
      %v2916 = vmax.f32 %v1993, %v2660
      %v2917 = vmax.f32 %v2104, %v2661
      %v2918 = vmax.f32 %v2106, %v2662
      %v2919 = vmax.f32 %v2217, %v2663
      %v2920 = vmax.f32 %v2219, %v2664
      %v2921 = vmax.f32 %v2330, %v2665
      %v2922 = vmax.f32 %v2332, %v2666
      %v2923 = vmax.f32 %v2443, %v2667
      %v2924 = vmax.f32 %v2445, %v2668
      %v2925 = vmax.f32 %v1656, %v2669
      %v2926 = vmax.f32 %v1658, %v2670
      %v2927 = vmax.f32 %v1769, %v2671
      %v2928 = vmax.f32 %v1771, %v2672
      %v2929 = vmax.f32 %v1882, %v2673
      %v2930 = vmax.f32 %v1884, %v2674
      %v2931 = vmax.f32 %v1995, %v2675
      %v2932 = vmax.f32 %v1997, %v2676
      %v2933 = vmax.f32 %v2108, %v2677
      %v2934 = vmax.f32 %v2110, %v2678
      %v2935 = vmax.f32 %v2221, %v2679
      %v2936 = vmax.f32 %v2223, %v2680
      %v2937 = vmax.f32 %v2334, %v2681
      %v2938 = vmax.f32 %v2336, %v2682
      %v2939 = vmax.f32 %v2447, %v2683
      %v2940 = vmax.f32 %v2449, %v2684
      %v2941 = vmax.f32 %v1662, %v2685
      %v2942 = vmax.f32 %v1664, %v2686
      %v2943 = vmax.f32 %v1775, %v2687
      %v2944 = vmax.f32 %v1777, %v2688
      %v2945 = vmax.f32 %v1888, %v2689
      %v2946 = vmax.f32 %v1890, %v2690
      %v2947 = vmax.f32 %v2001, %v2691
      %v2948 = vmax.f32 %v2003, %v2692
      %v2949 = vmax.f32 %v2114, %v2693
      %v2950 = vmax.f32 %v2116, %v2694
      %v2951 = vmax.f32 %v2227, %v2695
      %v2952 = vmax.f32 %v2229, %v2696
      %v2953 = vmax.f32 %v2340, %v2697
      %v2954 = vmax.f32 %v2342, %v2698
      %v2955 = vmax.f32 %v2453, %v2699
      %v2956 = vmax.f32 %v2455, %v2700
      %v2957 = vmax.f32 %v1666, %v2701
      %v2958 = vmax.f32 %v1668, %v2702
      %v2959 = vmax.f32 %v1779, %v2703
      %v2960 = vmax.f32 %v1781, %v2704
      %v2961 = vmax.f32 %v1892, %v2705
      %v2962 = vmax.f32 %v1894, %v2706
      %v2963 = vmax.f32 %v2005, %v2707
      %v2964 = vmax.f32 %v2007, %v2708
      %v2965 = vmax.f32 %v2118, %v2709
      %v2966 = vmax.f32 %v2120, %v2710
      %v2967 = vmax.f32 %v2231, %v2711
      %v2968 = vmax.f32 %v2233, %v2712
      %v2969 = vmax.f32 %v2344, %v2713
      %v2970 = vmax.f32 %v2346, %v2714
      %v2971 = vmax.f32 %v2457, %v2715
      %v2972 = vmax.f32 %v2459, %v2716
      %v2973 = vld [vmem:[%s5] sm:$0xff]
      %v2974 = vld [vmem:[%s5 + $0x8] sm:$0xff]
      %v2975 = vld [vmem:[%s5 + $0x10] sm:$0xff]
      %v2976 = vld [vmem:[%s5 + $0x18] sm:$0xff]
      %v2977 = vld [vmem:[%s5 + $0x20] sm:$0xff]
      %v2978 = vld [vmem:[%s5 + $0x28] sm:$0xff]
      %v2979 = vld [vmem:[%s5 + $0x30] sm:$0xff]
      %v2980 = vld [vmem:[%s5 + $0x38] sm:$0xff]
      %v2981 = vld [vmem:[%s5 + $0x40] sm:$0xff]
      %v2982 = vld [vmem:[%s5 + $0x48] sm:$0xff]
      %v2983 = vld [vmem:[%s5 + $0x50] sm:$0xff]
      %v2984 = vld [vmem:[%s5 + $0x58] sm:$0xff]
      %v2985 = vld [vmem:[%s5 + $0x60] sm:$0xff]
      %v2986 = vld [vmem:[%s5 + $0x68] sm:$0xff]
      %v2987 = vld [vmem:[%s5 + $0x70] sm:$0xff]
      %v2988 = vld [vmem:[%s5 + $0x78] sm:$0xff]
      %2990 = vset.pattern.permute.xlu0 0
      %2991 = vperm.xlu0 %2990, %v2973
      %v2992 = vpop.permute.xlu0 %2991
      %2995 = vset.pattern.permute.xlu0 0
      %2996 = vperm.xlu0 %2995, %v2974
      %v2997 = vpop.permute.xlu0 %2996
      %3000 = vset.pattern.permute.xlu0 0
      %3001 = vperm.xlu0 %3000, %v2975
      %v3002 = vpop.permute.xlu0 %3001
      %3005 = vset.pattern.permute.xlu0 0
      %3006 = vperm.xlu0 %3005, %v2976
      %v3007 = vpop.permute.xlu0 %3006
      %3010 = vset.pattern.permute.xlu0 0
      %3011 = vperm.xlu0 %3010, %v2977
      %v3012 = vpop.permute.xlu0 %3011
      %3015 = vset.pattern.permute.xlu0 0
      %3016 = vperm.xlu0 %3015, %v2978
      %v3017 = vpop.permute.xlu0 %3016
      %3020 = vset.pattern.permute.xlu0 0
      %3021 = vperm.xlu0 %3020, %v2979
      %v3022 = vpop.permute.xlu0 %3021
      %3025 = vset.pattern.permute.xlu0 0
      %3026 = vperm.xlu0 %3025, %v2980
      %v3027 = vpop.permute.xlu0 %3026
      %3030 = vset.pattern.permute.xlu0 0
      %3031 = vperm.xlu0 %3030, %v2981
      %v3032 = vpop.permute.xlu0 %3031
      %3035 = vset.pattern.permute.xlu0 0
      %3036 = vperm.xlu0 %3035, %v2982
      %v3037 = vpop.permute.xlu0 %3036
      %3040 = vset.pattern.permute.xlu0 0
      %3041 = vperm.xlu0 %3040, %v2983
      %v3042 = vpop.permute.xlu0 %3041
      %3045 = vset.pattern.permute.xlu0 0
      %3046 = vperm.xlu0 %3045, %v2984
      %v3047 = vpop.permute.xlu0 %3046
      %3050 = vset.pattern.permute.xlu0 0
      %3051 = vperm.xlu0 %3050, %v2985
      %v3052 = vpop.permute.xlu0 %3051
      %3055 = vset.pattern.permute.xlu0 0
      %3056 = vperm.xlu0 %3055, %v2986
      %v3057 = vpop.permute.xlu0 %3056
      %3060 = vset.pattern.permute.xlu0 0
      %3061 = vperm.xlu0 %3060, %v2987
      %v3062 = vpop.permute.xlu0 %3061
      %3065 = vset.pattern.permute.xlu0 0
      %3066 = vperm.xlu0 %3065, %v2988
      %v3067 = vpop.permute.xlu0 %3066
      %v3069 = vmul.f32 %v2717, %v2992
      %v3070 = vmul.f32 %v2718, %v2992
      %v3071 = vmul.f32 %v2719, %v2992
      %v3072 = vmul.f32 %v2720, %v2992
      %v3073 = vmul.f32 %v2721, %v2992
      %v3074 = vmul.f32 %v2722, %v2992
      %v3075 = vmul.f32 %v2723, %v2992
      %v3076 = vmul.f32 %v2724, %v2992
      %v3077 = vmul.f32 %v2725, %v2992
      %v3078 = vmul.f32 %v2726, %v2992
      %v3079 = vmul.f32 %v2727, %v2992
      %v3080 = vmul.f32 %v2728, %v2992
      %v3081 = vmul.f32 %v2729, %v2992
      %v3082 = vmul.f32 %v2730, %v2992
      %v3083 = vmul.f32 %v2731, %v2992
      %v3084 = vmul.f32 %v2732, %v2992
      %v3085 = vmul.f32 %v2733, %v2997
      %v3086 = vmul.f32 %v2734, %v2997
      %v3087 = vmul.f32 %v2735, %v2997
      %v3088 = vmul.f32 %v2736, %v2997
      %v3089 = vmul.f32 %v2737, %v2997
      %v3090 = vmul.f32 %v2738, %v2997
      %v3091 = vmul.f32 %v2739, %v2997
      %v3092 = vmul.f32 %v2740, %v2997
      %v3093 = vmul.f32 %v2741, %v2997
      %v3094 = vmul.f32 %v2742, %v2997
      %v3095 = vmul.f32 %v2743, %v2997
      %v3096 = vmul.f32 %v2744, %v2997
      %v3097 = vmul.f32 %v2745, %v2997
      %v3098 = vmul.f32 %v2746, %v2997
      %v3099 = vmul.f32 %v2747, %v2997
      %v3100 = vmul.f32 %v2748, %v2997
      %v3101 = vmul.f32 %v2749, %v3002
      %v3102 = vmul.f32 %v2750, %v3002
      %v3103 = vmul.f32 %v2751, %v3002
      %v3104 = vmul.f32 %v2752, %v3002
      %v3105 = vmul.f32 %v2753, %v3002
      %v3106 = vmul.f32 %v2754, %v3002
      %v3107 = vmul.f32 %v2755, %v3002
      %v3108 = vmul.f32 %v2756, %v3002
      %v3109 = vmul.f32 %v2757, %v3002
      %v3110 = vmul.f32 %v2758, %v3002
      %v3111 = vmul.f32 %v2759, %v3002
      %v3112 = vmul.f32 %v2760, %v3002
      %v3113 = vmul.f32 %v2761, %v3002
      %v3114 = vmul.f32 %v2762, %v3002
      %v3115 = vmul.f32 %v2763, %v3002
      %v3116 = vmul.f32 %v2764, %v3002
      %v3117 = vmul.f32 %v2765, %v3007
      %v3118 = vmul.f32 %v2766, %v3007
      %v3119 = vmul.f32 %v2767, %v3007
      %v3120 = vmul.f32 %v2768, %v3007
      %v3121 = vmul.f32 %v2769, %v3007
      %v3122 = vmul.f32 %v2770, %v3007
      %v3123 = vmul.f32 %v2771, %v3007
      %v3124 = vmul.f32 %v2772, %v3007
      %v3125 = vmul.f32 %v2773, %v3007
      %v3126 = vmul.f32 %v2774, %v3007
      %v3127 = vmul.f32 %v2775, %v3007
      %v3128 = vmul.f32 %v2776, %v3007
      %v3129 = vmul.f32 %v2777, %v3007
      %v3130 = vmul.f32 %v2778, %v3007
      %v3131 = vmul.f32 %v2779, %v3007
      %v3132 = vmul.f32 %v2780, %v3007
      %v3133 = vmul.f32 %v2781, %v3012
      %v3134 = vmul.f32 %v2782, %v3012
      %v3135 = vmul.f32 %v2783, %v3012
      %v3136 = vmul.f32 %v2784, %v3012
      %v3137 = vmul.f32 %v2785, %v3012
      %v3138 = vmul.f32 %v2786, %v3012
      %v3139 = vmul.f32 %v2787, %v3012
      %v3140 = vmul.f32 %v2788, %v3012
      %v3141 = vmul.f32 %v2789, %v3012
      %v3142 = vmul.f32 %v2790, %v3012
      %v3143 = vmul.f32 %v2791, %v3012
      %v3144 = vmul.f32 %v2792, %v3012
      %v3145 = vmul.f32 %v2793, %v3012
      %v3146 = vmul.f32 %v2794, %v3012
      %v3147 = vmul.f32 %v2795, %v3012
      %v3148 = vmul.f32 %v2796, %v3012
      %v3149 = vmul.f32 %v2797, %v3017
      %v3150 = vmul.f32 %v2798, %v3017
      %v3151 = vmul.f32 %v2799, %v3017
      %v3152 = vmul.f32 %v2800, %v3017
      %v3153 = vmul.f32 %v2801, %v3017
      %v3154 = vmul.f32 %v2802, %v3017
      %v3155 = vmul.f32 %v2803, %v3017
      %v3156 = vmul.f32 %v2804, %v3017
      %v3157 = vmul.f32 %v2805, %v3017
      %v3158 = vmul.f32 %v2806, %v3017
      %v3159 = vmul.f32 %v2807, %v3017
      %v3160 = vmul.f32 %v2808, %v3017
      %v3161 = vmul.f32 %v2809, %v3017
      %v3162 = vmul.f32 %v2810, %v3017
      %v3163 = vmul.f32 %v2811, %v3017
      %v3164 = vmul.f32 %v2812, %v3017
      %v3165 = vmul.f32 %v2813, %v3022
      %v3166 = vmul.f32 %v2814, %v3022
      %v3167 = vmul.f32 %v2815, %v3022
      %v3168 = vmul.f32 %v2816, %v3022
      %v3169 = vmul.f32 %v2817, %v3022
      %v3170 = vmul.f32 %v2818, %v3022
      %v3171 = vmul.f32 %v2819, %v3022
      %v3172 = vmul.f32 %v2820, %v3022
      %v3173 = vmul.f32 %v2821, %v3022
      %v3174 = vmul.f32 %v2822, %v3022
      %v3175 = vmul.f32 %v2823, %v3022
      %v3176 = vmul.f32 %v2824, %v3022
      %v3177 = vmul.f32 %v2825, %v3022
      %v3178 = vmul.f32 %v2826, %v3022
      %v3179 = vmul.f32 %v2827, %v3022
      %v3180 = vmul.f32 %v2828, %v3022
      %v3181 = vmul.f32 %v2829, %v3027
      %v3182 = vmul.f32 %v2830, %v3027
      %v3183 = vmul.f32 %v2831, %v3027
      %v3184 = vmul.f32 %v2832, %v3027
      %v3185 = vmul.f32 %v2833, %v3027
      %v3186 = vmul.f32 %v2834, %v3027
      %v3187 = vmul.f32 %v2835, %v3027
      %v3188 = vmul.f32 %v2836, %v3027
      %v3189 = vmul.f32 %v2837, %v3027
      %v3190 = vmul.f32 %v2838, %v3027
      %v3191 = vmul.f32 %v2839, %v3027
      %v3192 = vmul.f32 %v2840, %v3027
      %v3193 = vmul.f32 %v2841, %v3027
      %v3194 = vmul.f32 %v2842, %v3027
      %v3195 = vmul.f32 %v2843, %v3027
      %v3196 = vmul.f32 %v2844, %v3027
      %v3197 = vmul.f32 %v2845, %v3032
      %v3198 = vmul.f32 %v2846, %v3032
      %v3199 = vmul.f32 %v2847, %v3032
      %v3200 = vmul.f32 %v2848, %v3032
      %v3201 = vmul.f32 %v2849, %v3032
      %v3202 = vmul.f32 %v2850, %v3032
      %v3203 = vmul.f32 %v2851, %v3032
      %v3204 = vmul.f32 %v2852, %v3032
      %v3205 = vmul.f32 %v2853, %v3032
      %v3206 = vmul.f32 %v2854, %v3032
      %v3207 = vmul.f32 %v2855, %v3032
      %v3208 = vmul.f32 %v2856, %v3032
      %v3209 = vmul.f32 %v2857, %v3032
      %v3210 = vmul.f32 %v2858, %v3032
      %v3211 = vmul.f32 %v2859, %v3032
      %v3212 = vmul.f32 %v2860, %v3032
      %v3213 = vmul.f32 %v2861, %v3037
      %v3214 = vmul.f32 %v2862, %v3037
      %v3215 = vmul.f32 %v2863, %v3037
      %v3216 = vmul.f32 %v2864, %v3037
      %v3217 = vmul.f32 %v2865, %v3037
      %v3218 = vmul.f32 %v2866, %v3037
      %v3219 = vmul.f32 %v2867, %v3037
      %v3220 = vmul.f32 %v2868, %v3037
      %v3221 = vmul.f32 %v2869, %v3037
      %v3222 = vmul.f32 %v2870, %v3037
      %v3223 = vmul.f32 %v2871, %v3037
      %v3224 = vmul.f32 %v2872, %v3037
      %v3225 = vmul.f32 %v2873, %v3037
      %v3226 = vmul.f32 %v2874, %v3037
      %v3227 = vmul.f32 %v2875, %v3037
      %v3228 = vmul.f32 %v2876, %v3037
      %v3229 = vmul.f32 %v2877, %v3042
      %v3230 = vmul.f32 %v2878, %v3042
      %v3231 = vmul.f32 %v2879, %v3042
      %v3232 = vmul.f32 %v2880, %v3042
      %v3233 = vmul.f32 %v2881, %v3042
      %v3234 = vmul.f32 %v2882, %v3042
      %v3235 = vmul.f32 %v2883, %v3042
      %v3236 = vmul.f32 %v2884, %v3042
      %v3237 = vmul.f32 %v2885, %v3042
      %v3238 = vmul.f32 %v2886, %v3042
      %v3239 = vmul.f32 %v2887, %v3042
      %v3240 = vmul.f32 %v2888, %v3042
      %v3241 = vmul.f32 %v2889, %v3042
      %v3242 = vmul.f32 %v2890, %v3042
      %v3243 = vmul.f32 %v2891, %v3042
      %v3244 = vmul.f32 %v2892, %v3042
      %v3245 = vmul.f32 %v2893, %v3047
      %v3246 = vmul.f32 %v2894, %v3047
      %v3247 = vmul.f32 %v2895, %v3047
      %v3248 = vmul.f32 %v2896, %v3047
      %v3249 = vmul.f32 %v2897, %v3047
      %v3250 = vmul.f32 %v2898, %v3047
      %v3251 = vmul.f32 %v2899, %v3047
      %v3252 = vmul.f32 %v2900, %v3047
      %v3253 = vmul.f32 %v2901, %v3047
      %v3254 = vmul.f32 %v2902, %v3047
      %v3255 = vmul.f32 %v2903, %v3047
      %v3256 = vmul.f32 %v2904, %v3047
      %v3257 = vmul.f32 %v2905, %v3047
      %v3258 = vmul.f32 %v2906, %v3047
      %v3259 = vmul.f32 %v2907, %v3047
      %v3260 = vmul.f32 %v2908, %v3047
      %v3261 = vmul.f32 %v2909, %v3052
      %v3262 = vmul.f32 %v2910, %v3052
      %v3263 = vmul.f32 %v2911, %v3052
      %v3264 = vmul.f32 %v2912, %v3052
      %v3265 = vmul.f32 %v2913, %v3052
      %v3266 = vmul.f32 %v2914, %v3052
      %v3267 = vmul.f32 %v2915, %v3052
      %v3268 = vmul.f32 %v2916, %v3052
      %v3269 = vmul.f32 %v2917, %v3052
      %v3270 = vmul.f32 %v2918, %v3052
      %v3271 = vmul.f32 %v2919, %v3052
      %v3272 = vmul.f32 %v2920, %v3052
      %v3273 = vmul.f32 %v2921, %v3052
      %v3274 = vmul.f32 %v2922, %v3052
      %v3275 = vmul.f32 %v2923, %v3052
      %v3276 = vmul.f32 %v2924, %v3052
      %v3277 = vmul.f32 %v2925, %v3057
      %v3278 = vmul.f32 %v2926, %v3057
      %v3279 = vmul.f32 %v2927, %v3057
      %v3280 = vmul.f32 %v2928, %v3057
      %v3281 = vmul.f32 %v2929, %v3057
      %v3282 = vmul.f32 %v2930, %v3057
      %v3283 = vmul.f32 %v2931, %v3057
      %v3284 = vmul.f32 %v2932, %v3057
      %v3285 = vmul.f32 %v2933, %v3057
      %v3286 = vmul.f32 %v2934, %v3057
      %v3287 = vmul.f32 %v2935, %v3057
      %v3288 = vmul.f32 %v2936, %v3057
      %v3289 = vmul.f32 %v2937, %v3057
      %v3290 = vmul.f32 %v2938, %v3057
      %v3291 = vmul.f32 %v2939, %v3057
      %v3292 = vmul.f32 %v2940, %v3057
      %v3293 = vmul.f32 %v2941, %v3062
      %v3294 = vmul.f32 %v2942, %v3062
      %v3295 = vmul.f32 %v2943, %v3062
      %v3296 = vmul.f32 %v2944, %v3062
      %v3297 = vmul.f32 %v2945, %v3062
      %v3298 = vmul.f32 %v2946, %v3062
      %v3299 = vmul.f32 %v2947, %v3062
      %v3300 = vmul.f32 %v2948, %v3062
      %v3301 = vmul.f32 %v2949, %v3062
      %v3302 = vmul.f32 %v2950, %v3062
      %v3303 = vmul.f32 %v2951, %v3062
      %v3304 = vmul.f32 %v2952, %v3062
      %v3305 = vmul.f32 %v2953, %v3062
      %v3306 = vmul.f32 %v2954, %v3062
      %v3307 = vmul.f32 %v2955, %v3062
      %v3308 = vmul.f32 %v2956, %v3062
      %v3309 = vmul.f32 %v2957, %v3067
      %v3310 = vmul.f32 %v2958, %v3067
      %v3311 = vmul.f32 %v2959, %v3067
      %v3312 = vmul.f32 %v2960, %v3067
      %v3313 = vmul.f32 %v2961, %v3067
      %v3314 = vmul.f32 %v2962, %v3067
      %v3315 = vmul.f32 %v2963, %v3067
      %v3316 = vmul.f32 %v2964, %v3067
      %v3317 = vmul.f32 %v2965, %v3067
      %v3318 = vmul.f32 %v2966, %v3067
      %v3319 = vmul.f32 %v2967, %v3067
      %v3320 = vmul.f32 %v2968, %v3067
      %v3321 = vmul.f32 %v2969, %v3067
      %v3322 = vmul.f32 %v2970, %v3067
      %v3323 = vmul.f32 %v2971, %v3067
      %v3324 = vmul.f32 %v2972, %v3067
      %v3325 = vadd.f32 %v3069, %v3085
      %v3326 = vadd.f32 %v3325, %v3101
      %v3327 = vadd.f32 %v3326, %v3117
      %v3328 = vadd.f32 %v3327, %v3133
      %v3329 = vadd.f32 %v3328, %v3149
      %v3330 = vadd.f32 %v3329, %v3165
      %v3331 = vadd.f32 %v3330, %v3181
      %v3332 = vadd.f32 %v3331, %v3197
      %v3333 = vadd.f32 %v3332, %v3213
      %v3334 = vadd.f32 %v3333, %v3229
      %v3335 = vadd.f32 %v3334, %v3245
      %v3336 = vadd.f32 %v3335, %v3261
      %v3337 = vadd.f32 %v3336, %v3277
      %v3338 = vadd.f32 %v3337, %v3293
      %v3339 = vadd.f32 %v3338, %v3309
      %v3340 = vrot.slane %v3339, 4
      %v3341 = vadd.f32 %v3339, %v3340
      %v3342 = vrot.slane %v3341, 2
      %v3343 = vadd.f32 %v3341, %v3342
      %v3344 = vrot.slane %v3343, 1
      %v3345 = vadd.f32 %v3343, %v3344
      %v3346 = vadd.f32 %v3070, %v3086
      %v3347 = vadd.f32 %v3346, %v3102
      %v3348 = vadd.f32 %v3347, %v3118
      %v3349 = vadd.f32 %v3348, %v3134
      %v3350 = vadd.f32 %v3349, %v3150
      %v3351 = vadd.f32 %v3350, %v3166
      %v3352 = vadd.f32 %v3351, %v3182
      %v3353 = vadd.f32 %v3352, %v3198
      %v3354 = vadd.f32 %v3353, %v3214
      %v3355 = vadd.f32 %v3354, %v3230
      %v3356 = vadd.f32 %v3355, %v3246
      %v3357 = vadd.f32 %v3356, %v3262
      %v3358 = vadd.f32 %v3357, %v3278
      %v3359 = vadd.f32 %v3358, %v3294
      %v3360 = vadd.f32 %v3359, %v3310
      %v3361 = vrot.slane %v3360, 4
      %v3362 = vadd.f32 %v3360, %v3361
      %v3363 = vrot.slane %v3362, 2
      %v3364 = vadd.f32 %v3362, %v3363
      %v3365 = vrot.slane %v3364, 1
      %v3366 = vadd.f32 %v3364, %v3365
      %v3367 = vadd.f32 %v3071, %v3087
      %v3368 = vadd.f32 %v3367, %v3103
      %v3369 = vadd.f32 %v3368, %v3119
      %v3370 = vadd.f32 %v3369, %v3135
      %v3371 = vadd.f32 %v3370, %v3151
      %v3372 = vadd.f32 %v3371, %v3167
      %v3373 = vadd.f32 %v3372, %v3183
      %v3374 = vadd.f32 %v3373, %v3199
      %v3375 = vadd.f32 %v3374, %v3215
      %v3376 = vadd.f32 %v3375, %v3231
      %v3377 = vadd.f32 %v3376, %v3247
      %v3378 = vadd.f32 %v3377, %v3263
      %v3379 = vadd.f32 %v3378, %v3279
      %v3380 = vadd.f32 %v3379, %v3295
      %v3381 = vadd.f32 %v3380, %v3311
      %v3382 = vrot.slane %v3381, 4
      %v3383 = vadd.f32 %v3381, %v3382
      %v3384 = vrot.slane %v3383, 2
      %v3385 = vadd.f32 %v3383, %v3384
      %v3386 = vrot.slane %v3385, 1
      %v3387 = vadd.f32 %v3385, %v3386
      %v3388 = vadd.f32 %v3072, %v3088
      %v3389 = vadd.f32 %v3388, %v3104
      %v3390 = vadd.f32 %v3389, %v3120
      %v3391 = vadd.f32 %v3390, %v3136
      %v3392 = vadd.f32 %v3391, %v3152
      %v3393 = vadd.f32 %v3392, %v3168
      %v3394 = vadd.f32 %v3393, %v3184
      %v3395 = vadd.f32 %v3394, %v3200
      %v3396 = vadd.f32 %v3395, %v3216
      %v3397 = vadd.f32 %v3396, %v3232
      %v3398 = vadd.f32 %v3397, %v3248
      %v3399 = vadd.f32 %v3398, %v3264
      %v3400 = vadd.f32 %v3399, %v3280
      %v3401 = vadd.f32 %v3400, %v3296
      %v3402 = vadd.f32 %v3401, %v3312
      %v3403 = vrot.slane %v3402, 4
      %v3404 = vadd.f32 %v3402, %v3403
      %v3405 = vrot.slane %v3404, 2
      %v3406 = vadd.f32 %v3404, %v3405
      %v3407 = vrot.slane %v3406, 1
      %v3408 = vadd.f32 %v3406, %v3407
      %v3409 = vadd.f32 %v3073, %v3089
      %v3410 = vadd.f32 %v3409, %v3105
      %v3411 = vadd.f32 %v3410, %v3121
      %v3412 = vadd.f32 %v3411, %v3137
      %v3413 = vadd.f32 %v3412, %v3153
      %v3414 = vadd.f32 %v3413, %v3169
      %v3415 = vadd.f32 %v3414, %v3185
      %v3416 = vadd.f32 %v3415, %v3201
      %v3417 = vadd.f32 %v3416, %v3217
      %v3418 = vadd.f32 %v3417, %v3233
      %v3419 = vadd.f32 %v3418, %v3249
      %v3420 = vadd.f32 %v3419, %v3265
      %v3421 = vadd.f32 %v3420, %v3281
      %v3422 = vadd.f32 %v3421, %v3297
      %v3423 = vadd.f32 %v3422, %v3313
      %v3424 = vrot.slane %v3423, 4
      %v3425 = vadd.f32 %v3423, %v3424
      %v3426 = vrot.slane %v3425, 2
      %v3427 = vadd.f32 %v3425, %v3426
      %v3428 = vrot.slane %v3427, 1
      %v3429 = vadd.f32 %v3427, %v3428
      %v3430 = vadd.f32 %v3074, %v3090
      %v3431 = vadd.f32 %v3430, %v3106
      %v3432 = vadd.f32 %v3431, %v3122
      %v3433 = vadd.f32 %v3432, %v3138
      %v3434 = vadd.f32 %v3433, %v3154
      %v3435 = vadd.f32 %v3434, %v3170
      %v3436 = vadd.f32 %v3435, %v3186
      %v3437 = vadd.f32 %v3436, %v3202
      %v3438 = vadd.f32 %v3437, %v3218
      %v3439 = vadd.f32 %v3438, %v3234
      %v3440 = vadd.f32 %v3439, %v3250
      %v3441 = vadd.f32 %v3440, %v3266
      %v3442 = vadd.f32 %v3441, %v3282
      %v3443 = vadd.f32 %v3442, %v3298
      %v3444 = vadd.f32 %v3443, %v3314
      %v3445 = vrot.slane %v3444, 4
      %v3446 = vadd.f32 %v3444, %v3445
      %v3447 = vrot.slane %v3446, 2
      %v3448 = vadd.f32 %v3446, %v3447
      %v3449 = vrot.slane %v3448, 1
      %v3450 = vadd.f32 %v3448, %v3449
      %v3451 = vadd.f32 %v3075, %v3091
      %v3452 = vadd.f32 %v3451, %v3107
      %v3453 = vadd.f32 %v3452, %v3123
      %v3454 = vadd.f32 %v3453, %v3139
      %v3455 = vadd.f32 %v3454, %v3155
      %v3456 = vadd.f32 %v3455, %v3171
      %v3457 = vadd.f32 %v3456, %v3187
      %v3458 = vadd.f32 %v3457, %v3203
      %v3459 = vadd.f32 %v3458, %v3219
      %v3460 = vadd.f32 %v3459, %v3235
      %v3461 = vadd.f32 %v3460, %v3251
      %v3462 = vadd.f32 %v3461, %v3267
      %v3463 = vadd.f32 %v3462, %v3283
      %v3464 = vadd.f32 %v3463, %v3299
      %v3465 = vadd.f32 %v3464, %v3315
      %v3466 = vrot.slane %v3465, 4
      %v3467 = vadd.f32 %v3465, %v3466
      %v3468 = vrot.slane %v3467, 2
      %v3469 = vadd.f32 %v3467, %v3468
      %v3470 = vrot.slane %v3469, 1
      %v3471 = vadd.f32 %v3469, %v3470
      %v3472 = vadd.f32 %v3076, %v3092
      %v3473 = vadd.f32 %v3472, %v3108
      %v3474 = vadd.f32 %v3473, %v3124
      %v3475 = vadd.f32 %v3474, %v3140
      %v3476 = vadd.f32 %v3475, %v3156
      %v3477 = vadd.f32 %v3476, %v3172
      %v3478 = vadd.f32 %v3477, %v3188
      %v3479 = vadd.f32 %v3478, %v3204
      %v3480 = vadd.f32 %v3479, %v3220
      %v3481 = vadd.f32 %v3480, %v3236
      %v3482 = vadd.f32 %v3481, %v3252
      %v3483 = vadd.f32 %v3482, %v3268
      %v3484 = vadd.f32 %v3483, %v3284
      %v3485 = vadd.f32 %v3484, %v3300
      %v3486 = vadd.f32 %v3485, %v3316
      %v3487 = vrot.slane %v3486, 4
      %v3488 = vadd.f32 %v3486, %v3487
      %v3489 = vrot.slane %v3488, 2
      %v3490 = vadd.f32 %v3488, %v3489
      %v3491 = vrot.slane %v3490, 1
      %v3492 = vadd.f32 %v3490, %v3491
      %v3493 = vadd.f32 %v3077, %v3093
      %v3494 = vadd.f32 %v3493, %v3109
      %v3495 = vadd.f32 %v3494, %v3125
      %v3496 = vadd.f32 %v3495, %v3141
      %v3497 = vadd.f32 %v3496, %v3157
      %v3498 = vadd.f32 %v3497, %v3173
      %v3499 = vadd.f32 %v3498, %v3189
      %v3500 = vadd.f32 %v3499, %v3205
      %v3501 = vadd.f32 %v3500, %v3221
      %v3502 = vadd.f32 %v3501, %v3237
      %v3503 = vadd.f32 %v3502, %v3253
      %v3504 = vadd.f32 %v3503, %v3269
      %v3505 = vadd.f32 %v3504, %v3285
      %v3506 = vadd.f32 %v3505, %v3301
      %v3507 = vadd.f32 %v3506, %v3317
      %v3508 = vrot.slane %v3507, 4
      %v3509 = vadd.f32 %v3507, %v3508
      %v3510 = vrot.slane %v3509, 2
      %v3511 = vadd.f32 %v3509, %v3510
      %v3512 = vrot.slane %v3511, 1
      %v3513 = vadd.f32 %v3511, %v3512
      %v3514 = vadd.f32 %v3078, %v3094
      %v3515 = vadd.f32 %v3514, %v3110
      %v3516 = vadd.f32 %v3515, %v3126
      %v3517 = vadd.f32 %v3516, %v3142
      %v3518 = vadd.f32 %v3517, %v3158
      %v3519 = vadd.f32 %v3518, %v3174
      %v3520 = vadd.f32 %v3519, %v3190
      %v3521 = vadd.f32 %v3520, %v3206
      %v3522 = vadd.f32 %v3521, %v3222
      %v3523 = vadd.f32 %v3522, %v3238
      %v3524 = vadd.f32 %v3523, %v3254
      %v3525 = vadd.f32 %v3524, %v3270
      %v3526 = vadd.f32 %v3525, %v3286
      %v3527 = vadd.f32 %v3526, %v3302
      %v3528 = vadd.f32 %v3527, %v3318
      %v3529 = vrot.slane %v3528, 4
      %v3530 = vadd.f32 %v3528, %v3529
      %v3531 = vrot.slane %v3530, 2
      %v3532 = vadd.f32 %v3530, %v3531
      %v3533 = vrot.slane %v3532, 1
      %v3534 = vadd.f32 %v3532, %v3533
      %v3535 = vadd.f32 %v3079, %v3095
      %v3536 = vadd.f32 %v3535, %v3111
      %v3537 = vadd.f32 %v3536, %v3127
      %v3538 = vadd.f32 %v3537, %v3143
      %v3539 = vadd.f32 %v3538, %v3159
      %v3540 = vadd.f32 %v3539, %v3175
      %v3541 = vadd.f32 %v3540, %v3191
      %v3542 = vadd.f32 %v3541, %v3207
      %v3543 = vadd.f32 %v3542, %v3223
      %v3544 = vadd.f32 %v3543, %v3239
      %v3545 = vadd.f32 %v3544, %v3255
      %v3546 = vadd.f32 %v3545, %v3271
      %v3547 = vadd.f32 %v3546, %v3287
      %v3548 = vadd.f32 %v3547, %v3303
      %v3549 = vadd.f32 %v3548, %v3319
      %v3550 = vrot.slane %v3549, 4
      %v3551 = vadd.f32 %v3549, %v3550
      %v3552 = vrot.slane %v3551, 2
      %v3553 = vadd.f32 %v3551, %v3552
      %v3554 = vrot.slane %v3553, 1
      %v3555 = vadd.f32 %v3553, %v3554
      %v3556 = vadd.f32 %v3080, %v3096
      %v3557 = vadd.f32 %v3556, %v3112
      %v3558 = vadd.f32 %v3557, %v3128
      %v3559 = vadd.f32 %v3558, %v3144
      %v3560 = vadd.f32 %v3559, %v3160
      %v3561 = vadd.f32 %v3560, %v3176
      %v3562 = vadd.f32 %v3561, %v3192
      %v3563 = vadd.f32 %v3562, %v3208
      %v3564 = vadd.f32 %v3563, %v3224
      %v3565 = vadd.f32 %v3564, %v3240
      %v3566 = vadd.f32 %v3565, %v3256
      %v3567 = vadd.f32 %v3566, %v3272
      %v3568 = vadd.f32 %v3567, %v3288
      %v3569 = vadd.f32 %v3568, %v3304
      %v3570 = vadd.f32 %v3569, %v3320
      %v3571 = vrot.slane %v3570, 4
      %v3572 = vadd.f32 %v3570, %v3571
      %v3573 = vrot.slane %v3572, 2
      %v3574 = vadd.f32 %v3572, %v3573
      %v3575 = vrot.slane %v3574, 1
      %v3576 = vadd.f32 %v3574, %v3575
      %v3577 = vadd.f32 %v3081, %v3097
      %v3578 = vadd.f32 %v3577, %v3113
      %v3579 = vadd.f32 %v3578, %v3129
      %v3580 = vadd.f32 %v3579, %v3145
      %v3581 = vadd.f32 %v3580, %v3161
      %v3582 = vadd.f32 %v3581, %v3177
      %v3583 = vadd.f32 %v3582, %v3193
      %v3584 = vadd.f32 %v3583, %v3209
      %v3585 = vadd.f32 %v3584, %v3225
      %v3586 = vadd.f32 %v3585, %v3241
      %v3587 = vadd.f32 %v3586, %v3257
      %v3588 = vadd.f32 %v3587, %v3273
      %v3589 = vadd.f32 %v3588, %v3289
      %v3590 = vadd.f32 %v3589, %v3305
      %v3591 = vadd.f32 %v3590, %v3321
      %v3592 = vrot.slane %v3591, 4
      %v3593 = vadd.f32 %v3591, %v3592
      %v3594 = vrot.slane %v3593, 2
      %v3595 = vadd.f32 %v3593, %v3594
      %v3596 = vrot.slane %v3595, 1
      %v3597 = vadd.f32 %v3595, %v3596
      %v3598 = vadd.f32 %v3082, %v3098
      %v3599 = vadd.f32 %v3598, %v3114
      %v3600 = vadd.f32 %v3599, %v3130
      %v3601 = vadd.f32 %v3600, %v3146
      %v3602 = vadd.f32 %v3601, %v3162
      %v3603 = vadd.f32 %v3602, %v3178
      %v3604 = vadd.f32 %v3603, %v3194
      %v3605 = vadd.f32 %v3604, %v3210
      %v3606 = vadd.f32 %v3605, %v3226
      %v3607 = vadd.f32 %v3606, %v3242
      %v3608 = vadd.f32 %v3607, %v3258
      %v3609 = vadd.f32 %v3608, %v3274
      %v3610 = vadd.f32 %v3609, %v3290
      %v3611 = vadd.f32 %v3610, %v3306
      %v3612 = vadd.f32 %v3611, %v3322
      %v3613 = vrot.slane %v3612, 4
      %v3614 = vadd.f32 %v3612, %v3613
      %v3615 = vrot.slane %v3614, 2
      %v3616 = vadd.f32 %v3614, %v3615
      %v3617 = vrot.slane %v3616, 1
      %v3618 = vadd.f32 %v3616, %v3617
      %v3619 = vadd.f32 %v3083, %v3099
      %v3620 = vadd.f32 %v3619, %v3115
      %v3621 = vadd.f32 %v3620, %v3131
      %v3622 = vadd.f32 %v3621, %v3147
      %v3623 = vadd.f32 %v3622, %v3163
      %v3624 = vadd.f32 %v3623, %v3179
      %v3625 = vadd.f32 %v3624, %v3195
      %v3626 = vadd.f32 %v3625, %v3211
      %v3627 = vadd.f32 %v3626, %v3227
      %v3628 = vadd.f32 %v3627, %v3243
      %v3629 = vadd.f32 %v3628, %v3259
      %v3630 = vadd.f32 %v3629, %v3275
      %v3631 = vadd.f32 %v3630, %v3291
      %v3632 = vadd.f32 %v3631, %v3307
      %v3633 = vadd.f32 %v3632, %v3323
      %v3634 = vrot.slane %v3633, 4
      %v3635 = vadd.f32 %v3633, %v3634
      %v3636 = vrot.slane %v3635, 2
      %v3637 = vadd.f32 %v3635, %v3636
      %v3638 = vrot.slane %v3637, 1
      %v3639 = vadd.f32 %v3637, %v3638
      %v3640 = vadd.f32 %v3084, %v3100
      %v3641 = vadd.f32 %v3640, %v3116
      %v3642 = vadd.f32 %v3641, %v3132
      %v3643 = vadd.f32 %v3642, %v3148
      %v3644 = vadd.f32 %v3643, %v3164
      %v3645 = vadd.f32 %v3644, %v3180
      %v3646 = vadd.f32 %v3645, %v3196
      %v3647 = vadd.f32 %v3646, %v3212
      %v3648 = vadd.f32 %v3647, %v3228
      %v3649 = vadd.f32 %v3648, %v3244
      %v3650 = vadd.f32 %v3649, %v3260
      %v3651 = vadd.f32 %v3650, %v3276
      %v3652 = vadd.f32 %v3651, %v3292
      %v3653 = vadd.f32 %v3652, %v3308
      %v3654 = vadd.f32 %v3653, %v3324
      %v3655 = vrot.slane %v3654, 4
      %v3656 = vadd.f32 %v3654, %v3655
      %v3657 = vrot.slane %v3656, 2
      %v3658 = vadd.f32 %v3656, %v3657
      %v3659 = vrot.slane %v3658, 1
      %v3660 = vadd.f32 %v3658, %v3659
      %v3677 = vcombine.low %v3345, %v3366
      %v3678 = vcombine.low %v3387, %v3408
      %v3679 = vcombine.low %v3429, %v3450
      %v3680 = vcombine.low %v3471, %v3492
      %v3682 = vunpack.c.l.s4 1966171168
      %v3683 = vunpack.c.0.s8 %v3682
      %v3684 = vlaneseq
      %v3685 = vshrl.u32 %v3684, 7
      %v3686 = vsub.s32 %v3683, %v3685
      %v3687 = vrot.slane %v3677, %v3686
      %v3689 = vunpack.c.l.s4 1966171168
      %v3690 = vunpack.c.0.s8 %v3689
      %v3691 = vlaneseq
      %v3692 = vshrl.u32 %v3691, 7
      %v3693 = vsub.s32 %v3690, %v3692
      %v3694 = vrot.slane %v3678, %v3693
      %v3696 = vunpack.c.l.s4 1966171168
      %v3697 = vunpack.c.0.s8 %v3696
      %v3698 = vlaneseq
      %v3699 = vshrl.u32 %v3698, 7
      %v3700 = vsub.s32 %v3697, %v3699
      %v3701 = vrot.slane %v3679, %v3700
      %v3703 = vunpack.c.l.s4 1966171168
      %v3704 = vunpack.c.0.s8 %v3703
      %v3705 = vlaneseq
      %v3706 = vshrl.u32 %v3705, 7
      %v3707 = vsub.s32 %v3704, %v3706
      %v3708 = vrot.slane %v3680, %v3707
      %v3709 = vcombine.low %v3687, %v3694
      %v3710 = vcombine.low %v3701, %v3708
      %v3712 = vunpack.c.l.s4 1966171168
      %v3713 = vunpack.c.0.s8 %v3712
      %v3714 = vlaneseq
      %v3715 = vshrl.u32 %v3714, 7
      %v3716 = vsub.s32 %v3713, %v3715
      %v3717 = vrot.slane %v3709, %v3716
      %v3719 = vunpack.c.l.s4 1966171168
      %v3720 = vunpack.c.0.s8 %v3719
      %v3721 = vlaneseq
      %v3722 = vshrl.u32 %v3721, 7
      %v3723 = vsub.s32 %v3720, %v3722
      %v3724 = vrot.slane %v3710, %v3723
      %v3725 = vcombine.low %v3717, %v3724
      %v3726 = vcombine.low %v3513, %v3534
      %v3727 = vcombine.low %v3555, %v3576
      %v3728 = vcombine.low %v3597, %v3618
      %v3729 = vcombine.low %v3639, %v3660
      %v3731 = vunpack.c.l.s4 1966171168
      %v3732 = vunpack.c.0.s8 %v3731
      %v3733 = vlaneseq
      %v3734 = vshrl.u32 %v3733, 7
      %v3735 = vsub.s32 %v3732, %v3734
      %v3736 = vrot.slane %v3726, %v3735
      %v3738 = vunpack.c.l.s4 1966171168
      %v3739 = vunpack.c.0.s8 %v3738
      %v3740 = vlaneseq
      %v3741 = vshrl.u32 %v3740, 7
      %v3742 = vsub.s32 %v3739, %v3741
      %v3743 = vrot.slane %v3727, %v3742
      %v3745 = vunpack.c.l.s4 1966171168
      %v3746 = vunpack.c.0.s8 %v3745
      %v3747 = vlaneseq
      %v3748 = vshrl.u32 %v3747, 7
      %v3749 = vsub.s32 %v3746, %v3748
      %v3750 = vrot.slane %v3728, %v3749
      %v3752 = vunpack.c.l.s4 1966171168
      %v3753 = vunpack.c.0.s8 %v3752
      %v3754 = vlaneseq
      %v3755 = vshrl.u32 %v3754, 7
      %v3756 = vsub.s32 %v3753, %v3755
      %v3757 = vrot.slane %v3729, %v3756
      %v3758 = vcombine.low %v3736, %v3743
      %v3759 = vcombine.low %v3750, %v3757
      %v3761 = vunpack.c.l.s4 1966171168
      %v3762 = vunpack.c.0.s8 %v3761
      %v3763 = vlaneseq
      %v3764 = vshrl.u32 %v3763, 7
      %v3765 = vsub.s32 %v3762, %v3764
      %v3766 = vrot.slane %v3758, %v3765
      %v3768 = vunpack.c.l.s4 1966171168
      %v3769 = vunpack.c.0.s8 %v3768
      %v3770 = vlaneseq
      %v3771 = vshrl.u32 %v3770, 7
      %v3772 = vsub.s32 %v3769, %v3771
      %v3773 = vrot.slane %v3759, %v3772
      %v3774 = vcombine.low %v3766, %v3773
      %3777 = vst [vmem:[%s287] sm:$0xff] %v3725
      %3778 = vst [vmem:[%s287 + $0x8] sm:$0xff] %v3774
      %s3779 = smul.u32 16, %s22
      %p3780 = scmp.lt.s32.totalorder %s21, 1
      %s3781 = scalar_select %p3780, %s21, 1
      %p3782 = scmp.lt.s32.totalorder %s3779, 15
      %s3783 = scalar_select %p3782, %s3779, 15
      %s3784 = smul.addr %s3781, 16
      %s3785 = sadd.s32 %s3783, %s3784
      %s3786 = scalar_lea.vmem %s6, %s3785
      // Predicated region
      $region45: #{pixel_discriminator_forward.1} parent=43 // pred_check
        %p3787 = pneg %p182
      $region46: #{pixel_discriminator_forward.1} parent=43 // pred_check_branch
        %3789 = sbr.rel (%p3787) target = $region48
      $region47: #{pixel_discriminator_forward.1} parent=43 // pred_region
        %s3790 = smul.u32 16, %s22
      $region48: #{pixel_discriminator_forward.1} parent=43 // pred_fallthru
        _
    $region44: #{pixel_discriminator_forward.1} parent=5 // pred_fallthru
      _
    %p3791 = scmp.le.s32.totalorder 2, %s12
    // Predicated region
    $region49: #{pixel_discriminator_forward.1} parent=5 // pred_check
      %p3792 = pneg %p3791
    $region50: #{pixel_discriminator_forward.1} parent=5 // pred_check_branch
      %3794 = sbr.rel (%p3792) target = $region52
    $region51: #{pixel_discriminator_forward.1} parent=5 // pred_region
      %s3795 = ssub.s32 %s12, 2
      // Predicated region
      $region53: #{pixel_discriminator_forward.1} parent=51 // pred_check
        %p3796 = pneg %p188
      $region54: #{pixel_discriminator_forward.1} parent=51 // pred_check_branch
        %3798 = sbr.rel (%p3796) target = $region56
      $region55: #{pixel_discriminator_forward.1} parent=51 // pred_region
        %s3799 = smul.u32 16, %s24
        %p3800 = scmp.lt.s32.totalorder %s23, 1
        %s3801 = scalar_select %p3800, %s23, 1
        %p3802 = scmp.lt.s32.totalorder %s3799, 15
        %s3803 = scalar_select %p3802, %s3799, 15
        %s3804 = smul.addr %s3801, 16
        %s3805 = sadd.s32 %s3803, %s3804
        %s3806 = scalar_lea.vmem %s6, %s3805
      $region56: #{pixel_discriminator_forward.1} parent=51 // pred_fallthru
        _
    $region52: #{pixel_discriminator_forward.1} parent=5 // pred_fallthru
      _
  $region6: #{pixel_discriminator_forward.1} parent=0 // loop_footer
    %s16 = sadd.s32 1, %s12
  $region7: #{pixel_discriminator_forward.1} parent=0 // loop_footer_branch
    %11 = sbr.rel target = $region3
  $region8: #{pixel_discriminator_forward.1} parent=0 // loop_exit
    _

</llo_original>
